<compile_context>
chip_gen: v7x
topology: tpu7x:2x2x1
jax: 0.10.0
libtpu: 0.0.40
codegen_flags: <defaults>
</compile_context>

<pallas_src>
import functools

import jax
import jax.numpy as jnp
from jax.experimental import pallas as pl
from jax.experimental.pallas import tpu as pltpu


# ----------------------------------------------------------------------------
# In-kernel helpers (pure jnp, traced inside the Pallas body)
# ----------------------------------------------------------------------------

def _linear(x, w_ref, b_ref):
    """x @ W + b with bf16 operands, f32 accumulation."""
    return jnp.dot(x.astype(jnp.bfloat16), w_ref[...].astype(jnp.bfloat16),
                   preferred_element_type=jnp.float32) + b_ref[...]


def _gat_layer(x, w, att_mat, bias, adj_bias, heads, f_out):
    """One GATConv layer (heads, concat=False -> mean over heads), eval mode.

    att_mat is block-packed (heads*f_out, 2*heads) so a single MXU matmul
    yields all per-head src/dst attention scores.  adj_bias is an additive
    mask: 0 on edges (incl. self-loops), -1e30 elsewhere.  Per-head attention
    is computed and immediately consumed (accumulated) so only one (N, N)
    buffer is live at a time.
    """
    h = jnp.dot(x.astype(jnp.bfloat16), w.astype(jnp.bfloat16),
                preferred_element_type=jnp.float32)            # (N, heads*f_out)
    alpha = jnp.dot(h.astype(jnp.bfloat16), att_mat.astype(jnp.bfloat16),
                    preferred_element_type=jnp.float32)        # (N, 2*heads)

    acc = None
    for hd in range(heads):
        a_src = alpha[:, hd]                                   # (N,)
        a_dst = alpha[:, heads + hd]                           # (N,)
        logits = a_dst[:, None] + a_src[None, :]               # (N, N) dst rows, src cols
        logits = jnp.maximum(logits, 0.2 * logits)             # LeakyReLU(0.2)
        logits = logits + adj_bias                             # additive edge mask
        m = jnp.max(logits, axis=-1, keepdims=True)
        e = jnp.exp(logits - m)
        attn = e * pl.reciprocal(jnp.sum(e, axis=-1, keepdims=True), approx=True)
        # TODO(synk): PyG applies dropout(0.5) to attn in training mode; eval here.
        contrib = jnp.dot(attn.astype(jnp.bfloat16),
                          h[:, hd * f_out:(hd + 1) * f_out].astype(jnp.bfloat16),
                          preferred_element_type=jnp.float32)  # (N, f_out)
        acc = contrib if acc is None else acc + contrib
    return acc * (1.0 / heads) + bias


# ----------------------------------------------------------------------------
# Fused Pallas kernel: GAT encoder + MLPs + pair gather + classifier
# ----------------------------------------------------------------------------

def fused_model_kernel(x_ref, adj_ref, attr_ref, pairs_ref,
                       w1_ref, att1_ref, b1_ref,
                       w2_ref, att2_ref, b2_ref,
                       emb_w1, emb_b1, emb_w2, emb_b2,
                       gen_w1, gen_b1, gen_w2, gen_b2,
                       c_w1, c_b1, bn1s, bn1b,
                       c_w2, c_b2, bn2s, bn2b,
                       c_w3, c_b3,
                       out_ref, gcn_ref, t2a_ref, a2t_ref,
                       *, heads, f1, f2, attr_dim):
    # --- GAT encoder (two layers; adjacency bias loaded once, layer-1 output
    #     never leaves VMEM). ---
    # TODO(synk): for large N, tile dst rows with a "parallel" grid so the
    # (N, N) softmax stays within VMEM (critical on v7x's 64 MiB) and shards
    # across TensorCores.
    adj_bias = adj_ref[...]                                    # (N, N) bf16 additive mask
    h1 = _gat_layer(x_ref[...], w1_ref[...], att1_ref[...], b1_ref[...],
                    adj_bias, heads, f1)
    gcn_out = _gat_layer(h1, w2_ref[...], att2_ref[...], b2_ref[...],
                         adj_bias, heads, f2)                  # (N, f2) f32
    gcn_ref[...] = gcn_out

    # --- g_t + g_a as one block-diagonal 2-layer MLP.
    #     [gcn_out | attr] @ blockdiag -> embedding = [topo_emd | attr_emd]. ---
    xin = jnp.concatenate([gcn_out, attr_ref[...]], axis=1)    # (N, f2 + attr_dim)
    emb = _linear(_linear(xin, emb_w1, emb_b1), emb_w2, emb_b2)  # (N, 2*num_outputs)

    # --- g_t2a + g_a2t as one block-diagonal 2-layer MLP on embedding. ---
    gen = _linear(_linear(emb, gen_w1, gen_b1), gen_w2, gen_b2)  # (N, attr_dim + f2)
    t2a_ref[...] = gen[:, :attr_dim]
    a2t_ref[...] = gen[:, attr_dim:]

    # --- Pair-row gather: single (2B, N) bf16 one-hot matmul on the MXU. ---
    idx = pairs_ref[...]                                       # (B, 2) int32
    bsz = idx.shape[0]
    n = emb.shape[0]
    col = jax.lax.broadcasted_iota(jnp.int32, (bsz, n), 1)
    sel = jnp.concatenate([col == idx[:, 0:1], col == idx[:, 1:2]],
                          axis=0).astype(jnp.bfloat16)         # (2B, N)
    gathered = jnp.dot(sel, emb.astype(jnp.bfloat16),
                       preferred_element_type=jnp.float32)     # (2B, 2*num_outputs)
    x_cls = jnp.concatenate([gathered[:bsz], gathered[bsz:]], axis=1)  # (B, 4*num_outputs)

    # --- Classifier DNN: Lin->ReLU->BN(eval)->Lin->ReLU->BN(eval)->Lin->sigmoid ---
    h = jnp.maximum(_linear(x_cls, c_w1, c_b1), 0.0)
    h = h * bn1s[...] + bn1b[...]
    h = jnp.maximum(_linear(h, c_w2, c_b2), 0.0)
    h = h * bn2s[...] + bn2b[...]
    h = _linear(h, c_w3, c_b3)                                 # (B, 1)
    # Exact sigmoid for the final probability (approx-reciprocal only used in
    # the internal softmaxes).
    # TODO(synk): (B, 1) output is a masked partial store; pad lanes if B/N grow.
    out_ref[...] = 1.0 / (1.0 + jnp.exp(-h))


def fused_forward(x, adj_bias, attr_mtx, pairs, p, *,
                  heads, gcn_hidden, gcn_outputs, attr_dim):
    n = x.shape[0]
    b = pairs.shape[0]
    kern = functools.partial(fused_model_kernel, heads=heads, f1=gcn_hidden,
                             f2=gcn_outputs, attr_dim=attr_dim)
    out_shape = (
        jax.ShapeDtypeStruct((b, 1), jnp.float32),            # classifier output
        jax.ShapeDtypeStruct((n, gcn_outputs), jnp.float32),  # gcn_out
        jax.ShapeDtypeStruct((n, attr_dim), jnp.float32),     # t2a_mtx
        jax.ShapeDtypeStruct((n, gcn_outputs), jnp.float32),  # a2t_mtx
    )
    return pl.pallas_call(
        kern,
        out_shape=out_shape,
        compiler_params=pltpu.CompilerParams(vmem_limit_bytes=64 * 1024 * 1024),
    )(x, adj_bias, attr_mtx, pairs,
      p["conv1_w"], p["conv1_att"], p["conv1_b"],
      p["conv2_w"], p["conv2_att"], p["conv2_b"],
      p["emb_w1"], p["emb_b1"], p["emb_w2"], p["emb_b2"],
      p["gen_w1"], p["gen_b1"], p["gen_w2"], p["gen_b2"],
      p["c_w1"], p["c_b1"], p["bn1_scale"], p["bn1_shift"],
      p["c_w2"], p["c_b2"], p["bn2_scale"], p["bn2_shift"],
      p["c_w3"], p["c_b3"])


# ----------------------------------------------------------------------------
# Parameter construction (deterministic, synthetic)
# ----------------------------------------------------------------------------

def glorot(key, shape):
    fan_in, fan_out = shape[0], shape[-1]
    lim = (6.0 / (fan_in + fan_out)) ** 0.5
    return jax.random.uniform(key, shape, jnp.float32, -lim, lim)


def pack_att(att_src, att_dst):
    """Pack (heads, f_out) src/dst attention vectors into a block matrix so all
    per-head scores come from one (N, heads*f_out) x (heads*f_out, 2*heads) dot."""
    heads, f_out = att_src.shape
    mat = jnp.zeros((heads * f_out, 2 * heads), jnp.float32)
    for hd in range(heads):
        mat = mat.at[hd * f_out:(hd + 1) * f_out, hd].set(att_src[hd])
        mat = mat.at[hd * f_out:(hd + 1) * f_out, heads + hd].set(att_dst[hd])
    return mat


def block_diag2(a, b):
    r1, c1 = a.shape
    r2, c2 = b.shape
    out = jnp.zeros((r1 + r2, c1 + c2), jnp.float32)
    out = out.at[:r1, :c1].set(a)
    out = out.at[r1:, c1:].set(b)
    return out


def make_params(key, num_nodes, gcn_outputs, gcn_hidden, num_outputs, attr_dim,
                init_feat=64):
    ks = iter(jax.random.split(key, 40))
    p = {}
    # GAT encoder
    p["X"] = glorot(next(ks), (num_nodes, init_feat))
    p["conv1_w"] = glorot(next(ks), (init_feat, 2 * gcn_hidden))
    p["conv1_att"] = pack_att(glorot(next(ks), (2, gcn_hidden)),
                              glorot(next(ks), (2, gcn_hidden)))
    p["conv1_b"] = jnp.zeros((1, gcn_hidden), jnp.float32)
    p["conv2_w"] = glorot(next(ks), (gcn_hidden, 2 * gcn_outputs))
    p["conv2_att"] = pack_att(glorot(next(ks), (2, gcn_outputs)),
                              glorot(next(ks), (2, gcn_outputs)))
    p["conv2_b"] = jnp.zeros((1, gcn_outputs), jnp.float32)

    def lin(k, din, dout):
        kw, kb = jax.random.split(k)
        lim = 1.0 / (din ** 0.5)
        w = jax.random.uniform(kw, (din, dout), jnp.float32, -lim, lim)
        bb = jax.random.uniform(kb, (1, dout), jnp.float32, -lim, lim)
        return w, bb

    # g_t: MLP(gcn_outputs -> num_outputs), hidden 100
    gt_w1, gt_b1 = lin(next(ks), gcn_outputs, 100)
    gt_w2, gt_b2 = lin(next(ks), 100, num_outputs)
    # g_t2a: Generator(num_outputs -> attr_dim)
    gt2a_w1, gt2a_b1 = lin(next(ks), num_outputs, 100)
    gt2a_w2, gt2a_b2 = lin(next(ks), 100, attr_dim)
    # g_a: MLP(attr_dim -> num_outputs)
    ga_w1, ga_b1 = lin(next(ks), attr_dim, 100)
    ga_w2, ga_b2 = lin(next(ks), 100, num_outputs)
    # g_a2t: Generator(num_outputs -> gcn_outputs)
    ga2t_w1, ga2t_b1 = lin(next(ks), num_outputs, 100)
    ga2t_w2, ga2t_b2 = lin(next(ks), 100, gcn_outputs)

    # Block-diagonal merges (exact): [gcn|attr] -> [topo_emd | attr_emd],
    # [topo_emd | attr_emd] -> [t2a | a2t].
    p["emb_w1"] = block_diag2(gt_w1, ga_w1)                    # (f2+attr_dim, 200)
    p["emb_b1"] = jnp.concatenate([gt_b1, ga_b1], axis=1)
    p["emb_w2"] = block_diag2(gt_w2, ga_w2)                    # (200, 2*num_outputs)
    p["emb_b2"] = jnp.concatenate([gt_b2, ga_b2], axis=1)
    p["gen_w1"] = block_diag2(gt2a_w1, ga2t_w1)                # (2*num_outputs, 200)
    p["gen_b1"] = jnp.concatenate([gt2a_b1, ga2t_b1], axis=1)
    p["gen_w2"] = block_diag2(gt2a_w2, ga2t_w2)                # (200, attr_dim+f2)
    p["gen_b2"] = jnp.concatenate([gt2a_b2, ga2t_b2], axis=1)

    # classifier DNN(num_outputs*4 -> 1): 512 / 256 hidden, BN eval-folded
    din = num_outputs * 4
    p["c_w1"], p["c_b1"] = lin(next(ks), din, 512)
    p["c_w2"], p["c_b2"] = lin(next(ks), 512, 256)
    p["c_w3"], p["c_b3"] = lin(next(ks), 256, 1)
    eps = 1e-5
    # BatchNorm1d defaults: weight=1, bias=0, running_mean=0, running_var=1.
    # TODO(synk): with trained BN params fold running_mean/var/gamma/beta here.
    p["bn1_scale"] = jnp.full((1, 512), 1.0 / (1.0 + eps) ** 0.5, jnp.float32)
    p["bn1_shift"] = jnp.zeros((1, 512), jnp.float32)
    p["bn2_scale"] = jnp.full((1, 256), 1.0 / (1.0 + eps) ** 0.5, jnp.float32)
    p["bn2_shift"] = jnp.zeros((1, 256), jnp.float32)
    return p


def adjacency_bias(edge_index, num_nodes):
    """Additive attention mask: 0 where edge (dst<-src) or self-loop, -1e30 else."""
    src, dst = edge_index[0], edge_index[1]
    adj = jnp.zeros((num_nodes, num_nodes), jnp.float32)
    adj = adj.at[dst, src].set(1.0)
    adj = jnp.maximum(adj, jnp.eye(num_nodes, dtype=jnp.float32))
    return jnp.where(adj > 0.5, 0.0, -1e30).astype(jnp.bfloat16)


# ----------------------------------------------------------------------------
# Model forward (single pallas_call)
# ----------------------------------------------------------------------------

def model_forward(params, edge_index, attr_mtx, x_pairs, *,
                  num_nodes, gcn_outputs, gcn_hidden, attr_dim):
    adj_bias = adjacency_bias(edge_index, num_nodes)
    output, gcn_out, t2a_mtx, a2t_mtx = fused_forward(
        params["X"], adj_bias, attr_mtx, x_pairs.astype(jnp.int32), params,
        heads=2, gcn_hidden=gcn_hidden, gcn_outputs=gcn_outputs,
        attr_dim=attr_dim)
    return output, gcn_out, t2a_mtx, a2t_mtx


# ----------------------------------------------------------------------------
# Demo
# ----------------------------------------------------------------------------

if __name__ == "__main__":
    num_nodes, gcn_outputs, gcn_hidden = 16, 32, 32
    num_outputs, attr_dim = 16, 24
    num_edges, batch = 32, 8

    key = jax.random.PRNGKey(0)
    kp, ke, ka, kx = jax.random.split(key, 4)

    params = make_params(kp, num_nodes, gcn_outputs, gcn_hidden,
                         num_outputs, attr_dim)
    edge_index = jax.random.randint(ke, (2, num_edges), 0, num_nodes, jnp.int32)
    attr_mtx = jax.random.normal(ka, (num_nodes, attr_dim), jnp.float32)
    x_pairs = jax.random.randint(kx, (batch, 2), 0, num_nodes, jnp.int32)

    fwd = jax.jit(functools.partial(model_forward,
                                    num_nodes=num_nodes,
                                    gcn_outputs=gcn_outputs,
                                    gcn_hidden=gcn_hidden,
                                    attr_dim=attr_dim))
    output, gcn_out, t2a_mtx, a2t_mtx = fwd(params, edge_index, attr_mtx, x_pairs)
    jax.block_until_ready((output, gcn_out, t2a_mtx, a2t_mtx))

    assert output.shape == (batch, 1)
    assert gcn_out.shape == (num_nodes, gcn_outputs)
    assert t2a_mtx.shape == (num_nodes, attr_dim)
    assert a2t_mtx.shape == (num_nodes, gcn_outputs)
    assert bool(jnp.all(jnp.isfinite(output)))
    assert bool(jnp.all((output >= 0.0) & (output <= 1.0)))
    print("KERNEL_OK")
</pallas_src>

<mosaic_0001>
module attributes {stable_mosaic.version = 11 : i64} {
  func.func @fused_model_kernel(%arg0: memref<16x64xf32, #tpu.memory_space<vmem>>, %arg1: memref<16x16xbf16, #tpu.memory_space<vmem>>, %arg2: memref<16x24xf32, #tpu.memory_space<vmem>>, %arg3: memref<8x2xi32, #tpu.memory_space<vmem>>, %arg4: memref<64x64xf32, #tpu.memory_space<vmem>>, %arg5: memref<64x4xf32, #tpu.memory_space<vmem>>, %arg6: memref<1x32xf32, #tpu.memory_space<vmem>>, %arg7: memref<32x64xf32, #tpu.memory_space<vmem>>, %arg8: memref<64x4xf32, #tpu.memory_space<vmem>>, %arg9: memref<1x32xf32, #tpu.memory_space<vmem>>, %arg10: memref<56x200xf32, #tpu.memory_space<vmem>>, %arg11: memref<1x200xf32, #tpu.memory_space<vmem>>, %arg12: memref<200x32xf32, #tpu.memory_space<vmem>>, %arg13: memref<1x32xf32, #tpu.memory_space<vmem>>, %arg14: memref<32x200xf32, #tpu.memory_space<vmem>>, %arg15: memref<1x200xf32, #tpu.memory_space<vmem>>, %arg16: memref<200x56xf32, #tpu.memory_space<vmem>>, %arg17: memref<1x56xf32, #tpu.memory_space<vmem>>, %arg18: memref<64x512xf32, #tpu.memory_space<vmem>>, %arg19: memref<1x512xf32, #tpu.memory_space<vmem>>, %arg20: memref<1x512xf32, #tpu.memory_space<vmem>>, %arg21: memref<1x512xf32, #tpu.memory_space<vmem>>, %arg22: memref<512x256xf32, #tpu.memory_space<vmem>>, %arg23: memref<1x256xf32, #tpu.memory_space<vmem>>, %arg24: memref<1x256xf32, #tpu.memory_space<vmem>>, %arg25: memref<1x256xf32, #tpu.memory_space<vmem>>, %arg26: memref<256x1xf32, #tpu.memory_space<vmem>>, %arg27: memref<1x1xf32, #tpu.memory_space<vmem>>, %arg28: memref<8x1xf32, #tpu.memory_space<vmem>>, %arg29: memref<16x32xf32, #tpu.memory_space<vmem>>, %arg30: memref<16x24xf32, #tpu.memory_space<vmem>>, %arg31: memref<16x32xf32, #tpu.memory_space<vmem>>) attributes {dimension_semantics = [], scalar_prefetch = 0 : i64, scratch_operands = 0 : i64, tpu.core_type = #tpu.core_type<tc>} {
    %c0 = arith.constant 0 : index
    %c0_0 = arith.constant 0 : index
    %0 = vector.load %arg1[%c0, %c0_0] : memref<16x16xbf16, #tpu.memory_space<vmem>>, vector<16x16xbf16>
    %c0_1 = arith.constant 0 : index
    %c0_2 = arith.constant 0 : index
    %1 = vector.load %arg0[%c0_1, %c0_2] : memref<16x64xf32, #tpu.memory_space<vmem>>, vector<16x64xf32>
    %c0_3 = arith.constant 0 : index
    %c0_4 = arith.constant 0 : index
    %2 = vector.load %arg4[%c0_3, %c0_4] : memref<64x64xf32, #tpu.memory_space<vmem>>, vector<64x64xf32>
    %c0_5 = arith.constant 0 : index
    %c0_6 = arith.constant 0 : index
    %3 = vector.load %arg5[%c0_5, %c0_6] : memref<64x4xf32, #tpu.memory_space<vmem>>, vector<64x4xf32>
    %c0_7 = arith.constant 0 : index
    %c0_8 = arith.constant 0 : index
    %4 = vector.load %arg6[%c0_7, %c0_8] : memref<1x32xf32, #tpu.memory_space<vmem>>, vector<1x32xf32>
    %5 = arith.truncf %1 : vector<16x64xf32> to vector<16x64xbf16>
    %6 = arith.truncf %2 : vector<64x64xf32> to vector<64x64xbf16>
    %cst = arith.constant dense<0.000000e+00> : vector<16x64xf32>
    %7 = tpu.matmul %5, %6, %cst {dimension_numbers = #tpu.dot_dimension_numbers<[1], [0], [0], [1], [0, 0, 1, 1], [], []>} : vector<16x64xbf16>, vector<64x64xbf16>, vector<16x64xf32> -> vector<16x64xf32>
    %8 = arith.truncf %7 : vector<16x64xf32> to vector<16x64xbf16>
    %9 = arith.truncf %3 : vector<64x4xf32> to vector<64x4xbf16>
    %cst_9 = arith.constant dense<0.000000e+00> : vector<16x4xf32>
    %10 = tpu.matmul %8, %9, %cst_9 {dimension_numbers = #tpu.dot_dimension_numbers<[1], [0], [0], [1], [0, 0, 1, 1], [], []>} : vector<16x64xbf16>, vector<64x4xbf16>, vector<16x4xf32> -> vector<16x4xf32>
    %11 = vector.extract_strided_slice %10 {offsets = [0, 0], sizes = [16, 1], strides = [1, 1]} : vector<16x4xf32> to vector<16x1xf32>
    %12 = vector.shape_cast %11 : vector<16x1xf32> to vector<16xf32>
    %13 = vector.extract_strided_slice %10 {offsets = [0, 2], sizes = [16, 1], strides = [1, 1]} : vector<16x4xf32> to vector<16x1xf32>
    %14 = vector.shape_cast %13 : vector<16x1xf32> to vector<16xf32>
    %15 = vector.shape_cast %14 : vector<16xf32> to vector<16x1xf32>
    %16 = vector.shape_cast %12 : vector<16xf32> to vector<1x16xf32>
    %17 = vector.broadcast %15 : vector<16x1xf32> to vector<16x16xf32>
    %18 = vector.broadcast %16 : vector<1x16xf32> to vector<16x16xf32>
    %19 = arith.addf %17, %18 : vector<16x16xf32>
    %cst_10 = arith.constant 2.000000e-01 : f32
    %20 = vector.broadcast %cst_10 : f32 to vector<16x16xf32>
    %21 = arith.mulf %20, %19 : vector<16x16xf32>
    %22 = arith.maximumf %19, %21 : vector<16x16xf32>
    %23 = arith.extf %0 : vector<16x16xbf16> to vector<16x16xf32>
    %24 = arith.addf %22, %23 : vector<16x16xf32>
    %cst_11 = arith.constant dense<0xFF800000> : vector<16xf32>
    %25 = vector.multi_reduction <maximumf>, %24, %cst_11 [1] : vector<16x16xf32> to vector<16xf32>
    %26 = vector.shape_cast %25 : vector<16xf32> to vector<16x1xf32>
    %27 = vector.broadcast %26 : vector<16x1xf32> to vector<16x16xf32>
    %28 = arith.subf %24, %27 : vector<16x16xf32>
    %29 = math.exp %28 : vector<16x16xf32>
    %cst_12 = arith.constant dense<0.000000e+00> : vector<16xf32>
    %30 = vector.multi_reduction <add>, %29, %cst_12 [1] : vector<16x16xf32> to vector<16xf32>
    %31 = vector.shape_cast %30 : vector<16xf32> to vector<16x1xf32>
    %32 = tpu.reciprocal %31 {approx = true} : vector<16x1xf32> -> vector<16x1xf32>
    %33 = vector.broadcast %32 : vector<16x1xf32> to vector<16x16xf32>
    %34 = arith.mulf %29, %33 : vector<16x16xf32>
    %35 = arith.truncf %34 : vector<16x16xf32> to vector<16x16xbf16>
    %36 = vector.extract_strided_slice %7 {offsets = [0, 0], sizes = [16, 32], strides = [1, 1]} : vector<16x64xf32> to vector<16x32xf32>
    %37 = arith.truncf %36 : vector<16x32xf32> to vector<16x32xbf16>
    %cst_13 = arith.constant dense<0.000000e+00> : vector<16x32xf32>
    %38 = tpu.matmul %35, %37, %cst_13 {dimension_numbers = #tpu.dot_dimension_numbers<[1], [0], [0], [1], [0, 0, 1, 1], [], []>} : vector<16x16xbf16>, vector<16x32xbf16>, vector<16x32xf32> -> vector<16x32xf32>
    %39 = vector.extract_strided_slice %10 {offsets = [0, 1], sizes = [16, 1], strides = [1, 1]} : vector<16x4xf32> to vector<16x1xf32>
    %40 = vector.shape_cast %39 : vector<16x1xf32> to vector<16xf32>
    %41 = vector.extract_strided_slice %10 {offsets = [0, 3], sizes = [16, 1], strides = [1, 1]} : vector<16x4xf32> to vector<16x1xf32>
    %42 = vector.shape_cast %41 : vector<16x1xf32> to vector<16xf32>
    %43 = vector.shape_cast %42 : vector<16xf32> to vector<16x1xf32>
    %44 = vector.shape_cast %40 : vector<16xf32> to vector<1x16xf32>
    %45 = vector.broadcast %43 : vector<16x1xf32> to vector<16x16xf32>
    %46 = vector.broadcast %44 : vector<1x16xf32> to vector<16x16xf32>
    %47 = arith.addf %45, %46 : vector<16x16xf32>
    %cst_14 = arith.constant 2.000000e-01 : f32
    %48 = vector.broadcast %cst_14 : f32 to vector<16x16xf32>
    %49 = arith.mulf %48, %47 : vector<16x16xf32>
    %50 = arith.maximumf %47, %49 : vector<16x16xf32>
    %51 = arith.extf %0 : vector<16x16xbf16> to vector<16x16xf32>
    %52 = arith.addf %50, %51 : vector<16x16xf32>
    %cst_15 = arith.constant dense<0xFF800000> : vector<16xf32>
    %53 = vector.multi_reduction <maximumf>, %52, %cst_15 [1] : vector<16x16xf32> to vector<16xf32>
    %54 = vector.shape_cast %53 : vector<16xf32> to vector<16x1xf32>
    %55 = vector.broadcast %54 : vector<16x1xf32> to vector<16x16xf32>
    %56 = arith.subf %52, %55 : vector<16x16xf32>
    %57 = math.exp %56 : vector<16x16xf32>
    %cst_16 = arith.constant dense<0.000000e+00> : vector<16xf32>
    %58 = vector.multi_reduction <add>, %57, %cst_16 [1] : vector<16x16xf32> to vector<16xf32>
    %59 = vector.shape_cast %58 : vector<16xf32> to vector<16x1xf32>
    %60 = tpu.reciprocal %59 {approx = true} : vector<16x1xf32> -> vector<16x1xf32>
    %61 = vector.broadcast %60 : vector<16x1xf32> to vector<16x16xf32>
    %62 = arith.mulf %57, %61 : vector<16x16xf32>
    %63 = arith.truncf %62 : vector<16x16xf32> to vector<16x16xbf16>
    %64 = vector.extract_strided_slice %7 {offsets = [0, 32], sizes = [16, 32], strides = [1, 1]} : vector<16x64xf32> to vector<16x32xf32>
    %65 = arith.truncf %64 : vector<16x32xf32> to vector<16x32xbf16>
    %cst_17 = arith.constant dense<0.000000e+00> : vector<16x32xf32>
    %66 = tpu.matmul %63, %65, %cst_17 {dimension_numbers = #tpu.dot_dimension_numbers<[1], [0], [0], [1], [0, 0, 1, 1], [], []>} : vector<16x16xbf16>, vector<16x32xbf16>, vector<16x32xf32> -> vector<16x32xf32>
    %67 = arith.addf %38, %66 : vector<16x32xf32>
    %cst_18 = arith.constant 5.000000e-01 : f32
    %68 = vector.broadcast %cst_18 : f32 to vector<16x32xf32>
    %69 = arith.mulf %67, %68 : vector<16x32xf32>
    %70 = vector.broadcast %4 : vector<1x32xf32> to vector<16x32xf32>
    %71 = arith.addf %69, %70 : vector<16x32xf32>
    %c0_19 = arith.constant 0 : index
    %c0_20 = arith.constant 0 : index
    %72 = vector.load %arg7[%c0_19, %c0_20] : memref<32x64xf32, #tpu.memory_space<vmem>>, vector<32x64xf32>
    %c0_21 = arith.constant 0 : index
    %c0_22 = arith.constant 0 : index
    %73 = vector.load %arg8[%c0_21, %c0_22] : memref<64x4xf32, #tpu.memory_space<vmem>>, vector<64x4xf32>
    %c0_23 = arith.constant 0 : index
    %c0_24 = arith.constant 0 : index
    %74 = vector.load %arg9[%c0_23, %c0_24] : memref<1x32xf32, #tpu.memory_space<vmem>>, vector<1x32xf32>
    %75 = arith.truncf %71 : vector<16x32xf32> to vector<16x32xbf16>
    %76 = arith.truncf %72 : vector<32x64xf32> to vector<32x64xbf16>
    %cst_25 = arith.constant dense<0.000000e+00> : vector<16x64xf32>
    %77 = tpu.matmul %75, %76, %cst_25 {dimension_numbers = #tpu.dot_dimension_numbers<[1], [0], [0], [1], [0, 0, 1, 1], [], []>} : vector<16x32xbf16>, vector<32x64xbf16>, vector<16x64xf32> -> vector<16x64xf32>
    %78 = arith.truncf %77 : vector<16x64xf32> to vector<16x64xbf16>
    %79 = arith.truncf %73 : vector<64x4xf32> to vector<64x4xbf16>
    %cst_26 = arith.constant dense<0.000000e+00> : vector<16x4xf32>
    %80 = tpu.matmul %78, %79, %cst_26 {dimension_numbers = #tpu.dot_dimension_numbers<[1], [0], [0], [1], [0, 0, 1, 1], [], []>} : vector<16x64xbf16>, vector<64x4xbf16>, vector<16x4xf32> -> vector<16x4xf32>
    %81 = vector.extract_strided_slice %80 {offsets = [0, 0], sizes = [16, 1], strides = [1, 1]} : vector<16x4xf32> to vector<16x1xf32>
    %82 = vector.shape_cast %81 : vector<16x1xf32> to vector<16xf32>
    %83 = vector.extract_strided_slice %80 {offsets = [0, 2], sizes = [16, 1], strides = [1, 1]} : vector<16x4xf32> to vector<16x1xf32>
    %84 = vector.shape_cast %83 : vector<16x1xf32> to vector<16xf32>
    %85 = vector.shape_cast %84 : vector<16xf32> to vector<16x1xf32>
    %86 = vector.shape_cast %82 : vector<16xf32> to vector<1x16xf32>
    %87 = vector.broadcast %85 : vector<16x1xf32> to vector<16x16xf32>
    %88 = vector.broadcast %86 : vector<1x16xf32> to vector<16x16xf32>
    %89 = arith.addf %87, %88 : vector<16x16xf32>
    %cst_27 = arith.constant 2.000000e-01 : f32
    %90 = vector.broadcast %cst_27 : f32 to vector<16x16xf32>
    %91 = arith.mulf %90, %89 : vector<16x16xf32>
    %92 = arith.maximumf %89, %91 : vector<16x16xf32>
    %93 = arith.extf %0 : vector<16x16xbf16> to vector<16x16xf32>
    %94 = arith.addf %92, %93 : vector<16x16xf32>
    %cst_28 = arith.constant dense<0xFF800000> : vector<16xf32>
    %95 = vector.multi_reduction <maximumf>, %94, %cst_28 [1] : vector<16x16xf32> to vector<16xf32>
    %96 = vector.shape_cast %95 : vector<16xf32> to vector<16x1xf32>
    %97 = vector.broadcast %96 : vector<16x1xf32> to vector<16x16xf32>
    %98 = arith.subf %94, %97 : vector<16x16xf32>
    %99 = math.exp %98 : vector<16x16xf32>
    %cst_29 = arith.constant dense<0.000000e+00> : vector<16xf32>
    %100 = vector.multi_reduction <add>, %99, %cst_29 [1] : vector<16x16xf32> to vector<16xf32>
    %101 = vector.shape_cast %100 : vector<16xf32> to vector<16x1xf32>
    %102 = tpu.reciprocal %101 {approx = true} : vector<16x1xf32> -> vector<16x1xf32>
    %103 = vector.broadcast %102 : vector<16x1xf32> to vector<16x16xf32>
    %104 = arith.mulf %99, %103 : vector<16x16xf32>
    %105 = arith.truncf %104 : vector<16x16xf32> to vector<16x16xbf16>
    %106 = vector.extract_strided_slice %77 {offsets = [0, 0], sizes = [16, 32], strides = [1, 1]} : vector<16x64xf32> to vector<16x32xf32>
    %107 = arith.truncf %106 : vector<16x32xf32> to vector<16x32xbf16>
    %cst_30 = arith.constant dense<0.000000e+00> : vector<16x32xf32>
    %108 = tpu.matmul %105, %107, %cst_30 {dimension_numbers = #tpu.dot_dimension_numbers<[1], [0], [0], [1], [0, 0, 1, 1], [], []>} : vector<16x16xbf16>, vector<16x32xbf16>, vector<16x32xf32> -> vector<16x32xf32>
    %109 = vector.extract_strided_slice %80 {offsets = [0, 1], sizes = [16, 1], strides = [1, 1]} : vector<16x4xf32> to vector<16x1xf32>
    %110 = vector.shape_cast %109 : vector<16x1xf32> to vector<16xf32>
    %111 = vector.extract_strided_slice %80 {offsets = [0, 3], sizes = [16, 1], strides = [1, 1]} : vector<16x4xf32> to vector<16x1xf32>
    %112 = vector.shape_cast %111 : vector<16x1xf32> to vector<16xf32>
    %113 = vector.shape_cast %112 : vector<16xf32> to vector<16x1xf32>
    %114 = vector.shape_cast %110 : vector<16xf32> to vector<1x16xf32>
    %115 = vector.broadcast %113 : vector<16x1xf32> to vector<16x16xf32>
    %116 = vector.broadcast %114 : vector<1x16xf32> to vector<16x16xf32>
    %117 = arith.addf %115, %116 : vector<16x16xf32>
    %cst_31 = arith.constant 2.000000e-01 : f32
    %118 = vector.broadcast %cst_31 : f32 to vector<16x16xf32>
    %119 = arith.mulf %118, %117 : vector<16x16xf32>
    %120 = arith.maximumf %117, %119 : vector<16x16xf32>
    %121 = arith.extf %0 : vector<16x16xbf16> to vector<16x16xf32>
    %122 = arith.addf %120, %121 : vector<16x16xf32>
    %cst_32 = arith.constant dense<0xFF800000> : vector<16xf32>
    %123 = vector.multi_reduction <maximumf>, %122, %cst_32 [1] : vector<16x16xf32> to vector<16xf32>
    %124 = vector.shape_cast %123 : vector<16xf32> to vector<16x1xf32>
    %125 = vector.broadcast %124 : vector<16x1xf32> to vector<16x16xf32>
    %126 = arith.subf %122, %125 : vector<16x16xf32>
    %127 = math.exp %126 : vector<16x16xf32>
    %cst_33 = arith.constant dense<0.000000e+00> : vector<16xf32>
    %128 = vector.multi_reduction <add>, %127, %cst_33 [1] : vector<16x16xf32> to vector<16xf32>
    %129 = vector.shape_cast %128 : vector<16xf32> to vector<16x1xf32>
    %130 = tpu.reciprocal %129 {approx = true} : vector<16x1xf32> -> vector<16x1xf32>
    %131 = vector.broadcast %130 : vector<16x1xf32> to vector<16x16xf32>
    %132 = arith.mulf %127, %131 : vector<16x16xf32>
    %133 = arith.truncf %132 : vector<16x16xf32> to vector<16x16xbf16>
    %134 = vector.extract_strided_slice %77 {offsets = [0, 32], sizes = [16, 32], strides = [1, 1]} : vector<16x64xf32> to vector<16x32xf32>
    %135 = arith.truncf %134 : vector<16x32xf32> to vector<16x32xbf16>
    %cst_34 = arith.constant dense<0.000000e+00> : vector<16x32xf32>
    %136 = tpu.matmul %133, %135, %cst_34 {dimension_numbers = #tpu.dot_dimension_numbers<[1], [0], [0], [1], [0, 0, 1, 1], [], []>} : vector<16x16xbf16>, vector<16x32xbf16>, vector<16x32xf32> -> vector<16x32xf32>
    %137 = arith.addf %108, %136 : vector<16x32xf32>
    %cst_35 = arith.constant 5.000000e-01 : f32
    %138 = vector.broadcast %cst_35 : f32 to vector<16x32xf32>
    %139 = arith.mulf %137, %138 : vector<16x32xf32>
    %140 = vector.broadcast %74 : vector<1x32xf32> to vector<16x32xf32>
    %141 = arith.addf %139, %140 : vector<16x32xf32>
    %c0_36 = arith.constant 0 : index
    %c0_37 = arith.constant 0 : index
    %142 = vector.load %arg29[%c0_36, %c0_37] : memref<16x32xf32, #tpu.memory_space<vmem>>, vector<16x32xf32>
    tpu.vector_store %arg29[%c0_36, %c0_37], %141 {strides = array<i32>} : memref<16x32xf32, #tpu.memory_space<vmem>>, vector<16x32xf32>,
    %c0_38 = arith.constant 0 : index
    %c0_39 = arith.constant 0 : index
    %143 = vector.load %arg2[%c0_38, %c0_39] : memref<16x24xf32, #tpu.memory_space<vmem>>, vector<16x24xf32>
    %144 = tpu.concatenate %141, %143 in 1 : vector<16x32xf32>, vector<16x24xf32> -> vector<16x56xf32>
    %145 = arith.truncf %144 : vector<16x56xf32> to vector<16x56xbf16>
    %c0_40 = arith.constant 0 : index
    %c0_41 = arith.constant 0 : index
    %146 = vector.load %arg10[%c0_40, %c0_41] : memref<56x200xf32, #tpu.memory_space<vmem>>, vector<56x200xf32>
    %147 = arith.truncf %146 : vector<56x200xf32> to vector<56x200xbf16>
    %cst_42 = arith.constant dense<0.000000e+00> : vector<16x200xf32>
    %148 = tpu.matmul %145, %147, %cst_42 {dimension_numbers = #tpu.dot_dimension_numbers<[1], [0], [0], [1], [0, 0, 1, 1], [], []>} : vector<16x56xbf16>, vector<56x200xbf16>, vector<16x200xf32> -> vector<16x200xf32>
    %c0_43 = arith.constant 0 : index
    %c0_44 = arith.constant 0 : index
    %149 = vector.load %arg11[%c0_43, %c0_44] : memref<1x200xf32, #tpu.memory_space<vmem>>, vector<1x200xf32>
    %150 = vector.broadcast %149 : vector<1x200xf32> to vector<16x200xf32>
    %151 = arith.addf %148, %150 : vector<16x200xf32>
    %152 = arith.truncf %151 : vector<16x200xf32> to vector<16x200xbf16>
    %c0_45 = arith.constant 0 : index
    %c0_46 = arith.constant 0 : index
    %153 = vector.load %arg12[%c0_45, %c0_46] : memref<200x32xf32, #tpu.memory_space<vmem>>, vector<200x32xf32>
    %154 = arith.truncf %153 : vector<200x32xf32> to vector<200x32xbf16>
    %cst_47 = arith.constant dense<0.000000e+00> : vector<16x32xf32>
    %155 = tpu.matmul %152, %154, %cst_47 {dimension_numbers = #tpu.dot_dimension_numbers<[1], [0], [0], [1], [0, 0, 1, 1], [], []>} : vector<16x200xbf16>, vector<200x32xbf16>, vector<16x32xf32> -> vector<16x32xf32>
    %c0_48 = arith.constant 0 : index
    %c0_49 = arith.constant 0 : index
    %156 = vector.load %arg13[%c0_48, %c0_49] : memref<1x32xf32, #tpu.memory_space<vmem>>, vector<1x32xf32>
    %157 = vector.broadcast %156 : vector<1x32xf32> to vector<16x32xf32>
    %158 = arith.addf %155, %157 : vector<16x32xf32>
    %159 = arith.truncf %158 : vector<16x32xf32> to vector<16x32xbf16>
    %c0_50 = arith.constant 0 : index
    %c0_51 = arith.constant 0 : index
    %160 = vector.load %arg14[%c0_50, %c0_51] : memref<32x200xf32, #tpu.memory_space<vmem>>, vector<32x200xf32>
    %161 = arith.truncf %160 : vector<32x200xf32> to vector<32x200xbf16>
    %cst_52 = arith.constant dense<0.000000e+00> : vector<16x200xf32>
    %162 = tpu.matmul %159, %161, %cst_52 {dimension_numbers = #tpu.dot_dimension_numbers<[1], [0], [0], [1], [0, 0, 1, 1], [], []>} : vector<16x32xbf16>, vector<32x200xbf16>, vector<16x200xf32> -> vector<16x200xf32>
    %c0_53 = arith.constant 0 : index
    %c0_54 = arith.constant 0 : index
    %163 = vector.load %arg15[%c0_53, %c0_54] : memref<1x200xf32, #tpu.memory_space<vmem>>, vector<1x200xf32>
    %164 = vector.broadcast %163 : vector<1x200xf32> to vector<16x200xf32>
    %165 = arith.addf %162, %164 : vector<16x200xf32>
    %166 = arith.truncf %165 : vector<16x200xf32> to vector<16x200xbf16>
    %c0_55 = arith.constant 0 : index
    %c0_56 = arith.constant 0 : index
    %167 = vector.load %arg16[%c0_55, %c0_56] : memref<200x56xf32, #tpu.memory_space<vmem>>, vector<200x56xf32>
    %168 = arith.truncf %167 : vector<200x56xf32> to vector<200x56xbf16>
    %cst_57 = arith.constant dense<0.000000e+00> : vector<16x56xf32>
    %169 = tpu.matmul %166, %168, %cst_57 {dimension_numbers = #tpu.dot_dimension_numbers<[1], [0], [0], [1], [0, 0, 1, 1], [], []>} : vector<16x200xbf16>, vector<200x56xbf16>, vector<16x56xf32> -> vector<16x56xf32>
    %c0_58 = arith.constant 0 : index
    %c0_59 = arith.constant 0 : index
    %170 = vector.load %arg17[%c0_58, %c0_59] : memref<1x56xf32, #tpu.memory_space<vmem>>, vector<1x56xf32>
    %171 = vector.broadcast %170 : vector<1x56xf32> to vector<16x56xf32>
    %172 = arith.addf %169, %171 : vector<16x56xf32>
    %173 = vector.extract_strided_slice %172 {offsets = [0, 0], sizes = [16, 24], strides = [1, 1]} : vector<16x56xf32> to vector<16x24xf32>
    %c0_60 = arith.constant 0 : index
    %c0_61 = arith.constant 0 : index
    %174 = vector.load %arg30[%c0_60, %c0_61] : memref<16x24xf32, #tpu.memory_space<vmem>>, vector<16x24xf32>
    tpu.vector_store %arg30[%c0_60, %c0_61], %173 {strides = array<i32>} : memref<16x24xf32, #tpu.memory_space<vmem>>, vector<16x24xf32>,
    %175 = vector.extract_strided_slice %172 {offsets = [0, 24], sizes = [16, 32], strides = [1, 1]} : vector<16x56xf32> to vector<16x32xf32>
    %c0_62 = arith.constant 0 : index
    %c0_63 = arith.constant 0 : index
    %176 = vector.load %arg31[%c0_62, %c0_63] : memref<16x32xf32, #tpu.memory_space<vmem>>, vector<16x32xf32>
    tpu.vector_store %arg31[%c0_62, %c0_63], %175 {strides = array<i32>} : memref<16x32xf32, #tpu.memory_space<vmem>>, vector<16x32xf32>,
    %c0_64 = arith.constant 0 : index
    %c0_65 = arith.constant 0 : index
    %177 = vector.load %arg3[%c0_64, %c0_65] : memref<8x2xi32, #tpu.memory_space<vmem>>, vector<8x2xi32>
    %178 = tpu.iota {dimensions = array<i32: 1>} : vector<8x16xi32>
    %179 = vector.extract_strided_slice %177 {offsets = [0, 0], sizes = [8, 1], strides = [1, 1]} : vector<8x2xi32> to vector<8x1xi32>
    %180 = vector.broadcast %179 : vector<8x1xi32> to vector<8x16xi32>
    %181 = arith.cmpi eq, %178, %180 : vector<8x16xi32>
    %182 = vector.extract_strided_slice %177 {offsets = [0, 1], sizes = [8, 1], strides = [1, 1]} : vector<8x2xi32> to vector<8x1xi32>
    %183 = vector.broadcast %182 : vector<8x1xi32> to vector<8x16xi32>
    %184 = arith.cmpi eq, %178, %183 : vector<8x16xi32>
    %185 = tpu.concatenate %181, %184 in 0 : vector<8x16xi1>, vector<8x16xi1> -> vector<16x16xi1>
    %186 = arith.extui %185 : vector<16x16xi1> to vector<16x16xi32>
    %187 = arith.sitofp %186 : vector<16x16xi32> to vector<16x16xf32>
    %188 = arith.truncf %187 : vector<16x16xf32> to vector<16x16xbf16>
    %189 = arith.truncf %158 : vector<16x32xf32> to vector<16x32xbf16>
    %cst_66 = arith.constant dense<0.000000e+00> : vector<16x32xf32>
    %190 = tpu.matmul %188, %189, %cst_66 {dimension_numbers = #tpu.dot_dimension_numbers<[1], [0], [0], [1], [0, 0, 1, 1], [], []>} : vector<16x16xbf16>, vector<16x32xbf16>, vector<16x32xf32> -> vector<16x32xf32>
    %191 = vector.extract_strided_slice %190 {offsets = [0, 0], sizes = [8, 32], strides = [1, 1]} : vector<16x32xf32> to vector<8x32xf32>
    %192 = vector.extract_strided_slice %190 {offsets = [8, 0], sizes = [8, 32], strides = [1, 1]} : vector<16x32xf32> to vector<8x32xf32>
    %193 = tpu.concatenate %191, %192 in 1 : vector<8x32xf32>, vector<8x32xf32> -> vector<8x64xf32>
    %194 = arith.truncf %193 : vector<8x64xf32> to vector<8x64xbf16>
    %c0_67 = arith.constant 0 : index
    %c0_68 = arith.constant 0 : index
    %195 = vector.load %arg18[%c0_67, %c0_68] : memref<64x512xf32, #tpu.memory_space<vmem>>, vector<64x512xf32>
    %196 = arith.truncf %195 : vector<64x512xf32> to vector<64x512xbf16>
    %cst_69 = arith.constant dense<0.000000e+00> : vector<8x512xf32>
    %197 = tpu.matmul %194, %196, %cst_69 {dimension_numbers = #tpu.dot_dimension_numbers<[1], [0], [0], [1], [0, 0, 1, 1], [], []>} : vector<8x64xbf16>, vector<64x512xbf16>, vector<8x512xf32> -> vector<8x512xf32>
    %c0_70 = arith.constant 0 : index
    %c0_71 = arith.constant 0 : index
    %198 = vector.load %arg19[%c0_70, %c0_71] : memref<1x512xf32, #tpu.memory_space<vmem>>, vector<1x512xf32>
    %199 = vector.broadcast %198 : vector<1x512xf32> to vector<8x512xf32>
    %200 = arith.addf %197, %199 : vector<8x512xf32>
    %cst_72 = arith.constant 0.000000e+00 : f32
    %201 = vector.broadcast %cst_72 : f32 to vector<8x512xf32>
    %202 = arith.maximumf %200, %201 : vector<8x512xf32>
    %c0_73 = arith.constant 0 : index
    %c0_74 = arith.constant 0 : index
    %203 = vector.load %arg20[%c0_73, %c0_74] : memref<1x512xf32, #tpu.memory_space<vmem>>, vector<1x512xf32>
    %204 = vector.broadcast %203 : vector<1x512xf32> to vector<8x512xf32>
    %205 = arith.mulf %202, %204 : vector<8x512xf32>
    %c0_75 = arith.constant 0 : index
    %c0_76 = arith.constant 0 : index
    %206 = vector.load %arg21[%c0_75, %c0_76] : memref<1x512xf32, #tpu.memory_space<vmem>>, vector<1x512xf32>
    %207 = vector.broadcast %206 : vector<1x512xf32> to vector<8x512xf32>
    %208 = arith.addf %205, %207 : vector<8x512xf32>
    %209 = arith.truncf %208 : vector<8x512xf32> to vector<8x512xbf16>
    %c0_77 = arith.constant 0 : index
    %c0_78 = arith.constant 0 : index
    %210 = vector.load %arg22[%c0_77, %c0_78] : memref<512x256xf32, #tpu.memory_space<vmem>>, vector<512x256xf32>
    %211 = arith.truncf %210 : vector<512x256xf32> to vector<512x256xbf16>
    %cst_79 = arith.constant dense<0.000000e+00> : vector<8x256xf32>
    %212 = tpu.matmul %209, %211, %cst_79 {dimension_numbers = #tpu.dot_dimension_numbers<[1], [0], [0], [1], [0, 0, 1, 1], [], []>} : vector<8x512xbf16>, vector<512x256xbf16>, vector<8x256xf32> -> vector<8x256xf32>
    %c0_80 = arith.constant 0 : index
    %c0_81 = arith.constant 0 : index
    %213 = vector.load %arg23[%c0_80, %c0_81] : memref<1x256xf32, #tpu.memory_space<vmem>>, vector<1x256xf32>
    %214 = vector.broadcast %213 : vector<1x256xf32> to vector<8x256xf32>
    %215 = arith.addf %212, %214 : vector<8x256xf32>
    %cst_82 = arith.constant 0.000000e+00 : f32
    %216 = vector.broadcast %cst_82 : f32 to vector<8x256xf32>
    %217 = arith.maximumf %215, %216 : vector<8x256xf32>
    %c0_83 = arith.constant 0 : index
    %c0_84 = arith.constant 0 : index
    %218 = vector.load %arg24[%c0_83, %c0_84] : memref<1x256xf32, #tpu.memory_space<vmem>>, vector<1x256xf32>
    %219 = vector.broadcast %218 : vector<1x256xf32> to vector<8x256xf32>
    %220 = arith.mulf %217, %219 : vector<8x256xf32>
    %c0_85 = arith.constant 0 : index
    %c0_86 = arith.constant 0 : index
    %221 = vector.load %arg25[%c0_85, %c0_86] : memref<1x256xf32, #tpu.memory_space<vmem>>, vector<1x256xf32>
    %222 = vector.broadcast %221 : vector<1x256xf32> to vector<8x256xf32>
    %223 = arith.addf %220, %222 : vector<8x256xf32>
    %224 = arith.truncf %223 : vector<8x256xf32> to vector<8x256xbf16>
    %c0_87 = arith.constant 0 : index
    %c0_88 = arith.constant 0 : index
    %225 = vector.load %arg26[%c0_87, %c0_88] : memref<256x1xf32, #tpu.memory_space<vmem>>, vector<256x1xf32>
    %226 = arith.truncf %225 : vector<256x1xf32> to vector<256x1xbf16>
    %cst_89 = arith.constant dense<0.000000e+00> : vector<8x1xf32>
    %227 = tpu.matmul %224, %226, %cst_89 {dimension_numbers = #tpu.dot_dimension_numbers<[1], [0], [0], [1], [0, 0, 1, 1], [], []>} : vector<8x256xbf16>, vector<256x1xbf16>, vector<8x1xf32> -> vector<8x1xf32>
    %c0_90 = arith.constant 0 : index
    %c0_91 = arith.constant 0 : index
    %228 = vector.load %arg27[%c0_90, %c0_91] : memref<1x1xf32, #tpu.memory_space<vmem>>, vector<1x1xf32>
    %229 = vector.broadcast %228 : vector<1x1xf32> to vector<8x1xf32>
    %230 = arith.addf %227, %229 : vector<8x1xf32>
    %cst_92 = arith.constant 0.000000e+00 : f32
    %231 = vector.broadcast %cst_92 : f32 to vector<8x1xf32>
    %232 = arith.subf %231, %230 : vector<8x1xf32>
    %233 = math.exp %232 : vector<8x1xf32>
    %cst_93 = arith.constant 1.000000e+00 : f32
    %234 = vector.broadcast %cst_93 : f32 to vector<8x1xf32>
    %235 = arith.addf %234, %233 : vector<8x1xf32>
    %cst_94 = arith.constant 1.000000e+00 : f32
    %236 = vector.broadcast %cst_94 : f32 to vector<8x1xf32>
    %237 = arith.divf %236, %235 : vector<8x1xf32>
    %c0_95 = arith.constant 0 : index
    %c0_96 = arith.constant 0 : index
    %238 = vector.load %arg28[%c0_95, %c0_96] : memref<8x1xf32, #tpu.memory_space<vmem>>, vector<8x1xf32>
    tpu.vector_store %arg28[%c0_95, %c0_96], %237 {strides = array<i32>} : memref<8x1xf32, #tpu.memory_space<vmem>>, vector<8x1xf32>,
    return
  }
}

</mosaic_0001>

<llo_original>
// kernel: model_forward.1
$region0: #{model_forward.1}
  #allocation0 [shape = 'u32[]', space=smem, size = 0x4, offset = 0x4, fixed_abs, tag = 'smem constant byte address 0x4 - core index']
  #allocation1 [shape = 'u32[144,128]{1,0:T(1,128)}', space=vmem, size = 0x12000, scoped, tag = 'internal scratch']
  #allocation2 [shape = 'f32[1,1]{1,0:T(1,128)S(1)}', space=vmem, size = 0x200, scoped, tag = 'scoped memory for model_forward.1']
  %s0 = inlined_call_operand.smem [shape: u32[32], index: -1, kind: input, shape index: {}]
  %s1 = sld [smem:[%s0]]
  %s2 = scalar_lea.smem %s0, 1
  %s3 = sld [smem:[%s2]]
  %s4 = scalar_lea.smem %s0, 2
  %s5 = sld [smem:[%s4]]
  %s6 = scalar_lea.smem %s0, 3
  %s7 = sld [smem:[%s6]]
  %s8 = scalar_lea.smem %s0, 4
  %s9 = sld [smem:[%s8]]
  %s10 = scalar_lea.smem %s0, 5
  %s11 = sld [smem:[%s10]]
  %s12 = scalar_lea.smem %s0, 6
  %s13 = sld [smem:[%s12]]
  %s14 = scalar_lea.smem %s0, 7
  %s15 = sld [smem:[%s14]]
  %s16 = scalar_lea.smem %s0, 8
  %s17 = sld [smem:[%s16]]
  %s18 = scalar_lea.smem %s0, 9
  %s19 = sld [smem:[%s18]]
  %s20 = scalar_lea.smem %s0, 10
  %s21 = sld [smem:[%s20]]
  %s22 = scalar_lea.smem %s0, 11
  %s23 = sld [smem:[%s22]]
  %s24 = scalar_lea.smem %s0, 12
  %s25 = sld [smem:[%s24]]
  %s26 = scalar_lea.smem %s0, 13
  %s27 = sld [smem:[%s26]]
  %s28 = scalar_lea.smem %s0, 14
  %s29 = sld [smem:[%s28]]
  %s30 = scalar_lea.smem %s0, 15
  %s31 = sld [smem:[%s30]]
  %s32 = scalar_lea.smem %s0, 16
  %s33 = sld [smem:[%s32]]
  %s34 = scalar_lea.smem %s0, 17
  %s35 = sld [smem:[%s34]]
  %s36 = scalar_lea.smem %s0, 18
  %s37 = sld [smem:[%s36]]
  %s38 = scalar_lea.smem %s0, 19
  %s39 = sld [smem:[%s38]]
  %s40 = scalar_lea.smem %s0, 20
  %s41 = sld [smem:[%s40]]
  %s42 = scalar_lea.smem %s0, 21
  %s43 = sld [smem:[%s42]]
  %s44 = scalar_lea.smem %s0, 22
  %s45 = sld [smem:[%s44]]
  %s46 = scalar_lea.smem %s0, 23
  %s47 = sld [smem:[%s46]]
  %s48 = scalar_lea.smem %s0, 24
  %s49 = sld [smem:[%s48]]
  %s50 = scalar_lea.smem %s0, 25
  %s51 = sld [smem:[%s50]]
  %s52 = scalar_lea.smem %s0, 26
  %s53 = sld [smem:[%s52]]
  %s54 = scalar_lea.smem %s0, 27
  %s55 = sld [smem:[%s54]]
  %s56 = scalar_lea.smem %s0, 28
  %s57 = sld [smem:[%s56]]
  %s58 = scalar_lea.smem %s0, 29
  %s59 = sld [smem:[%s58]]
  %s60 = scalar_lea.smem %s0, 30
  %s61 = sld [smem:[%s60]]
  %s62 = scalar_lea.smem %s0, 31
  %s63 = sld [smem:[%s62]]
  %64 = xla_tuple %s57, %s59, %s61, %s63
  %s65 = sld [smem:[#allocation0]]
  $region254: #{model_forward.1} parent=0
    _
  %s67 = ssub.s32 1, %s65
  %s68 = scalar_select 0, %s67, %s65
  %v69 = vstv %s55
  %70 = vst [vmem:[#allocation2] sm:$0x1] %v69
  $region1: #{model_forward.1} parent=0
    #allocation3 [shape = 'u8[8192]{0}', space=vmem, size = 0x2000, scoped, tag = 'input window, operand 0, single buffered']
    #allocation4 [shape = 's32[1]{0}', space=sflag, size = 0x4, scoped, tag = 'scoped memory for model_forward.1']
    #allocation5 [shape = 's32[1]{0}', space=sflag, size = 0x4, scoped, tag = 'scoped memory for model_forward.1']
    #allocation6 [shape = 'u8[4096]{0}', space=vmem, size = 0x1000, scoped, tag = 'input window, operand 1, single buffered']
    #allocation7 [shape = 's32[1]{0}', space=sflag, size = 0x4, scoped, tag = 'scoped memory for model_forward.1']
    #allocation8 [shape = 'u8[8192]{0}', space=vmem, size = 0x2000, scoped, tag = 'input window, operand 2, single buffered']
    #allocation9 [shape = 'u8[4096]{0}', space=vmem, size = 0x1000, scoped, tag = 'input window, operand 3, single buffered']
    #allocation10 [shape = 's32[1]{0}', space=sflag, size = 0x4, scoped, tag = 'scoped memory for model_forward.1']
    #allocation11 [shape = 'u8[32768]{0}', space=vmem, size = 0x8000, scoped, tag = 'input window, operand 4, single buffered']
    #allocation12 [shape = 'u8[32768]{0}', space=vmem, size = 0x8000, scoped, tag = 'input window, operand 5, single buffered']
    #allocation13 [shape = 's32[1]{0}', space=sflag, size = 0x4, scoped, tag = 'scoped memory for model_forward.1']
    #allocation14 [shape = 'u8[512]{0}', space=vmem, size = 0x400, scoped, tag = 'input window, operand 6, single buffered']
    #allocation15 [shape = 'u8[16384]{0}', space=vmem, size = 0x4000, scoped, tag = 'input window, operand 7, single buffered']
    #allocation16 [shape = 's32[1]{0}', space=sflag, size = 0x4, scoped, tag = 'scoped memory for model_forward.1']
    #allocation17 [shape = 'u8[32768]{0}', space=vmem, size = 0x8000, scoped, tag = 'input window, operand 8, single buffered']
    #allocation18 [shape = 'u8[512]{0}', space=vmem, size = 0x400, scoped, tag = 'input window, operand 9, single buffered']
    #allocation19 [shape = 's32[1]{0}', space=sflag, size = 0x4, scoped, tag = 'scoped memory for model_forward.1']
    #allocation20 [shape = 'u8[57344]{0}', space=vmem, size = 0xe000, scoped, tag = 'input window, operand 10, single buffered']
    #allocation21 [shape = 'u8[1024]{0}', space=vmem, size = 0x400, scoped, tag = 'input window, operand 11, single buffered']
    #allocation22 [shape = 's32[1]{0}', space=sflag, size = 0x4, scoped, tag = 'scoped memory for model_forward.1']
    #allocation23 [shape = 'u8[102400]{0}', space=vmem, size = 0x19000, scoped, tag = 'input window, operand 12, single buffered']
    #allocation24 [shape = 'u8[512]{0}', space=vmem, size = 0x400, scoped, tag = 'input window, operand 13, single buffered']
    #allocation25 [shape = 's32[1]{0}', space=sflag, size = 0x4, scoped, tag = 'scoped memory for model_forward.1']
    #allocation26 [shape = 'u8[32768]{0}', space=vmem, size = 0x8000, scoped, tag = 'input window, operand 14, single buffered']
    #allocation27 [shape = 'u8[1024]{0}', space=vmem, size = 0x400, scoped, tag = 'input window, operand 15, single buffered']
    #allocation28 [shape = 's32[1]{0}', space=sflag, size = 0x4, scoped, tag = 'scoped memory for model_forward.1']
    #allocation29 [shape = 'u8[102400]{0}', space=vmem, size = 0x19000, scoped, tag = 'input window, operand 16, single buffered']
    #allocation30 [shape = 'u8[512]{0}', space=vmem, size = 0x400, scoped, tag = 'input window, operand 17, single buffered']
    #allocation31 [shape = 's32[1]{0}', space=sflag, size = 0x4, scoped, tag = 'scoped memory for model_forward.1']
    #allocation32 [shape = 'u8[131072]{0}', space=vmem, size = 0x20000, scoped, tag = 'input window, operand 18, single buffered']
    #allocation33 [shape = 'u8[2048]{0}', space=vmem, size = 0x800, scoped, tag = 'input window, operand 19, single buffered']
    #allocation34 [shape = 's32[1]{0}', space=sflag, size = 0x4, scoped, tag = 'scoped memory for model_forward.1']
    #allocation35 [shape = 'u8[2048]{0}', space=vmem, size = 0x800, scoped, tag = 'input window, operand 20, single buffered']
    #allocation36 [shape = 'u8[2048]{0}', space=vmem, size = 0x800, scoped, tag = 'input window, operand 21, single buffered']
    #allocation37 [shape = 's32[1]{0}', space=sflag, size = 0x4, scoped, tag = 'scoped memory for model_forward.1']
    #allocation38 [shape = 'u8[524288]{0}', space=vmem, size = 0x80000, scoped, tag = 'input window, operand 22, single buffered']
    #allocation39 [shape = 'u8[1024]{0}', space=vmem, size = 0x400, scoped, tag = 'input window, operand 23, single buffered']
    #allocation40 [shape = 's32[1]{0}', space=sflag, size = 0x4, scoped, tag = 'scoped memory for model_forward.1']
    #allocation41 [shape = 'u8[1024]{0}', space=vmem, size = 0x400, scoped, tag = 'input window, operand 24, single buffered']
    #allocation42 [shape = 'u8[1024]{0}', space=vmem, size = 0x400, scoped, tag = 'input window, operand 25, single buffered']
    #allocation43 [shape = 's32[1]{0}', space=sflag, size = 0x4, scoped, tag = 'scoped memory for model_forward.1']
    #allocation44 [shape = 'u8[131072]{0}', space=vmem, size = 0x20000, scoped, tag = 'input window, operand 26, single buffered']
    #allocation45 [shape = 'u8[4096]{0}', space=vmem, size = 0x1000, scoped, tag = 'output window, operand 0, single buffered']
    #allocation46 [shape = 'u8[8192]{0}', space=vmem, size = 0x2000, scoped, tag = 'output window, operand 1, single buffered']
    #allocation47 [shape = 's32[1]{0}', space=sflag, size = 0x4, scoped, tag = 'scoped memory for model_forward.1']
    #allocation48 [shape = 'u8[8192]{0}', space=vmem, size = 0x2000, scoped, tag = 'output window, operand 2, single buffered']
    #allocation49 [shape = 'u8[8192]{0}', space=vmem, size = 0x2000, scoped, tag = 'output window, operand 3, single buffered']
    #allocation50 [shape = 's32[1]{0}', space=sflag, size = 0x4, scoped, tag = 'scoped memory for model_forward.1']
    %71 = vsyncpa [#allocation4], 0
    %72 = vsyncpa [#allocation7], 0
    %73 = vsyncpa [#allocation10], 0
    %74 = vsyncpa [#allocation13], 0
    %75 = vsyncpa [#allocation16], 0
    %76 = vsyncpa [#allocation19], 0
    %77 = vsyncpa [#allocation22], 0
    %78 = vsyncpa [#allocation25], 0
    %79 = vsyncpa [#allocation28], 0
    %80 = vsyncpa [#allocation31], 0
    %81 = vsyncpa [#allocation34], 0
    %82 = vsyncpa [#allocation37], 0
    %83 = vsyncpa [#allocation40], 0
    %84 = vsyncpa [#allocation43], 0
    %85 = vsyncpa [#allocation5], 0
    %86 = vsyncpa [#allocation47], 0
    %87 = vsyncpa [#allocation50], 0
    // Predicated region
    $region2: #{model_forward.1} parent=1 // pred_check
      _
    $region3: #{model_forward.1} parent=1 // pred_check_branch
      %89 = sbr.rel (0) target = $region5
    $region4: #{model_forward.1} parent=1 // pred_region
      %s91 = ssub.s32 256, 256
      %92 = vsyncadd [#allocation4], %s91
      %s93 = sshll.u32 [#allocation3], 4
      %s94 = int_to_ptr.vmem [resolvable:$true] %s93
      %99 = dma.hbm_to_vmem [thread:$0]  %s1, 256, %s94, [#allocation4], 128, 128, 8
    $region5: #{model_forward.1} parent=1 // pred_fallthru
      _
    // Predicated region
    $region6: #{model_forward.1} parent=1 // pred_check
      _
    $region7: #{model_forward.1} parent=1 // pred_check_branch
      %101 = sbr.rel (0) target = $region9
    $region8: #{model_forward.1} parent=1 // pred_region
      %s103 = ssub.s32 128, 128
      %104 = vsyncadd [#allocation7], %s103
      %s105 = sshll.u32 [#allocation6], 4
      %s106 = int_to_ptr.vmem [resolvable:$true] %s105
      %111 = dma.hbm_to_vmem [thread:$0]  %s3, 128, %s106, [#allocation7], 64, 64, 4
    $region9: #{model_forward.1} parent=1 // pred_fallthru
      _
    // Predicated region
    $region10: #{model_forward.1} parent=1 // pred_check
      _
    $region11: #{model_forward.1} parent=1 // pred_check_branch
      %113 = sbr.rel (0) target = $region13
    $region12: #{model_forward.1} parent=1 // pred_region
      %s115 = ssub.s32 256, 256
      %116 = vsyncadd [#allocation7], %s115
      %s117 = sshll.u32 [#allocation8], 4
      %s118 = int_to_ptr.vmem [resolvable:$true] %s117
      %123 = dma.hbm_to_vmem [thread:$0]  %s5, 256, %s118, [#allocation7], 128, 128, 8
    $region13: #{model_forward.1} parent=1 // pred_fallthru
      _
    // Predicated region
    $region14: #{model_forward.1} parent=1 // pred_check
      _
    $region15: #{model_forward.1} parent=1 // pred_check_branch
      %125 = sbr.rel (0) target = $region17
    $region16: #{model_forward.1} parent=1 // pred_region
      %s127 = ssub.s32 128, 128
      %128 = vsyncadd [#allocation10], %s127
      %s130 = sshll.u32 [#allocation9], 4
      %s131 = int_to_ptr.vmem [resolvable:$true] %s130
      %133 = dma.hbm_to_vmem [thread:$0]  %s7, 128, %s131, [#allocation10]
    $region17: #{model_forward.1} parent=1 // pred_fallthru
      _
    // Predicated region
    $region18: #{model_forward.1} parent=1 // pred_check
      _
    $region19: #{model_forward.1} parent=1 // pred_check_branch
      %135 = sbr.rel (0) target = $region21
    $region20: #{model_forward.1} parent=1 // pred_region
      %s137 = ssub.s32 1024, 1024
      %138 = vsyncadd [#allocation10], %s137
      %s139 = sshll.u32 [#allocation11], 4
      %s140 = int_to_ptr.vmem [resolvable:$true] %s139
      %145 = dma.hbm_to_vmem [thread:$0]  %s9, 1024, %s140, [#allocation10], 128, 128, 8
    $region21: #{model_forward.1} parent=1 // pred_fallthru
      _
    // Predicated region
    $region22: #{model_forward.1} parent=1 // pred_check
      _
    $region23: #{model_forward.1} parent=1 // pred_check_branch
      %147 = sbr.rel (0) target = $region25
    $region24: #{model_forward.1} parent=1 // pred_region
      %s149 = ssub.s32 1024, 1024
      %150 = vsyncadd [#allocation13], %s149
      %s151 = sshll.u32 [#allocation12], 4
      %s152 = int_to_ptr.vmem [resolvable:$true] %s151
      %157 = dma.hbm_to_vmem [thread:$0]  %s11, 1024, %s152, [#allocation13], 128, 128, 8
    $region25: #{model_forward.1} parent=1 // pred_fallthru
      _
    // Predicated region
    $region26: #{model_forward.1} parent=1 // pred_check
      _
    $region27: #{model_forward.1} parent=1 // pred_check_branch
      %159 = sbr.rel (0) target = $region29
    $region28: #{model_forward.1} parent=1 // pred_region
      %s161 = ssub.s32 16, 16
      %162 = vsyncadd [#allocation13], %s161
      %s164 = sshll.u32 [#allocation14], 4
      %s165 = int_to_ptr.vmem [resolvable:$true] %s164
      %167 = dma.hbm_to_vmem [thread:$0]  %s13, 16, %s165, [#allocation13]
    $region29: #{model_forward.1} parent=1 // pred_fallthru
      _
    // Predicated region
    $region30: #{model_forward.1} parent=1 // pred_check
      _
    $region31: #{model_forward.1} parent=1 // pred_check_branch
      %169 = sbr.rel (0) target = $region33
    $region32: #{model_forward.1} parent=1 // pred_region
      %s171 = ssub.s32 512, 512
      %172 = vsyncadd [#allocation16], %s171
      %s173 = sshll.u32 [#allocation15], 4
      %s174 = int_to_ptr.vmem [resolvable:$true] %s173
      %179 = dma.hbm_to_vmem [thread:$0]  %s15, 512, %s174, [#allocation16], 128, 128, 8
    $region33: #{model_forward.1} parent=1 // pred_fallthru
      _
    // Predicated region
    $region34: #{model_forward.1} parent=1 // pred_check
      _
    $region35: #{model_forward.1} parent=1 // pred_check_branch
      %181 = sbr.rel (0) target = $region37
    $region36: #{model_forward.1} parent=1 // pred_region
      %s183 = ssub.s32 1024, 1024
      %184 = vsyncadd [#allocation16], %s183
      %s185 = sshll.u32 [#allocation17], 4
      %s186 = int_to_ptr.vmem [resolvable:$true] %s185
      %191 = dma.hbm_to_vmem [thread:$0]  %s17, 1024, %s186, [#allocation16], 128, 128, 8
    $region37: #{model_forward.1} parent=1 // pred_fallthru
      _
    // Predicated region
    $region38: #{model_forward.1} parent=1 // pred_check
      _
    $region39: #{model_forward.1} parent=1 // pred_check_branch
      %193 = sbr.rel (0) target = $region41
    $region40: #{model_forward.1} parent=1 // pred_region
      %s195 = ssub.s32 16, 16
      %196 = vsyncadd [#allocation19], %s195
      %s198 = sshll.u32 [#allocation18], 4
      %s199 = int_to_ptr.vmem [resolvable:$true] %s198
      %201 = dma.hbm_to_vmem [thread:$0]  %s19, 16, %s199, [#allocation19]
    $region41: #{model_forward.1} parent=1 // pred_fallthru
      _
    // Predicated region
    $region42: #{model_forward.1} parent=1 // pred_check
      _
    $region43: #{model_forward.1} parent=1 // pred_check_branch
      %203 = sbr.rel (0) target = $region45
    $region44: #{model_forward.1} parent=1 // pred_region
      %s205 = ssub.s32 1792, 1792
      %206 = vsyncadd [#allocation19], %s205
      %s207 = sshll.u32 [#allocation20], 4
      %s208 = int_to_ptr.vmem [resolvable:$true] %s207
      %213 = dma.hbm_to_vmem [thread:$0]  %s21, 1792, %s208, [#allocation19], 256, 256, 16
    $region45: #{model_forward.1} parent=1 // pred_fallthru
      _
    // Predicated region
    $region46: #{model_forward.1} parent=1 // pred_check
      _
    $region47: #{model_forward.1} parent=1 // pred_check_branch
      %215 = sbr.rel (0) target = $region49
    $region48: #{model_forward.1} parent=1 // pred_region
      %s217 = ssub.s32 32, 32
      %218 = vsyncadd [#allocation22], %s217
      %s220 = sshll.u32 [#allocation21], 4
      %s221 = int_to_ptr.vmem [resolvable:$true] %s220
      %223 = dma.hbm_to_vmem [thread:$0]  %s23, 32, %s221, [#allocation22]
    $region49: #{model_forward.1} parent=1 // pred_fallthru
      _
    // Predicated region
    $region50: #{model_forward.1} parent=1 // pred_check
      _
    $region51: #{model_forward.1} parent=1 // pred_check_branch
      %225 = sbr.rel (0) target = $region53
    $region52: #{model_forward.1} parent=1 // pred_region
      %s227 = ssub.s32 3200, 3200
      %228 = vsyncadd [#allocation22], %s227
      %s229 = sshll.u32 [#allocation23], 4
      %s230 = int_to_ptr.vmem [resolvable:$true] %s229
      %235 = dma.hbm_to_vmem [thread:$0]  %s25, 3200, %s230, [#allocation22], 128, 128, 8
    $region53: #{model_forward.1} parent=1 // pred_fallthru
      _
    // Predicated region
    $region54: #{model_forward.1} parent=1 // pred_check
      _
    $region55: #{model_forward.1} parent=1 // pred_check_branch
      %237 = sbr.rel (0) target = $region57
    $region56: #{model_forward.1} parent=1 // pred_region
      %s239 = ssub.s32 16, 16
      %240 = vsyncadd [#allocation25], %s239
      %s242 = sshll.u32 [#allocation24], 4
      %s243 = int_to_ptr.vmem [resolvable:$true] %s242
      %245 = dma.hbm_to_vmem [thread:$0]  %s27, 16, %s243, [#allocation25]
    $region57: #{model_forward.1} parent=1 // pred_fallthru
      _
    // Predicated region
    $region58: #{model_forward.1} parent=1 // pred_check
      _
    $region59: #{model_forward.1} parent=1 // pred_check_branch
      %247 = sbr.rel (0) target = $region61
    $region60: #{model_forward.1} parent=1 // pred_region
      %s249 = ssub.s32 1024, 1024
      %250 = vsyncadd [#allocation25], %s249
      %s251 = sshll.u32 [#allocation26], 4
      %s252 = int_to_ptr.vmem [resolvable:$true] %s251
      %257 = dma.hbm_to_vmem [thread:$0]  %s29, 1024, %s252, [#allocation25], 256, 256, 16
    $region61: #{model_forward.1} parent=1 // pred_fallthru
      _
    // Predicated region
    $region62: #{model_forward.1} parent=1 // pred_check
      _
    $region63: #{model_forward.1} parent=1 // pred_check_branch
      %259 = sbr.rel (0) target = $region65
    $region64: #{model_forward.1} parent=1 // pred_region
      %s261 = ssub.s32 32, 32
      %262 = vsyncadd [#allocation28], %s261
      %s264 = sshll.u32 [#allocation27], 4
      %s265 = int_to_ptr.vmem [resolvable:$true] %s264
      %267 = dma.hbm_to_vmem [thread:$0]  %s31, 32, %s265, [#allocation28]
    $region65: #{model_forward.1} parent=1 // pred_fallthru
      _
    // Predicated region
    $region66: #{model_forward.1} parent=1 // pred_check
      _
    $region67: #{model_forward.1} parent=1 // pred_check_branch
      %269 = sbr.rel (0) target = $region69
    $region68: #{model_forward.1} parent=1 // pred_region
      %s271 = ssub.s32 3200, 3200
      %272 = vsyncadd [#allocation28], %s271
      %s273 = sshll.u32 [#allocation29], 4
      %s274 = int_to_ptr.vmem [resolvable:$true] %s273
      %279 = dma.hbm_to_vmem [thread:$0]  %s33, 3200, %s274, [#allocation28], 128, 128, 8
    $region69: #{model_forward.1} parent=1 // pred_fallthru
      _
    // Predicated region
    $region70: #{model_forward.1} parent=1 // pred_check
      _
    $region71: #{model_forward.1} parent=1 // pred_check_branch
      %281 = sbr.rel (0) target = $region73
    $region72: #{model_forward.1} parent=1 // pred_region
      %s283 = ssub.s32 16, 16
      %284 = vsyncadd [#allocation31], %s283
      %s286 = sshll.u32 [#allocation30], 4
      %s287 = int_to_ptr.vmem [resolvable:$true] %s286
      %289 = dma.hbm_to_vmem [thread:$0]  %s35, 16, %s287, [#allocation31]
    $region73: #{model_forward.1} parent=1 // pred_fallthru
      _
    // Predicated region
    $region74: #{model_forward.1} parent=1 // pred_check
      _
    $region75: #{model_forward.1} parent=1 // pred_check_branch
      %291 = sbr.rel (0) target = $region77
    $region76: #{model_forward.1} parent=1 // pred_region
      %s293 = ssub.s32 4096, 4096
      %294 = vsyncadd [#allocation31], %s293
      %s295 = sshll.u32 [#allocation32], 4
      %s296 = int_to_ptr.vmem [resolvable:$true] %s295
      %301 = dma.hbm_to_vmem [thread:$0]  %s37, 4096, %s296, [#allocation31], 512, 512, 32
    $region77: #{model_forward.1} parent=1 // pred_fallthru
      _
    // Predicated region
    $region78: #{model_forward.1} parent=1 // pred_check
      _
    $region79: #{model_forward.1} parent=1 // pred_check_branch
      %303 = sbr.rel (0) target = $region81
    $region80: #{model_forward.1} parent=1 // pred_region
      %s305 = ssub.s32 64, 64
      %306 = vsyncadd [#allocation34], %s305
      %s308 = sshll.u32 [#allocation33], 4
      %s309 = int_to_ptr.vmem [resolvable:$true] %s308
      %311 = dma.hbm_to_vmem [thread:$0]  %s39, 64, %s309, [#allocation34]
    $region81: #{model_forward.1} parent=1 // pred_fallthru
      _
    // Predicated region
    $region82: #{model_forward.1} parent=1 // pred_check
      _
    $region83: #{model_forward.1} parent=1 // pred_check_branch
      %313 = sbr.rel (0) target = $region85
    $region84: #{model_forward.1} parent=1 // pred_region
      %s315 = ssub.s32 64, 64
      %316 = vsyncadd [#allocation34], %s315
      %s318 = sshll.u32 [#allocation35], 4
      %s319 = int_to_ptr.vmem [resolvable:$true] %s318
      %321 = dma.hbm_to_vmem [thread:$0]  %s41, 64, %s319, [#allocation34]
    $region85: #{model_forward.1} parent=1 // pred_fallthru
      _
    // Predicated region
    $region86: #{model_forward.1} parent=1 // pred_check
      _
    $region87: #{model_forward.1} parent=1 // pred_check_branch
      %323 = sbr.rel (0) target = $region89
    $region88: #{model_forward.1} parent=1 // pred_region
      %s325 = ssub.s32 64, 64
      %326 = vsyncadd [#allocation37], %s325
      %s328 = sshll.u32 [#allocation36], 4
      %s329 = int_to_ptr.vmem [resolvable:$true] %s328
      %331 = dma.hbm_to_vmem [thread:$0]  %s43, 64, %s329, [#allocation37]
    $region89: #{model_forward.1} parent=1 // pred_fallthru
      _
    // Predicated region
    $region90: #{model_forward.1} parent=1 // pred_check
      _
    $region91: #{model_forward.1} parent=1 // pred_check_branch
      %333 = sbr.rel (0) target = $region93
    $region92: #{model_forward.1} parent=1 // pred_region
      %s335 = ssub.s32 16384, 16384
      %336 = vsyncadd [#allocation37], %s335
      %s337 = sshll.u32 [#allocation38], 4
      %s338 = int_to_ptr.vmem [resolvable:$true] %s337
      %343 = dma.hbm_to_vmem [thread:$0]  %s45, 16384, %s338, [#allocation37], 256, 256, 16
    $region93: #{model_forward.1} parent=1 // pred_fallthru
      _
    // Predicated region
    $region94: #{model_forward.1} parent=1 // pred_check
      _
    $region95: #{model_forward.1} parent=1 // pred_check_branch
      %345 = sbr.rel (0) target = $region97
    $region96: #{model_forward.1} parent=1 // pred_region
      %s347 = ssub.s32 32, 32
      %348 = vsyncadd [#allocation40], %s347
      %s350 = sshll.u32 [#allocation39], 4
      %s351 = int_to_ptr.vmem [resolvable:$true] %s350
      %353 = dma.hbm_to_vmem [thread:$0]  %s47, 32, %s351, [#allocation40]
    $region97: #{model_forward.1} parent=1 // pred_fallthru
      _
    // Predicated region
    $region98: #{model_forward.1} parent=1 // pred_check
      _
    $region99: #{model_forward.1} parent=1 // pred_check_branch
      %355 = sbr.rel (0) target = $region101
    $region100: #{model_forward.1} parent=1 // pred_region
      %s357 = ssub.s32 32, 32
      %358 = vsyncadd [#allocation40], %s357
      %s360 = sshll.u32 [#allocation41], 4
      %s361 = int_to_ptr.vmem [resolvable:$true] %s360
      %363 = dma.hbm_to_vmem [thread:$0]  %s49, 32, %s361, [#allocation40]
    $region101: #{model_forward.1} parent=1 // pred_fallthru
      _
    // Predicated region
    $region102: #{model_forward.1} parent=1 // pred_check
      _
    $region103: #{model_forward.1} parent=1 // pred_check_branch
      %365 = sbr.rel (0) target = $region105
    $region104: #{model_forward.1} parent=1 // pred_region
      %s367 = ssub.s32 32, 32
      %368 = vsyncadd [#allocation43], %s367
      %s370 = sshll.u32 [#allocation42], 4
      %s371 = int_to_ptr.vmem [resolvable:$true] %s370
      %373 = dma.hbm_to_vmem [thread:$0]  %s51, 32, %s371, [#allocation43]
    $region105: #{model_forward.1} parent=1 // pred_fallthru
      _
    // Predicated region
    $region106: #{model_forward.1} parent=1 // pred_check
      _
    $region107: #{model_forward.1} parent=1 // pred_check_branch
      %375 = sbr.rel (0) target = $region109
    $region108: #{model_forward.1} parent=1 // pred_region
      %s377 = ssub.s32 4096, 4096
      %378 = vsyncadd [#allocation43], %s377
      %s379 = sshll.u32 [#allocation44], 4
      %s380 = int_to_ptr.vmem [resolvable:$true] %s379
      %385 = dma.hbm_to_vmem [thread:$0]  %s53, 4096, %s380, [#allocation43], 128, 128, 8
    $region109: #{model_forward.1} parent=1 // pred_fallthru
      _
    // Predicated region
    $region110: #{model_forward.1} parent=1 // pred_check
      _
    $region111: #{model_forward.1} parent=1 // pred_check_branch
      %387 = sbr.rel (0) target = $region113
    $region112: #{model_forward.1} parent=1 // pred_region
      _
    $region113: #{model_forward.1} parent=1 // pred_fallthru
      _
    // Predicated region
    $region114: #{model_forward.1} parent=1 // pred_check
      _
    $region115: #{model_forward.1} parent=1 // pred_check_branch
      %389 = sbr.rel (0) target = $region117
    $region116: #{model_forward.1} parent=1 // pred_region
      %390 = dma.done [#allocation4], 256
    $region117: #{model_forward.1} parent=1 // pred_fallthru
      _
    // Predicated region
    $region118: #{model_forward.1} parent=1 // pred_check
      _
    $region119: #{model_forward.1} parent=1 // pred_check_branch
      %392 = sbr.rel (0) target = $region121
    $region120: #{model_forward.1} parent=1 // pred_region
      %393 = dma.done [#allocation7], 128
    $region121: #{model_forward.1} parent=1 // pred_fallthru
      _
    // Predicated region
    $region122: #{model_forward.1} parent=1 // pred_check
      _
    $region123: #{model_forward.1} parent=1 // pred_check_branch
      %395 = sbr.rel (0) target = $region125
    $region124: #{model_forward.1} parent=1 // pred_region
      %396 = dma.done [#allocation7], 256
    $region125: #{model_forward.1} parent=1 // pred_fallthru
      _
    // Predicated region
    $region126: #{model_forward.1} parent=1 // pred_check
      _
    $region127: #{model_forward.1} parent=1 // pred_check_branch
      %398 = sbr.rel (0) target = $region129
    $region128: #{model_forward.1} parent=1 // pred_region
      %399 = dma.done [#allocation10], 128
    $region129: #{model_forward.1} parent=1 // pred_fallthru
      _
    // Predicated region
    $region130: #{model_forward.1} parent=1 // pred_check
      _
    $region131: #{model_forward.1} parent=1 // pred_check_branch
      %401 = sbr.rel (0) target = $region133
    $region132: #{model_forward.1} parent=1 // pred_region
      %402 = dma.done [#allocation10], 1024
    $region133: #{model_forward.1} parent=1 // pred_fallthru
      _
    // Predicated region
    $region134: #{model_forward.1} parent=1 // pred_check
      _
    $region135: #{model_forward.1} parent=1 // pred_check_branch
      %404 = sbr.rel (0) target = $region137
    $region136: #{model_forward.1} parent=1 // pred_region
      %405 = dma.done [#allocation13], 1024
    $region137: #{model_forward.1} parent=1 // pred_fallthru
      _
    // Predicated region
    $region138: #{model_forward.1} parent=1 // pred_check
      _
    $region139: #{model_forward.1} parent=1 // pred_check_branch
      %407 = sbr.rel (0) target = $region141
    $region140: #{model_forward.1} parent=1 // pred_region
      %408 = dma.done [#allocation13], 16
    $region141: #{model_forward.1} parent=1 // pred_fallthru
      _
    // Predicated region
    $region142: #{model_forward.1} parent=1 // pred_check
      _
    $region143: #{model_forward.1} parent=1 // pred_check_branch
      %410 = sbr.rel (0) target = $region145
    $region144: #{model_forward.1} parent=1 // pred_region
      %411 = dma.done [#allocation16], 512
    $region145: #{model_forward.1} parent=1 // pred_fallthru
      _
    // Predicated region
    $region146: #{model_forward.1} parent=1 // pred_check
      _
    $region147: #{model_forward.1} parent=1 // pred_check_branch
      %413 = sbr.rel (0) target = $region149
    $region148: #{model_forward.1} parent=1 // pred_region
      %414 = dma.done [#allocation16], 1024
    $region149: #{model_forward.1} parent=1 // pred_fallthru
      _
    // Predicated region
    $region150: #{model_forward.1} parent=1 // pred_check
      _
    $region151: #{model_forward.1} parent=1 // pred_check_branch
      %416 = sbr.rel (0) target = $region153
    $region152: #{model_forward.1} parent=1 // pred_region
      %417 = dma.done [#allocation19], 16
    $region153: #{model_forward.1} parent=1 // pred_fallthru
      _
    // Predicated region
    $region154: #{model_forward.1} parent=1 // pred_check
      _
    $region155: #{model_forward.1} parent=1 // pred_check_branch
      %419 = sbr.rel (0) target = $region157
    $region156: #{model_forward.1} parent=1 // pred_region
      %420 = dma.done [#allocation19], 1792
    $region157: #{model_forward.1} parent=1 // pred_fallthru
      _
    // Predicated region
    $region158: #{model_forward.1} parent=1 // pred_check
      _
    $region159: #{model_forward.1} parent=1 // pred_check_branch
      %422 = sbr.rel (0) target = $region161
    $region160: #{model_forward.1} parent=1 // pred_region
      %423 = dma.done [#allocation22], 32
    $region161: #{model_forward.1} parent=1 // pred_fallthru
      _
    // Predicated region
    $region162: #{model_forward.1} parent=1 // pred_check
      _
    $region163: #{model_forward.1} parent=1 // pred_check_branch
      %425 = sbr.rel (0) target = $region165
    $region164: #{model_forward.1} parent=1 // pred_region
      %426 = dma.done [#allocation22], 3200
    $region165: #{model_forward.1} parent=1 // pred_fallthru
      _
    // Predicated region
    $region166: #{model_forward.1} parent=1 // pred_check
      _
    $region167: #{model_forward.1} parent=1 // pred_check_branch
      %428 = sbr.rel (0) target = $region169
    $region168: #{model_forward.1} parent=1 // pred_region
      %429 = dma.done [#allocation25], 16
    $region169: #{model_forward.1} parent=1 // pred_fallthru
      _
    // Predicated region
    $region170: #{model_forward.1} parent=1 // pred_check
      _
    $region171: #{model_forward.1} parent=1 // pred_check_branch
      %431 = sbr.rel (0) target = $region173
    $region172: #{model_forward.1} parent=1 // pred_region
      %432 = dma.done [#allocation25], 1024
    $region173: #{model_forward.1} parent=1 // pred_fallthru
      _
    // Predicated region
    $region174: #{model_forward.1} parent=1 // pred_check
      _
    $region175: #{model_forward.1} parent=1 // pred_check_branch
      %434 = sbr.rel (0) target = $region177
    $region176: #{model_forward.1} parent=1 // pred_region
      %435 = dma.done [#allocation28], 32
    $region177: #{model_forward.1} parent=1 // pred_fallthru
      _
    // Predicated region
    $region178: #{model_forward.1} parent=1 // pred_check
      _
    $region179: #{model_forward.1} parent=1 // pred_check_branch
      %437 = sbr.rel (0) target = $region181
    $region180: #{model_forward.1} parent=1 // pred_region
      %438 = dma.done [#allocation28], 3200
    $region181: #{model_forward.1} parent=1 // pred_fallthru
      _
    // Predicated region
    $region182: #{model_forward.1} parent=1 // pred_check
      _
    $region183: #{model_forward.1} parent=1 // pred_check_branch
      %440 = sbr.rel (0) target = $region185
    $region184: #{model_forward.1} parent=1 // pred_region
      %441 = dma.done [#allocation31], 16
    $region185: #{model_forward.1} parent=1 // pred_fallthru
      _
    // Predicated region
    $region186: #{model_forward.1} parent=1 // pred_check
      _
    $region187: #{model_forward.1} parent=1 // pred_check_branch
      %443 = sbr.rel (0) target = $region189
    $region188: #{model_forward.1} parent=1 // pred_region
      %444 = dma.done [#allocation31], 4096
    $region189: #{model_forward.1} parent=1 // pred_fallthru
      _
    // Predicated region
    $region190: #{model_forward.1} parent=1 // pred_check
      _
    $region191: #{model_forward.1} parent=1 // pred_check_branch
      %446 = sbr.rel (0) target = $region193
    $region192: #{model_forward.1} parent=1 // pred_region
      %447 = dma.done [#allocation34], 64
    $region193: #{model_forward.1} parent=1 // pred_fallthru
      _
    // Predicated region
    $region194: #{model_forward.1} parent=1 // pred_check
      _
    $region195: #{model_forward.1} parent=1 // pred_check_branch
      %449 = sbr.rel (0) target = $region197
    $region196: #{model_forward.1} parent=1 // pred_region
      %450 = dma.done [#allocation34], 64
    $region197: #{model_forward.1} parent=1 // pred_fallthru
      _
    // Predicated region
    $region198: #{model_forward.1} parent=1 // pred_check
      _
    $region199: #{model_forward.1} parent=1 // pred_check_branch
      %452 = sbr.rel (0) target = $region201
    $region200: #{model_forward.1} parent=1 // pred_region
      %453 = dma.done [#allocation37], 64
    $region201: #{model_forward.1} parent=1 // pred_fallthru
      _
    // Predicated region
    $region202: #{model_forward.1} parent=1 // pred_check
      _
    $region203: #{model_forward.1} parent=1 // pred_check_branch
      %455 = sbr.rel (0) target = $region205
    $region204: #{model_forward.1} parent=1 // pred_region
      %456 = dma.done [#allocation37], 16384
    $region205: #{model_forward.1} parent=1 // pred_fallthru
      _
    // Predicated region
    $region206: #{model_forward.1} parent=1 // pred_check
      _
    $region207: #{model_forward.1} parent=1 // pred_check_branch
      %458 = sbr.rel (0) target = $region209
    $region208: #{model_forward.1} parent=1 // pred_region
      %459 = dma.done [#allocation40], 32
    $region209: #{model_forward.1} parent=1 // pred_fallthru
      _
    // Predicated region
    $region210: #{model_forward.1} parent=1 // pred_check
      _
    $region211: #{model_forward.1} parent=1 // pred_check_branch
      %461 = sbr.rel (0) target = $region213
    $region212: #{model_forward.1} parent=1 // pred_region
      %462 = dma.done [#allocation40], 32
    $region213: #{model_forward.1} parent=1 // pred_fallthru
      _
    // Predicated region
    $region214: #{model_forward.1} parent=1 // pred_check
      _
    $region215: #{model_forward.1} parent=1 // pred_check_branch
      %464 = sbr.rel (0) target = $region217
    $region216: #{model_forward.1} parent=1 // pred_region
      %465 = dma.done [#allocation43], 32
    $region217: #{model_forward.1} parent=1 // pred_fallthru
      _
    // Predicated region
    $region218: #{model_forward.1} parent=1 // pred_check
      _
    $region219: #{model_forward.1} parent=1 // pred_check_branch
      %467 = sbr.rel (0) target = $region221
    $region220: #{model_forward.1} parent=1 // pred_region
      %468 = dma.done [#allocation43], 4096
    $region221: #{model_forward.1} parent=1 // pred_fallthru
      _
    %v470 = vld [vmem:[#allocation6] sm:$0xf]
    %v471 = vld [vmem:[#allocation6 + $0x4] sm:$0xf]
    %v472 = vld [vmem:[#allocation3] sm:$0xff]
    %v473 = vld [vmem:[#allocation3 + $0x8] sm:$0xff]
    %v474 = vld [vmem:[#allocation11] sm:$0xff]
    %v475 = vld [vmem:[#allocation11 + $0x8] sm:$0xff]
    %v476 = vld [vmem:[#allocation11 + $0x10] sm:$0xff]
    %v477 = vld [vmem:[#allocation11 + $0x18] sm:$0xff]
    %v478 = vld [vmem:[#allocation11 + $0x20] sm:$0xff]
    %v479 = vld [vmem:[#allocation11 + $0x28] sm:$0xff]
    %v480 = vld [vmem:[#allocation11 + $0x30] sm:$0xff]
    %v481 = vld [vmem:[#allocation11 + $0x38] sm:$0xff]
    %v482 = vld [vmem:[#allocation12] sm:$0xff]
    %v483 = vld [vmem:[#allocation12 + $0x8] sm:$0xff]
    %v484 = vld [vmem:[#allocation12 + $0x10] sm:$0xff]
    %v485 = vld [vmem:[#allocation12 + $0x18] sm:$0xff]
    %v486 = vld [vmem:[#allocation12 + $0x20] sm:$0xff]
    %v487 = vld [vmem:[#allocation12 + $0x28] sm:$0xff]
    %v488 = vld [vmem:[#allocation12 + $0x30] sm:$0xff]
    %v489 = vld [vmem:[#allocation12 + $0x38] sm:$0xff]
    %v490 = vld [vmem:[#allocation14] sm:$0x1]
    %v491 = vpack.c.bf16 %v473, %v472
    %v492 = vpack.c.bf16 %v475, %v474
    %v493 = vpack.c.bf16 %v477, %v476
    %v494 = vpack.c.bf16 %v479, %v478
    %v495 = vpack.c.bf16 %v481, %v480
    %vm496 = vcmask 523264
    %v498 = vsel %vm496, %v491, 0
    %500 = vmatprep.subr.bf16.mxu0 0
    %501 = vmatpush1.bf16.msra.mxu0 %v492
    %502 = vmatprep.subr.bf16.mxu0 0
    %503 = vmatpush1.bf16.msra.mxu0 %v493
    %504 = vmatprep.subr.bf16.mxu0 0
    %505 = vmatpush1.bf16.msra.mxu0 %v494
    %506 = vmatprep.subr.bf16.mxu0 0
    %507 = vmatpush1.bf16.msra.mxu0 %v495
    %508 = vmatprep.subr.bf16.mxu0 0
    %509 = vmatpush1.bf16.msra.mxu0 0
    %510 = vmatprep.subr.bf16.mxu0 0
    %511 = vmatpush1.bf16.msra.mxu0 0
    %512 = vmatprep.subr.bf16.mxu0 0
    %513 = vmatpush1.bf16.msra.mxu0 0
    %514 = vmatprep.subr.bf16.mxu0 0
    %515 = vmatpush1.bf16.msra.mxu0 0
    %516 = vmatprep.subr.bf16.mxu0 0
    %517 = vmatpush1.bf16.msra.mxu0 0
    %518 = vmatprep.subr.bf16.mxu0 0
    %519 = vmatpush1.bf16.msra.mxu0 0
    %520 = vmatprep.subr.bf16.mxu0 0
    %521 = vmatpush1.bf16.msra.mxu0 0
    %522 = vmatprep.subr.bf16.mxu0 0
    %523 = vmatpush1.bf16.msra.mxu0 0
    %524 = vmatprep.subr.bf16.mxu0 0
    %525 = vmatpush1.bf16.msra.mxu0 0
    %526 = vmatprep.subr.bf16.mxu0 0
    %527 = vmatpush1.bf16.msra.mxu0 0
    %528 = vmatprep.subr.bf16.mxu0 0
    %529 = vmatpush1.bf16.msra.mxu0 0
    %530 = vmatprep.subr.bf16.mxu0 0
    %531 = vmatpush1.bf16.msra.mxu0 0
    %532 = vmatprep.mubr.bf16.mxu0 0
    %533 = vmatmul.mubr.bf16.gmra.mrb[0].mxu0 %v498
    %v534 = vpop.f32.mrb[0].mxu0
    %v535 = vadd.f32 0.0, %v534
    %v536 = vpop.f32.mrb[0].mxu0
    %v537 = vpop.f32.mrb[0].mxu0
    %v538 = vadd.f32 0.0, %v537
    %v539 = vpop.f32.mrb[0].mxu0
    %540 = vdwg.mxu0
    %v541 = vpack.c.bf16 %v538, %v535
    %v542 = vpack.c.bf16 %v483, %v482
    %v543 = vpack.c.bf16 %v485, %v484
    %v544 = vpack.c.bf16 %v487, %v486
    %v545 = vpack.c.bf16 %v489, %v488
    %v547 = vsel %vm496, %v541, 0
    %549 = vmatprep.subr.bf16.mxu0 0
    %550 = vmatpush1.bf16.msra.mxu0 %v542
    %551 = vmatprep.subr.bf16.mxu0 0
    %552 = vmatpush1.bf16.msra.mxu0 %v543
    %553 = vmatprep.subr.bf16.mxu0 0
    %554 = vmatpush1.bf16.msra.mxu0 %v544
    %555 = vmatprep.subr.bf16.mxu0 0
    %556 = vmatpush1.bf16.msra.mxu0 %v545
    %557 = vmatprep.subr.bf16.mxu0 0
    %558 = vmatpush1.bf16.msra.mxu0 0
    %559 = vmatprep.subr.bf16.mxu0 0
    %560 = vmatpush1.bf16.msra.mxu0 0
    %561 = vmatprep.subr.bf16.mxu0 0
    %562 = vmatpush1.bf16.msra.mxu0 0
    %563 = vmatprep.subr.bf16.mxu0 0
    %564 = vmatpush1.bf16.msra.mxu0 0
    %565 = vmatprep.subr.bf16.mxu0 0
    %566 = vmatpush1.bf16.msra.mxu0 0
    %567 = vmatprep.subr.bf16.mxu0 0
    %568 = vmatpush1.bf16.msra.mxu0 0
    %569 = vmatprep.subr.bf16.mxu0 0
    %570 = vmatpush1.bf16.msra.mxu0 0
    %571 = vmatprep.subr.bf16.mxu0 0
    %572 = vmatpush1.bf16.msra.mxu0 0
    %573 = vmatprep.subr.bf16.mxu0 0
    %574 = vmatpush1.bf16.msra.mxu0 0
    %575 = vmatprep.subr.bf16.mxu0 0
    %576 = vmatpush1.bf16.msra.mxu0 0
    %577 = vmatprep.subr.bf16.mxu0 0
    %578 = vmatpush1.bf16.msra.mxu0 0
    %579 = vmatprep.subr.bf16.mxu0 0
    %580 = vmatpush1.bf16.msra.mxu0 0
    %581 = vmatprep.mubr.bf16.mxu0 0
    %582 = vmatmul.mubr.bf16.gmra.mrb[0].mxu0 %v547
    %v583 = vpop.f32.mrb[0].mxu0
    %v584 = vadd.f32 0.0, %v583
    %v585 = vpop.f32.mrb[0].mxu0
    %v586 = vpop.f32.mrb[0].mxu0
    %v587 = vadd.f32 0.0, %v586
    %v588 = vpop.f32.mrb[0].mxu0
    %589 = vdwg.mxu0
    %591 = vset.pattern.permute.xlu0 2
    %592 = vperm.xlu0 %591, %v584
    %v593 = vpop.permute.xlu0 %592
    %596 = vset.pattern.permute.xlu0 2
    %597 = vperm.xlu0 %596, %v587
    %v598 = vpop.permute.xlu0 %597
    %600 = vset.pattern.permute.xlu0 0
    %601 = vperm.xlu0 %600, %v584
    %v602 = vpop.permute.xlu0 %601
    %603 = vset.pattern.permute.xlu0 0
    %604 = vperm.xlu0 %603, %v587
    %v605 = vpop.permute.xlu0 %604
    %v606 = vlaneseq
    %v607 = vand.u32 %v606, 127
    %v608 = vlaneseq
    %v609 = vshrl.u32 %v608, 7
    %v610 = vsub.s32 %v607, %v609
    %v611 = vrot.slane %v602, %v610
    %v612 = vadd.s32 %v607, 4294967288
    %v613 = vlaneseq
    %v614 = vshrl.u32 %v613, 7
    %v615 = vsub.s32 %v612, %v614
    %v616 = vrot.slane %v605, %v615
    %vm617 = vcmask 130112
    %v618 = vsel %vm617, %v616, %v611
    %vm619 = vcmask 1042434
    %v620 = vsel %vm619, %v618, %v618
    %vm621 = vcmask 1043459
    %v622 = vsel %vm621, %v618, %v620
    %vm623 = vcmask 1044484
    %v624 = vsel %vm623, %v618, %v622
    %vm625 = vcmask 1045509
    %v626 = vsel %vm625, %v618, %v624
    %vm627 = vcmask 1046534
    %v628 = vsel %vm627, %v618, %v626
    %vm629 = vcmask 1047559
    %v630 = vsel %vm629, %v618, %v628
    %v632 = vadd.f32 %v593, %v630
    %v633 = vadd.f32 %v598, %v630
    %v634 = vmul.f32 %v632, 0.2
    %v635 = vmul.f32 %v633, 0.2
    %v636 = vmax.f32 %v632, %v634
    %v637 = vmax.f32 %v633, %v635
    %v638 = vunpack.c.l.bf16 %v470
    %v639 = vunpack.c.l.bf16 %v471
    %v640 = vadd.f32 %v636, %v638
    %v641 = vadd.f32 %v637, %v639
    %vm642 = vcmask 130048
    %v643 = vsel %vm642, %v640, -inf
    %644 = vmax.xlane.f32.xlu0 %v643
    %v645 = vpop.xlane.xlu0 %644
    %v646 = vsel %vm642, %v641, -inf
    %647 = vmax.xlane.f32.xlu0 %v646
    %v648 = vpop.xlane.xlu0 %647
    %v649 = vsub.f32 %v640, %v645
    %v650 = vsub.f32 %v641, %v648
    %v651 = vmul.f32 %v649, 1.442695
    %v652 = vpow.pop %v651
    %v653 = vmul.f32 %v650, 1.442695
    %v654 = vpow.pop %v653
    %v655 = vsel %vm642, %v652, 0.0
    %656 = vadd.xlane.f32.xlu0 %v655
    %v657 = vpop.xlane.xlu0 %656
    %v658 = vsel %vm642, %v654, 0.0
    %659 = vadd.xlane.f32.xlu0 %v658
    %v660 = vpop.xlane.xlu0 %659
    %v661 = vrcp.pop %v657
    %v662 = vrcp.pop %v660
    %v663 = vmul.f32 %v652, %v661
    %v664 = vmul.f32 %v654, %v662
    %v665 = vpack.c.bf16 %v664, %v663
    %666 = vset.pattern.permute.xlu0 3
    %667 = vperm.xlu0 %666, %v584
    %v668 = vpop.permute.xlu0 %667
    %670 = vset.pattern.permute.xlu0 3
    %671 = vperm.xlu0 %670, %v587
    %v672 = vpop.permute.xlu0 %671
    %674 = vset.pattern.permute.xlu0 1
    %675 = vperm.xlu0 %674, %v584
    %v676 = vpop.permute.xlu0 %675
    %677 = vset.pattern.permute.xlu0 1
    %678 = vperm.xlu0 %677, %v587
    %v679 = vpop.permute.xlu0 %678
    %v680 = vlaneseq
    %v681 = vshrl.u32 %v680, 7
    %v682 = vsub.s32 %v607, %v681
    %v683 = vrot.slane %v676, %v682
    %v684 = vlaneseq
    %v685 = vshrl.u32 %v684, 7
    %v686 = vsub.s32 %v612, %v685
    %v687 = vrot.slane %v679, %v686
    %v688 = vsel %vm617, %v687, %v683
    %v689 = vsel %vm619, %v688, %v688
    %v690 = vsel %vm621, %v688, %v689
    %v691 = vsel %vm623, %v688, %v690
    %v692 = vsel %vm625, %v688, %v691
    %v693 = vsel %vm627, %v688, %v692
    %v694 = vsel %vm629, %v688, %v693
    %v696 = vadd.f32 %v668, %v694
    %v697 = vadd.f32 %v672, %v694
    %v698 = vmul.f32 %v696, 0.2
    %v699 = vmul.f32 %v697, 0.2
    %v700 = vmax.f32 %v696, %v698
    %v701 = vmax.f32 %v697, %v699
    %v702 = vadd.f32 %v700, %v638
    %v703 = vadd.f32 %v701, %v639
    %v704 = vsel %vm642, %v702, -inf
    %705 = vmax.xlane.f32.xlu0 %v704
    %v706 = vpop.xlane.xlu0 %705
    %v707 = vsel %vm642, %v703, -inf
    %708 = vmax.xlane.f32.xlu0 %v707
    %v709 = vpop.xlane.xlu0 %708
    %v710 = vsub.f32 %v702, %v706
    %v711 = vsub.f32 %v703, %v709
    %v712 = vmul.f32 %v710, 1.442695
    %v713 = vpow.pop %v712
    %v714 = vmul.f32 %v711, 1.442695
    %v715 = vpow.pop %v714
    %v716 = vsel %vm642, %v713, 0.0
    %717 = vadd.xlane.f32.xlu0 %v716
    %v718 = vpop.xlane.xlu0 %717
    %v719 = vsel %vm642, %v715, 0.0
    %720 = vadd.xlane.f32.xlu0 %v719
    %v721 = vpop.xlane.xlu0 %720
    %v722 = vrcp.pop %v718
    %v723 = vrcp.pop %v721
    %v724 = vmul.f32 %v713, %v722
    %v725 = vmul.f32 %v715, %v723
    %v726 = vpack.c.bf16 %v725, %v724
    %728 = vrot.lane.b32.xlu0 %v541, 96
    %v729 = vpop.permute.xlu0 %728
    %v732 = vsel %vm642, %v726, 0
    %734 = vmatprep.subr.bf16.mxu0 0
    %735 = vmatpush1.bf16.msra.mxu0 %v729
    %736 = vmatprep.subr.bf16.mxu0 0
    %737 = vmatpush1.bf16.msra.mxu0 0
    %738 = vmatprep.subr.bf16.mxu0 0
    %739 = vmatpush1.bf16.msra.mxu0 0
    %740 = vmatprep.subr.bf16.mxu0 0
    %741 = vmatpush1.bf16.msra.mxu0 0
    %742 = vmatprep.subr.bf16.mxu0 0
    %743 = vmatpush1.bf16.msra.mxu0 0
    %744 = vmatprep.subr.bf16.mxu0 0
    %745 = vmatpush1.bf16.msra.mxu0 0
    %746 = vmatprep.subr.bf16.mxu0 0
    %747 = vmatpush1.bf16.msra.mxu0 0
    %748 = vmatprep.subr.bf16.mxu0 0
    %749 = vmatpush1.bf16.msra.mxu0 0
    %750 = vmatprep.subr.bf16.mxu0 0
    %751 = vmatpush1.bf16.msra.mxu0 0
    %752 = vmatprep.subr.bf16.mxu0 0
    %753 = vmatpush1.bf16.msra.mxu0 0
    %754 = vmatprep.subr.bf16.mxu0 0
    %755 = vmatpush1.bf16.msra.mxu0 0
    %756 = vmatprep.subr.bf16.mxu0 0
    %757 = vmatpush1.bf16.msra.mxu0 0
    %758 = vmatprep.subr.bf16.mxu0 0
    %759 = vmatpush1.bf16.msra.mxu0 0
    %760 = vmatprep.subr.bf16.mxu0 0
    %761 = vmatpush1.bf16.msra.mxu0 0
    %762 = vmatprep.subr.bf16.mxu0 0
    %763 = vmatpush1.bf16.msra.mxu0 0
    %764 = vmatprep.subr.bf16.mxu0 0
    %765 = vmatpush1.bf16.msra.mxu0 0
    %766 = vmatprep.mubr.bf16.mxu0 0
    %767 = vmatmul.mubr.bf16.gmra.mrb[0].mxu0 %v732
    %v768 = vpop.f32.mrb[0].mxu0
    %v769 = vadd.f32 0.0, %v768
    %v770 = vpop.f32.mrb[0].mxu0
    %v771 = vpop.f32.mrb[0].mxu0
    %v772 = vadd.f32 0.0, %v771
    %v773 = vpop.f32.mrb[0].mxu0
    %774 = vdwg.mxu0
    %v776 = vsel %vm642, %v665, 0
    %778 = vmatprep.subr.bf16.mxu0 0
    %779 = vmatpush1.bf16.msra.mxu0 %v541
    %780 = vmatprep.subr.bf16.mxu0 0
    %781 = vmatpush1.bf16.msra.mxu0 0
    %782 = vmatprep.subr.bf16.mxu0 0
    %783 = vmatpush1.bf16.msra.mxu0 0
    %784 = vmatprep.subr.bf16.mxu0 0
    %785 = vmatpush1.bf16.msra.mxu0 0
    %786 = vmatprep.subr.bf16.mxu0 0
    %787 = vmatpush1.bf16.msra.mxu0 0
    %788 = vmatprep.subr.bf16.mxu0 0
    %789 = vmatpush1.bf16.msra.mxu0 0
    %790 = vmatprep.subr.bf16.mxu0 0
    %791 = vmatpush1.bf16.msra.mxu0 0
    %792 = vmatprep.subr.bf16.mxu0 0
    %793 = vmatpush1.bf16.msra.mxu0 0
    %794 = vmatprep.subr.bf16.mxu0 0
    %795 = vmatpush1.bf16.msra.mxu0 0
    %796 = vmatprep.subr.bf16.mxu0 0
    %797 = vmatpush1.bf16.msra.mxu0 0
    %798 = vmatprep.subr.bf16.mxu0 0
    %799 = vmatpush1.bf16.msra.mxu0 0
    %800 = vmatprep.subr.bf16.mxu0 0
    %801 = vmatpush1.bf16.msra.mxu0 0
    %802 = vmatprep.subr.bf16.mxu0 0
    %803 = vmatpush1.bf16.msra.mxu0 0
    %804 = vmatprep.subr.bf16.mxu0 0
    %805 = vmatpush1.bf16.msra.mxu0 0
    %806 = vmatprep.subr.bf16.mxu0 0
    %807 = vmatpush1.bf16.msra.mxu0 0
    %808 = vmatprep.subr.bf16.mxu0 0
    %809 = vmatpush1.bf16.msra.mxu0 0
    %810 = vmatprep.mubr.bf16.mxu0 0
    %811 = vmatmul.mubr.bf16.gmra.mrb[0].mxu0 %v776
    %v812 = vpop.f32.mrb[0].mxu0
    %v813 = vadd.f32 %v769, %v812
    %v814 = vpop.f32.mrb[0].mxu0
    %v815 = vpop.f32.mrb[0].mxu0
    %v816 = vadd.f32 %v772, %v815
    %v817 = vpop.f32.mrb[0].mxu0
    %818 = vdwg.mxu0
    %v819 = vmul.f32 %v813, 0.5
    %v820 = vmul.f32 %v816, 0.5
    %v822 = vlaneseq
    %v823 = vshrl.u32 %v822, 7
    %v824 = vsub.s32 0, %v823
    %v825 = vrot.slane %v490, %v824
    %v827 = vadd.f32 %v819, %v825
    %v828 = vadd.f32 %v820, %v825
    %v829 = vld [vmem:[#allocation15] sm:$0xff]
    %v830 = vld [vmem:[#allocation15 + $0x8] sm:$0xff]
    %v831 = vld [vmem:[#allocation15 + $0x10] sm:$0xff]
    %v832 = vld [vmem:[#allocation15 + $0x18] sm:$0xff]
    %v833 = vld [vmem:[#allocation17] sm:$0xff]
    %v834 = vld [vmem:[#allocation17 + $0x8] sm:$0xff]
    %v835 = vld [vmem:[#allocation17 + $0x10] sm:$0xff]
    %v836 = vld [vmem:[#allocation17 + $0x18] sm:$0xff]
    %v837 = vld [vmem:[#allocation17 + $0x20] sm:$0xff]
    %v838 = vld [vmem:[#allocation17 + $0x28] sm:$0xff]
    %v839 = vld [vmem:[#allocation17 + $0x30] sm:$0xff]
    %v840 = vld [vmem:[#allocation17 + $0x38] sm:$0xff]
    %v841 = vld [vmem:[#allocation18] sm:$0x1]
    %v842 = vpack.c.bf16 %v828, %v827
    %v843 = vpack.c.bf16 %v830, %v829
    %v844 = vpack.c.bf16 %v832, %v831
    %vm845 = vcmask 261120
    %v847 = vsel %vm845, %v842, 0
    %849 = vmatprep.subr.bf16.mxu0 0
    %850 = vmatpush1.bf16.msra.mxu0 %v843
    %851 = vmatprep.subr.bf16.mxu0 0
    %852 = vmatpush1.bf16.msra.mxu0 %v844
    %853 = vmatprep.subr.bf16.mxu0 0
    %854 = vmatpush1.bf16.msra.mxu0 0
    %855 = vmatprep.subr.bf16.mxu0 0
    %856 = vmatpush1.bf16.msra.mxu0 0
    %857 = vmatprep.subr.bf16.mxu0 0
    %858 = vmatpush1.bf16.msra.mxu0 0
    %859 = vmatprep.subr.bf16.mxu0 0
    %860 = vmatpush1.bf16.msra.mxu0 0
    %861 = vmatprep.subr.bf16.mxu0 0
    %862 = vmatpush1.bf16.msra.mxu0 0
    %863 = vmatprep.subr.bf16.mxu0 0
    %864 = vmatpush1.bf16.msra.mxu0 0
    %865 = vmatprep.subr.bf16.mxu0 0
    %866 = vmatpush1.bf16.msra.mxu0 0
    %867 = vmatprep.subr.bf16.mxu0 0
    %868 = vmatpush1.bf16.msra.mxu0 0
    %869 = vmatprep.subr.bf16.mxu0 0
    %870 = vmatpush1.bf16.msra.mxu0 0
    %871 = vmatprep.subr.bf16.mxu0 0
    %872 = vmatpush1.bf16.msra.mxu0 0
    %873 = vmatprep.subr.bf16.mxu0 0
    %874 = vmatpush1.bf16.msra.mxu0 0
    %875 = vmatprep.subr.bf16.mxu0 0
    %876 = vmatpush1.bf16.msra.mxu0 0
    %877 = vmatprep.subr.bf16.mxu0 0
    %878 = vmatpush1.bf16.msra.mxu0 0
    %879 = vmatprep.subr.bf16.mxu0 0
    %880 = vmatpush1.bf16.msra.mxu0 0
    %881 = vmatprep.mubr.bf16.mxu0 0
    %882 = vmatmul.mubr.bf16.gmra.mrb[0].mxu0 %v847
    %v883 = vpop.f32.mrb[0].mxu0
    %v884 = vadd.f32 0.0, %v883
    %v885 = vpop.f32.mrb[0].mxu0
    %v886 = vpop.f32.mrb[0].mxu0
    %v887 = vadd.f32 0.0, %v886
    %v888 = vpop.f32.mrb[0].mxu0
    %889 = vdwg.mxu0
    %v890 = vpack.c.bf16 %v887, %v884
    %v891 = vpack.c.bf16 %v834, %v833
    %v892 = vpack.c.bf16 %v836, %v835
    %v893 = vpack.c.bf16 %v838, %v837
    %v894 = vpack.c.bf16 %v840, %v839
    %v896 = vsel %vm496, %v890, 0
    %898 = vmatprep.subr.bf16.mxu0 0
    %899 = vmatpush1.bf16.msra.mxu0 %v891
    %900 = vmatprep.subr.bf16.mxu0 0
    %901 = vmatpush1.bf16.msra.mxu0 %v892
    %902 = vmatprep.subr.bf16.mxu0 0
    %903 = vmatpush1.bf16.msra.mxu0 %v893
    %904 = vmatprep.subr.bf16.mxu0 0
    %905 = vmatpush1.bf16.msra.mxu0 %v894
    %906 = vmatprep.subr.bf16.mxu0 0
    %907 = vmatpush1.bf16.msra.mxu0 0
    %908 = vmatprep.subr.bf16.mxu0 0
    %909 = vmatpush1.bf16.msra.mxu0 0
    %910 = vmatprep.subr.bf16.mxu0 0
    %911 = vmatpush1.bf16.msra.mxu0 0
    %912 = vmatprep.subr.bf16.mxu0 0
    %913 = vmatpush1.bf16.msra.mxu0 0
    %914 = vmatprep.subr.bf16.mxu0 0
    %915 = vmatpush1.bf16.msra.mxu0 0
    %916 = vmatprep.subr.bf16.mxu0 0
    %917 = vmatpush1.bf16.msra.mxu0 0
    %918 = vmatprep.subr.bf16.mxu0 0
    %919 = vmatpush1.bf16.msra.mxu0 0
    %920 = vmatprep.subr.bf16.mxu0 0
    %921 = vmatpush1.bf16.msra.mxu0 0
    %922 = vmatprep.subr.bf16.mxu0 0
    %923 = vmatpush1.bf16.msra.mxu0 0
    %924 = vmatprep.subr.bf16.mxu0 0
    %925 = vmatpush1.bf16.msra.mxu0 0
    %926 = vmatprep.subr.bf16.mxu0 0
    %927 = vmatpush1.bf16.msra.mxu0 0
    %928 = vmatprep.subr.bf16.mxu0 0
    %929 = vmatpush1.bf16.msra.mxu0 0
    %930 = vmatprep.mubr.bf16.mxu0 0
    %931 = vmatmul.mubr.bf16.gmra.mrb[0].mxu0 %v896
    %v932 = vpop.f32.mrb[0].mxu0
    %v933 = vadd.f32 0.0, %v932
    %v934 = vpop.f32.mrb[0].mxu0
    %v935 = vpop.f32.mrb[0].mxu0
    %v936 = vadd.f32 0.0, %v935
    %v937 = vpop.f32.mrb[0].mxu0
    %938 = vdwg.mxu0
    %940 = vset.pattern.permute.xlu0 2
    %941 = vperm.xlu0 %940, %v933
    %v942 = vpop.permute.xlu0 %941
    %945 = vset.pattern.permute.xlu0 2
    %946 = vperm.xlu0 %945, %v936
    %v947 = vpop.permute.xlu0 %946
    %949 = vset.pattern.permute.xlu0 0
    %950 = vperm.xlu0 %949, %v933
    %v951 = vpop.permute.xlu0 %950
    %952 = vset.pattern.permute.xlu0 0
    %953 = vperm.xlu0 %952, %v936
    %v954 = vpop.permute.xlu0 %953
    %v955 = vlaneseq
    %v956 = vshrl.u32 %v955, 7
    %v957 = vsub.s32 %v607, %v956
    %v958 = vrot.slane %v951, %v957
    %v959 = vlaneseq
    %v960 = vshrl.u32 %v959, 7
    %v961 = vsub.s32 %v612, %v960
    %v962 = vrot.slane %v954, %v961
    %v963 = vsel %vm617, %v962, %v958
    %v964 = vsel %vm619, %v963, %v963
    %v965 = vsel %vm621, %v963, %v964
    %v966 = vsel %vm623, %v963, %v965
    %v967 = vsel %vm625, %v963, %v966
    %v968 = vsel %vm627, %v963, %v967
    %v969 = vsel %vm629, %v963, %v968
    %v971 = vadd.f32 %v942, %v969
    %v972 = vadd.f32 %v947, %v969
    %v973 = vmul.f32 %v971, 0.2
    %v974 = vmul.f32 %v972, 0.2
    %v975 = vmax.f32 %v971, %v973
    %v976 = vmax.f32 %v972, %v974
    %v977 = vadd.f32 %v975, %v638
    %v978 = vadd.f32 %v976, %v639
    %v979 = vsel %vm642, %v977, -inf
    %980 = vmax.xlane.f32.xlu0 %v979
    %v981 = vpop.xlane.xlu0 %980
    %v982 = vsel %vm642, %v978, -inf
    %983 = vmax.xlane.f32.xlu0 %v982
    %v984 = vpop.xlane.xlu0 %983
    %v985 = vsub.f32 %v977, %v981
    %v986 = vsub.f32 %v978, %v984
    %v987 = vmul.f32 %v985, 1.442695
    %v988 = vpow.pop %v987
    %v989 = vmul.f32 %v986, 1.442695
    %v990 = vpow.pop %v989
    %v991 = vsel %vm642, %v988, 0.0
    %992 = vadd.xlane.f32.xlu0 %v991
    %v993 = vpop.xlane.xlu0 %992
    %v994 = vsel %vm642, %v990, 0.0
    %995 = vadd.xlane.f32.xlu0 %v994
    %v996 = vpop.xlane.xlu0 %995
    %v997 = vrcp.pop %v993
    %v998 = vrcp.pop %v996
    %v999 = vmul.f32 %v988, %v997
    %v1000 = vmul.f32 %v990, %v998
    %v1001 = vpack.c.bf16 %v1000, %v999
    %1002 = vset.pattern.permute.xlu0 3
    %1003 = vperm.xlu0 %1002, %v933
    %v1004 = vpop.permute.xlu0 %1003
    %1006 = vset.pattern.permute.xlu0 3
    %1007 = vperm.xlu0 %1006, %v936
    %v1008 = vpop.permute.xlu0 %1007
    %1010 = vset.pattern.permute.xlu0 1
    %1011 = vperm.xlu0 %1010, %v933
    %v1012 = vpop.permute.xlu0 %1011
    %1013 = vset.pattern.permute.xlu0 1
    %1014 = vperm.xlu0 %1013, %v936
    %v1015 = vpop.permute.xlu0 %1014
    %v1016 = vlaneseq
    %v1017 = vshrl.u32 %v1016, 7
    %v1018 = vsub.s32 %v607, %v1017
    %v1019 = vrot.slane %v1012, %v1018
    %v1020 = vlaneseq
    %v1021 = vshrl.u32 %v1020, 7
    %v1022 = vsub.s32 %v612, %v1021
    %v1023 = vrot.slane %v1015, %v1022
    %v1024 = vsel %vm617, %v1023, %v1019
    %v1025 = vsel %vm619, %v1024, %v1024
    %v1026 = vsel %vm621, %v1024, %v1025
    %v1027 = vsel %vm623, %v1024, %v1026
    %v1028 = vsel %vm625, %v1024, %v1027
    %v1029 = vsel %vm627, %v1024, %v1028
    %v1030 = vsel %vm629, %v1024, %v1029
    %v1032 = vadd.f32 %v1004, %v1030
    %v1033 = vadd.f32 %v1008, %v1030
    %v1034 = vmul.f32 %v1032, 0.2
    %v1035 = vmul.f32 %v1033, 0.2
    %v1036 = vmax.f32 %v1032, %v1034
    %v1037 = vmax.f32 %v1033, %v1035
    %v1038 = vadd.f32 %v1036, %v638
    %v1039 = vadd.f32 %v1037, %v639
    %v1040 = vsel %vm642, %v1038, -inf
    %1041 = vmax.xlane.f32.xlu0 %v1040
    %v1042 = vpop.xlane.xlu0 %1041
    %v1043 = vsel %vm642, %v1039, -inf
    %1044 = vmax.xlane.f32.xlu0 %v1043
    %v1045 = vpop.xlane.xlu0 %1044
    %v1046 = vsub.f32 %v1038, %v1042
    %v1047 = vsub.f32 %v1039, %v1045
    %v1048 = vmul.f32 %v1046, 1.442695
    %v1049 = vpow.pop %v1048
    %v1050 = vmul.f32 %v1047, 1.442695
    %v1051 = vpow.pop %v1050
    %v1052 = vsel %vm642, %v1049, 0.0
    %1053 = vadd.xlane.f32.xlu0 %v1052
    %v1054 = vpop.xlane.xlu0 %1053
    %v1055 = vsel %vm642, %v1051, 0.0
    %1056 = vadd.xlane.f32.xlu0 %v1055
    %v1057 = vpop.xlane.xlu0 %1056
    %v1058 = vrcp.pop %v1054
    %v1059 = vrcp.pop %v1057
    %v1060 = vmul.f32 %v1049, %v1058
    %v1061 = vmul.f32 %v1051, %v1059
    %v1062 = vpack.c.bf16 %v1061, %v1060
    %1064 = vrot.lane.b32.xlu0 %v890, 96
    %v1065 = vpop.permute.xlu0 %1064
    %v1068 = vsel %vm642, %v1062, 0
    %1070 = vmatprep.subr.bf16.mxu0 0
    %1071 = vmatpush1.bf16.msra.mxu0 %v1065
    %1072 = vmatprep.subr.bf16.mxu0 0
    %1073 = vmatpush1.bf16.msra.mxu0 0
    %1074 = vmatprep.subr.bf16.mxu0 0
    %1075 = vmatpush1.bf16.msra.mxu0 0
    %1076 = vmatprep.subr.bf16.mxu0 0
    %1077 = vmatpush1.bf16.msra.mxu0 0
    %1078 = vmatprep.subr.bf16.mxu0 0
    %1079 = vmatpush1.bf16.msra.mxu0 0
    %1080 = vmatprep.subr.bf16.mxu0 0
    %1081 = vmatpush1.bf16.msra.mxu0 0
    %1082 = vmatprep.subr.bf16.mxu0 0
    %1083 = vmatpush1.bf16.msra.mxu0 0
    %1084 = vmatprep.subr.bf16.mxu0 0
    %1085 = vmatpush1.bf16.msra.mxu0 0
    %1086 = vmatprep.subr.bf16.mxu0 0
    %1087 = vmatpush1.bf16.msra.mxu0 0
    %1088 = vmatprep.subr.bf16.mxu0 0
    %1089 = vmatpush1.bf16.msra.mxu0 0
    %1090 = vmatprep.subr.bf16.mxu0 0
    %1091 = vmatpush1.bf16.msra.mxu0 0
    %1092 = vmatprep.subr.bf16.mxu0 0
    %1093 = vmatpush1.bf16.msra.mxu0 0
    %1094 = vmatprep.subr.bf16.mxu0 0
    %1095 = vmatpush1.bf16.msra.mxu0 0
    %1096 = vmatprep.subr.bf16.mxu0 0
    %1097 = vmatpush1.bf16.msra.mxu0 0
    %1098 = vmatprep.subr.bf16.mxu0 0
    %1099 = vmatpush1.bf16.msra.mxu0 0
    %1100 = vmatprep.subr.bf16.mxu0 0
    %1101 = vmatpush1.bf16.msra.mxu0 0
    %1102 = vmatprep.mubr.bf16.mxu0 0
    %1103 = vmatmul.mubr.bf16.gmra.mrb[0].mxu0 %v1068
    %v1104 = vpop.f32.mrb[0].mxu0
    %v1105 = vadd.f32 0.0, %v1104
    %v1106 = vpop.f32.mrb[0].mxu0
    %v1107 = vpop.f32.mrb[0].mxu0
    %v1108 = vadd.f32 0.0, %v1107
    %v1109 = vpop.f32.mrb[0].mxu0
    %1110 = vdwg.mxu0
    %v1112 = vsel %vm642, %v1001, 0
    %1114 = vmatprep.subr.bf16.mxu0 0
    %1115 = vmatpush1.bf16.msra.mxu0 %v890
    %1116 = vmatprep.subr.bf16.mxu0 0
    %1117 = vmatpush1.bf16.msra.mxu0 0
    %1118 = vmatprep.subr.bf16.mxu0 0
    %1119 = vmatpush1.bf16.msra.mxu0 0
    %1120 = vmatprep.subr.bf16.mxu0 0
    %1121 = vmatpush1.bf16.msra.mxu0 0
    %1122 = vmatprep.subr.bf16.mxu0 0
    %1123 = vmatpush1.bf16.msra.mxu0 0
    %1124 = vmatprep.subr.bf16.mxu0 0
    %1125 = vmatpush1.bf16.msra.mxu0 0
    %1126 = vmatprep.subr.bf16.mxu0 0
    %1127 = vmatpush1.bf16.msra.mxu0 0
    %1128 = vmatprep.subr.bf16.mxu0 0
    %1129 = vmatpush1.bf16.msra.mxu0 0
    %1130 = vmatprep.subr.bf16.mxu0 0
    %1131 = vmatpush1.bf16.msra.mxu0 0
    %1132 = vmatprep.subr.bf16.mxu0 0
    %1133 = vmatpush1.bf16.msra.mxu0 0
    %1134 = vmatprep.subr.bf16.mxu0 0
    %1135 = vmatpush1.bf16.msra.mxu0 0
    %1136 = vmatprep.subr.bf16.mxu0 0
    %1137 = vmatpush1.bf16.msra.mxu0 0
    %1138 = vmatprep.subr.bf16.mxu0 0
    %1139 = vmatpush1.bf16.msra.mxu0 0
    %1140 = vmatprep.subr.bf16.mxu0 0
    %1141 = vmatpush1.bf16.msra.mxu0 0
    %1142 = vmatprep.subr.bf16.mxu0 0
    %1143 = vmatpush1.bf16.msra.mxu0 0
    %1144 = vmatprep.subr.bf16.mxu0 0
    %1145 = vmatpush1.bf16.msra.mxu0 0
    %1146 = vmatprep.mubr.bf16.mxu0 0
    %1147 = vmatmul.mubr.bf16.gmra.mrb[0].mxu0 %v1112
    %v1148 = vpop.f32.mrb[0].mxu0
    %v1149 = vadd.f32 %v1105, %v1148
    %v1150 = vpop.f32.mrb[0].mxu0
    %v1151 = vpop.f32.mrb[0].mxu0
    %v1152 = vadd.f32 %v1108, %v1151
    %v1153 = vpop.f32.mrb[0].mxu0
    %1154 = vdwg.mxu0
    %v1155 = vmul.f32 %v1149, 0.5
    %v1156 = vmul.f32 %v1152, 0.5
    %v1158 = vlaneseq
    %v1159 = vshrl.u32 %v1158, 7
    %v1160 = vsub.s32 0, %v1159
    %v1161 = vrot.slane %v841, %v1160
    %v1163 = vadd.f32 %v1155, %v1161
    %v1164 = vadd.f32 %v1156, %v1161
    %1165 = vst.msk [vmem:[#allocation46] sm:$0xff] %vm845, %v1163
    %1166 = vst.msk [vmem:[#allocation46 + $0x8] sm:$0xff] %vm845, %v1164
    %v1167 = vld [vmem:[#allocation8] sm:$0xff]
    %v1168 = vld [vmem:[#allocation8 + $0x8] sm:$0xff]
    %1171 = vrot.lane.b32.xlu0 %v1167, 32
    %v1172 = vpop.permute.xlu0 %1171
    %1173 = vrot.lane.b32.xlu0 %v1168, 32
    %v1174 = vpop.permute.xlu0 %1173
    %v1177 = vsel %vm845, %v1163, %v1172
    %v1178 = vsel %vm845, %v1164, %v1174
    %v1179 = vpack.c.bf16 %v1178, %v1177
    %v1180 = vld [vmem:[#allocation20] sm:$0xff]
    %v1181 = vld [vmem:[#allocation20 + $0x8] sm:$0xff]
    %v1182 = vld [vmem:[#allocation20 + $0x10] sm:$0xff]
    %v1183 = vld [vmem:[#allocation20 + $0x18] sm:$0xff]
    %v1184 = vld [vmem:[#allocation20 + $0x20] sm:$0xff]
    %v1185 = vld [vmem:[#allocation20 + $0x28] sm:$0xff]
    %v1186 = vld [vmem:[#allocation20 + $0x30] sm:$0xff]
    %v1187 = vld [vmem:[#allocation20 + $0x38] sm:$0xff]
    %v1188 = vld [vmem:[#allocation20 + $0x40] sm:$0xff]
    %v1189 = vld [vmem:[#allocation20 + $0x48] sm:$0xff]
    %v1190 = vld [vmem:[#allocation20 + $0x50] sm:$0xff]
    %v1191 = vld [vmem:[#allocation20 + $0x58] sm:$0xff]
    %v1192 = vld [vmem:[#allocation20 + $0x60] sm:$0xff]
    %v1193 = vld [vmem:[#allocation20 + $0x68] sm:$0xff]
    %v1194 = vpack.c.bf16 %v1182, %v1180
    %v1195 = vpack.c.bf16 %v1183, %v1181
    %v1196 = vpack.c.bf16 %v1186, %v1184
    %v1197 = vpack.c.bf16 %v1187, %v1185
    %v1198 = vpack.c.bf16 %v1190, %v1188
    %v1199 = vpack.c.bf16 %v1191, %v1189
    %v1200 = vpack.c.bf16 %v1192, %v1192
    %v1201 = vpack.c.bf16 %v1193, %v1193
    %v1202 = vld [vmem:[#allocation21] sm:$0x3]
    %v1204 = vlaneseq
    %v1205 = vshrl.u32 %v1204, 7
    %v1206 = vsub.s32 0, %v1205
    %v1207 = vrot.slane %v1202, %v1206
    %v1208 = vlaneseq
    %v1209 = vshrl.u32 %v1208, 7
    %v1210 = vsub.s32 1, %v1209
    %v1211 = vrot.slane %v1202, %v1210
    %vm1214 = vcmask 457728
    %v1216 = vsel %vm1214, %v1179, 0
    %vm1218 = vcmask 1043456
    %v1220 = vsel %vm1218, %v1200, 0
    %v1223 = vsel %vm1218, %v1201, 0
    %1225 = vmatprep.subr.bf16.mxu0 %v1195
    %1226 = vmatpush1.bf16.msra.mxu0 %v1194
    %1227 = vmatprep.subr.bf16.mxu0 %v1197
    %1228 = vmatpush1.bf16.msra.mxu0 %v1196
    %1229 = vmatprep.subr.bf16.mxu0 %v1199
    %1230 = vmatpush1.bf16.msra.mxu0 %v1198
    %1231 = vmatprep.subr.bf16.mxu0 %v1223
    %1232 = vmatpush1.bf16.msra.mxu0 %v1220
    %1233 = vmatprep.subr.bf16.mxu0 0
    %1234 = vmatpush1.bf16.msra.mxu0 0
    %1235 = vmatprep.subr.bf16.mxu0 0
    %1236 = vmatpush1.bf16.msra.mxu0 0
    %1237 = vmatprep.subr.bf16.mxu0 0
    %1238 = vmatpush1.bf16.msra.mxu0 0
    %1239 = vmatprep.subr.bf16.mxu0 0
    %1240 = vmatpush1.bf16.msra.mxu0 0
    %1241 = vmatprep.subr.bf16.mxu0 0
    %1242 = vmatpush1.bf16.msra.mxu0 0
    %1243 = vmatprep.subr.bf16.mxu0 0
    %1244 = vmatpush1.bf16.msra.mxu0 0
    %1245 = vmatprep.subr.bf16.mxu0 0
    %1246 = vmatpush1.bf16.msra.mxu0 0
    %1247 = vmatprep.subr.bf16.mxu0 0
    %1248 = vmatpush1.bf16.msra.mxu0 0
    %1249 = vmatprep.subr.bf16.mxu0 0
    %1250 = vmatpush1.bf16.msra.mxu0 0
    %1251 = vmatprep.subr.bf16.mxu0 0
    %1252 = vmatpush1.bf16.msra.mxu0 0
    %1253 = vmatprep.subr.bf16.mxu0 0
    %1254 = vmatpush1.bf16.msra.mxu0 0
    %1255 = vmatprep.subr.bf16.mxu0 0
    %1256 = vmatpush1.bf16.msra.mxu0 0
    %1257 = vmatprep.mubr.bf16.mxu0 0
    %1258 = vmatmul.mubr.bf16.gmra.mrb[0].mxu0 %v1216
    %v1259 = vpop.f32.mrb[0].mxu0
    %v1260 = vadd.f32 %v1207, %v1259
    %v1261 = vpop.f32.mrb[0].mxu0
    %v1262 = vadd.f32 %v1211, %v1261
    %v1263 = vpop.f32.mrb[0].mxu0
    %v1264 = vadd.f32 %v1207, %v1263
    %v1265 = vpop.f32.mrb[0].mxu0
    %v1266 = vadd.f32 %v1211, %v1265
    %1267 = vdwg.mxu0
    %v1268 = vpack.c.bf16 %v1264, %v1260
    %v1269 = vpack.c.bf16 %v1266, %v1262
    %v1270 = vld [vmem:[#allocation23] sm:$0xff]
    %v1271 = vld [vmem:[#allocation23 + $0x8] sm:$0xff]
    %v1272 = vld [vmem:[#allocation23 + $0x10] sm:$0xff]
    %v1273 = vld [vmem:[#allocation23 + $0x18] sm:$0xff]
    %v1274 = vld [vmem:[#allocation23 + $0x20] sm:$0xff]
    %v1275 = vld [vmem:[#allocation23 + $0x28] sm:$0xff]
    %v1276 = vld [vmem:[#allocation23 + $0x30] sm:$0xff]
    %v1277 = vld [vmem:[#allocation23 + $0x38] sm:$0xff]
    %v1278 = vld [vmem:[#allocation23 + $0x40] sm:$0xff]
    %v1279 = vld [vmem:[#allocation23 + $0x48] sm:$0xff]
    %v1280 = vld [vmem:[#allocation23 + $0x50] sm:$0xff]
    %v1281 = vld [vmem:[#allocation23 + $0x58] sm:$0xff]
    %v1282 = vld [vmem:[#allocation23 + $0x60] sm:$0xff]
    %v1283 = vld [vmem:[#allocation23 + $0x68] sm:$0xff]
    %v1284 = vld [vmem:[#allocation23 + $0x70] sm:$0xff]
    %v1285 = vld [vmem:[#allocation23 + $0x78] sm:$0xff]
    %v1286 = vld [vmem:[#allocation23 + $0x80] sm:$0xff]
    %v1287 = vld [vmem:[#allocation23 + $0x88] sm:$0xff]
    %v1288 = vld [vmem:[#allocation23 + $0x90] sm:$0xff]
    %v1289 = vld [vmem:[#allocation23 + $0x98] sm:$0xff]
    %v1290 = vld [vmem:[#allocation23 + $0xa0] sm:$0xff]
    %v1291 = vld [vmem:[#allocation23 + $0xa8] sm:$0xff]
    %v1292 = vld [vmem:[#allocation23 + $0xb0] sm:$0xff]
    %v1293 = vld [vmem:[#allocation23 + $0xb8] sm:$0xff]
    %v1294 = vld [vmem:[#allocation23 + $0xc0] sm:$0xff]
    %v1295 = vpack.c.bf16 %v1271, %v1270
    %v1296 = vpack.c.bf16 %v1273, %v1272
    %v1297 = vpack.c.bf16 %v1275, %v1274
    %v1298 = vpack.c.bf16 %v1277, %v1276
    %v1299 = vpack.c.bf16 %v1279, %v1278
    %v1300 = vpack.c.bf16 %v1281, %v1280
    %v1301 = vpack.c.bf16 %v1283, %v1282
    %v1302 = vpack.c.bf16 %v1285, %v1284
    %v1303 = vpack.c.bf16 %v1287, %v1286
    %v1304 = vpack.c.bf16 %v1289, %v1288
    %v1305 = vpack.c.bf16 %v1291, %v1290
    %v1306 = vpack.c.bf16 %v1293, %v1292
    %v1307 = vpack.c.bf16 %v1294, %v1294
    %v1308 = vld [vmem:[#allocation24] sm:$0x1]
    %v1310 = vlaneseq
    %v1311 = vshrl.u32 %v1310, 7
    %v1312 = vsub.s32 0, %v1311
    %v1313 = vrot.slane %v1308, %v1312
    %vm1315 = vcmask 588800
    %v1317 = vsel %vm1315, %v1269, 0
    %v1320 = vsel %vm1218, %v1307, 0
    %1322 = vmatprep.subr.bf16.mxu0 0
    %1323 = vmatpush1.bf16.msra.mxu0 %v1295
    %1324 = vmatprep.subr.bf16.mxu0 0
    %1325 = vmatpush1.bf16.msra.mxu0 %v1296
    %1326 = vmatprep.subr.bf16.mxu0 0
    %1327 = vmatpush1.bf16.msra.mxu0 %v1297
    %1328 = vmatprep.subr.bf16.mxu0 0
    %1329 = vmatpush1.bf16.msra.mxu0 %v1298
    %1330 = vmatprep.subr.bf16.mxu0 0
    %1331 = vmatpush1.bf16.msra.mxu0 %v1299
    %1332 = vmatprep.subr.bf16.mxu0 0
    %1333 = vmatpush1.bf16.msra.mxu0 %v1300
    %1334 = vmatprep.subr.bf16.mxu0 0
    %1335 = vmatpush1.bf16.msra.mxu0 %v1301
    %1336 = vmatprep.subr.bf16.mxu0 0
    %1337 = vmatpush1.bf16.msra.mxu0 %v1302
    %1338 = vmatprep.subr.bf16.mxu0 0
    %1339 = vmatpush1.bf16.msra.mxu0 %v1303
    %1340 = vmatprep.subr.bf16.mxu0 0
    %1341 = vmatpush1.bf16.msra.mxu0 %v1304
    %1342 = vmatprep.subr.bf16.mxu0 0
    %1343 = vmatpush1.bf16.msra.mxu0 %v1305
    %1344 = vmatprep.subr.bf16.mxu0 0
    %1345 = vmatpush1.bf16.msra.mxu0 %v1306
    %1346 = vmatprep.subr.bf16.mxu0 0
    %1347 = vmatpush1.bf16.msra.mxu0 %v1320
    %1348 = vmatprep.subr.bf16.mxu0 0
    %1349 = vmatpush1.bf16.msra.mxu0 0
    %1350 = vmatprep.subr.bf16.mxu0 0
    %1351 = vmatpush1.bf16.msra.mxu0 0
    %1352 = vmatprep.subr.bf16.mxu0 0
    %1353 = vmatpush1.bf16.msra.mxu0 0
    %1354 = vmatprep.mubr.bf16.mxu0 %v1317
    %1355 = vmatmul.mubr.bf16.gmra.mrb[0].mxu0 %v1268
    %v1356 = vpop.f32.mrb[0].mxu0
    %v1357 = vadd.f32 %v1313, %v1356
    %v1358 = vpop.f32.mrb[0].mxu0
    %v1359 = vpop.f32.mrb[0].mxu0
    %v1360 = vadd.f32 %v1313, %v1359
    %v1361 = vpop.f32.mrb[0].mxu0
    %1362 = vdwg.mxu0
    %v1363 = vpack.c.bf16 %v1360, %v1357
    %v1364 = vld [vmem:[#allocation26] sm:$0xff]
    %v1365 = vld [vmem:[#allocation26 + $0x8] sm:$0xff]
    %v1366 = vld [vmem:[#allocation26 + $0x10] sm:$0xff]
    %v1367 = vld [vmem:[#allocation26 + $0x18] sm:$0xff]
    %v1368 = vld [vmem:[#allocation26 + $0x20] sm:$0xff]
    %v1369 = vld [vmem:[#allocation26 + $0x28] sm:$0xff]
    %v1370 = vld [vmem:[#allocation26 + $0x30] sm:$0xff]
    %v1371 = vld [vmem:[#allocation26 + $0x38] sm:$0xff]
    %v1372 = vpack.c.bf16 %v1366, %v1364
    %v1373 = vpack.c.bf16 %v1367, %v1365
    %v1374 = vpack.c.bf16 %v1370, %v1368
    %v1375 = vpack.c.bf16 %v1371, %v1369
    %v1376 = vld [vmem:[#allocation27] sm:$0x3]
    %v1378 = vlaneseq
    %v1379 = vshrl.u32 %v1378, 7
    %v1380 = vsub.s32 0, %v1379
    %v1381 = vrot.slane %v1376, %v1380
    %v1382 = vlaneseq
    %v1383 = vshrl.u32 %v1382, 7
    %v1384 = vsub.s32 1, %v1383
    %v1385 = vrot.slane %v1376, %v1384
    %v1389 = vsel %vm845, %v1363, 0
    %1391 = vmatprep.subr.bf16.mxu0 %v1373
    %1392 = vmatpush1.bf16.msra.mxu0 %v1372
    %1393 = vmatprep.subr.bf16.mxu0 %v1375
    %1394 = vmatpush1.bf16.msra.mxu0 %v1374
    %1395 = vmatprep.subr.bf16.mxu0 0
    %1396 = vmatpush1.bf16.msra.mxu0 0
    %1397 = vmatprep.subr.bf16.mxu0 0
    %1398 = vmatpush1.bf16.msra.mxu0 0
    %1399 = vmatprep.subr.bf16.mxu0 0
    %1400 = vmatpush1.bf16.msra.mxu0 0
    %1401 = vmatprep.subr.bf16.mxu0 0
    %1402 = vmatpush1.bf16.msra.mxu0 0
    %1403 = vmatprep.subr.bf16.mxu0 0
    %1404 = vmatpush1.bf16.msra.mxu0 0
    %1405 = vmatprep.subr.bf16.mxu0 0
    %1406 = vmatpush1.bf16.msra.mxu0 0
    %1407 = vmatprep.subr.bf16.mxu0 0
    %1408 = vmatpush1.bf16.msra.mxu0 0
    %1409 = vmatprep.subr.bf16.mxu0 0
    %1410 = vmatpush1.bf16.msra.mxu0 0
    %1411 = vmatprep.subr.bf16.mxu0 0
    %1412 = vmatpush1.bf16.msra.mxu0 0
    %1413 = vmatprep.subr.bf16.mxu0 0
    %1414 = vmatpush1.bf16.msra.mxu0 0
    %1415 = vmatprep.subr.bf16.mxu0 0
    %1416 = vmatpush1.bf16.msra.mxu0 0
    %1417 = vmatprep.subr.bf16.mxu0 0
    %1418 = vmatpush1.bf16.msra.mxu0 0
    %1419 = vmatprep.subr.bf16.mxu0 0
    %1420 = vmatpush1.bf16.msra.mxu0 0
    %1421 = vmatprep.subr.bf16.mxu0 0
    %1422 = vmatpush1.bf16.msra.mxu0 0
    %1423 = vmatprep.mubr.bf16.mxu0 0
    %1424 = vmatmul.mubr.bf16.gmra.mrb[0].mxu0 %v1389
    %v1425 = vpop.f32.mrb[0].mxu0
    %v1426 = vadd.f32 %v1381, %v1425
    %v1427 = vpop.f32.mrb[0].mxu0
    %v1428 = vadd.f32 %v1385, %v1427
    %v1429 = vpop.f32.mrb[0].mxu0
    %v1430 = vadd.f32 %v1381, %v1429
    %v1431 = vpop.f32.mrb[0].mxu0
    %v1432 = vadd.f32 %v1385, %v1431
    %1433 = vdwg.mxu0
    %v1434 = vpack.c.bf16 %v1430, %v1426
    %v1435 = vpack.c.bf16 %v1432, %v1428
    %v1436 = vld [vmem:[#allocation29] sm:$0xff]
    %v1437 = vld [vmem:[#allocation29 + $0x8] sm:$0xff]
    %v1438 = vld [vmem:[#allocation29 + $0x10] sm:$0xff]
    %v1439 = vld [vmem:[#allocation29 + $0x18] sm:$0xff]
    %v1440 = vld [vmem:[#allocation29 + $0x20] sm:$0xff]
    %v1441 = vld [vmem:[#allocation29 + $0x28] sm:$0xff]
    %v1442 = vld [vmem:[#allocation29 + $0x30] sm:$0xff]
    %v1443 = vld [vmem:[#allocation29 + $0x38] sm:$0xff]
    %v1444 = vld [vmem:[#allocation29 + $0x40] sm:$0xff]
    %v1445 = vld [vmem:[#allocation29 + $0x48] sm:$0xff]
    %v1446 = vld [vmem:[#allocation29 + $0x50] sm:$0xff]
    %v1447 = vld [vmem:[#allocation29 + $0x58] sm:$0xff]
    %v1448 = vld [vmem:[#allocation29 + $0x60] sm:$0xff]
    %v1449 = vld [vmem:[#allocation29 + $0x68] sm:$0xff]
    %v1450 = vld [vmem:[#allocation29 + $0x70] sm:$0xff]
    %v1451 = vld [vmem:[#allocation29 + $0x78] sm:$0xff]
    %v1452 = vld [vmem:[#allocation29 + $0x80] sm:$0xff]
    %v1453 = vld [vmem:[#allocation29 + $0x88] sm:$0xff]
    %v1454 = vld [vmem:[#allocation29 + $0x90] sm:$0xff]
    %v1455 = vld [vmem:[#allocation29 + $0x98] sm:$0xff]
    %v1456 = vld [vmem:[#allocation29 + $0xa0] sm:$0xff]
    %v1457 = vld [vmem:[#allocation29 + $0xa8] sm:$0xff]
    %v1458 = vld [vmem:[#allocation29 + $0xb0] sm:$0xff]
    %v1459 = vld [vmem:[#allocation29 + $0xb8] sm:$0xff]
    %v1460 = vld [vmem:[#allocation29 + $0xc0] sm:$0xff]
    %v1461 = vpack.c.bf16 %v1437, %v1436
    %v1462 = vpack.c.bf16 %v1439, %v1438
    %v1463 = vpack.c.bf16 %v1441, %v1440
    %v1464 = vpack.c.bf16 %v1443, %v1442
    %v1465 = vpack.c.bf16 %v1445, %v1444
    %v1466 = vpack.c.bf16 %v1447, %v1446
    %v1467 = vpack.c.bf16 %v1449, %v1448
    %v1468 = vpack.c.bf16 %v1451, %v1450
    %v1469 = vpack.c.bf16 %v1453, %v1452
    %v1470 = vpack.c.bf16 %v1455, %v1454
    %v1471 = vpack.c.bf16 %v1457, %v1456
    %v1472 = vpack.c.bf16 %v1459, %v1458
    %v1473 = vpack.c.bf16 %v1460, %v1460
    %v1474 = vld [vmem:[#allocation30] sm:$0x1]
    %v1476 = vlaneseq
    %v1477 = vshrl.u32 %v1476, 7
    %v1478 = vsub.s32 0, %v1477
    %v1479 = vrot.slane %v1474, %v1478
    %v1482 = vsel %vm1315, %v1435, 0
    %v1485 = vsel %vm1218, %v1473, 0
    %1487 = vmatprep.subr.bf16.mxu0 0
    %1488 = vmatpush1.bf16.msra.mxu0 %v1461
    %1489 = vmatprep.subr.bf16.mxu0 0
    %1490 = vmatpush1.bf16.msra.mxu0 %v1462
    %1491 = vmatprep.subr.bf16.mxu0 0
    %1492 = vmatpush1.bf16.msra.mxu0 %v1463
    %1493 = vmatprep.subr.bf16.mxu0 0
    %1494 = vmatpush1.bf16.msra.mxu0 %v1464
    %1495 = vmatprep.subr.bf16.mxu0 0
    %1496 = vmatpush1.bf16.msra.mxu0 %v1465
    %1497 = vmatprep.subr.bf16.mxu0 0
    %1498 = vmatpush1.bf16.msra.mxu0 %v1466
    %1499 = vmatprep.subr.bf16.mxu0 0
    %1500 = vmatpush1.bf16.msra.mxu0 %v1467
    %1501 = vmatprep.subr.bf16.mxu0 0
    %1502 = vmatpush1.bf16.msra.mxu0 %v1468
    %1503 = vmatprep.subr.bf16.mxu0 0
    %1504 = vmatpush1.bf16.msra.mxu0 %v1469
    %1505 = vmatprep.subr.bf16.mxu0 0
    %1506 = vmatpush1.bf16.msra.mxu0 %v1470
    %1507 = vmatprep.subr.bf16.mxu0 0
    %1508 = vmatpush1.bf16.msra.mxu0 %v1471
    %1509 = vmatprep.subr.bf16.mxu0 0
    %1510 = vmatpush1.bf16.msra.mxu0 %v1472
    %1511 = vmatprep.subr.bf16.mxu0 0
    %1512 = vmatpush1.bf16.msra.mxu0 %v1485
    %1513 = vmatprep.subr.bf16.mxu0 0
    %1514 = vmatpush1.bf16.msra.mxu0 0
    %1515 = vmatprep.subr.bf16.mxu0 0
    %1516 = vmatpush1.bf16.msra.mxu0 0
    %1517 = vmatprep.subr.bf16.mxu0 0
    %1518 = vmatpush1.bf16.msra.mxu0 0
    %1519 = vmatprep.mubr.bf16.mxu0 %v1482
    %1520 = vmatmul.mubr.bf16.gmra.mrb[0].mxu0 %v1434
    %v1521 = vpop.f32.mrb[0].mxu0
    %v1522 = vadd.f32 %v1479, %v1521
    %v1523 = vpop.f32.mrb[0].mxu0
    %v1524 = vpop.f32.mrb[0].mxu0
    %v1525 = vadd.f32 %v1479, %v1524
    %v1526 = vpop.f32.mrb[0].mxu0
    %1527 = vdwg.mxu0
    %vm1528 = vcmask 195584
    %1529 = vst.msk [vmem:[#allocation48] sm:$0xff] %vm1528, %v1522
    %1530 = vst.msk [vmem:[#allocation48 + $0x8] sm:$0xff] %vm1528, %v1525
    %1533 = vrot.lane.b32.xlu0 %v1522, 104
    %v1534 = vpop.permute.xlu0 %1533
    %1535 = vrot.lane.b32.xlu0 %v1525, 104
    %v1536 = vpop.permute.xlu0 %1535
    %1539 = vst.msk [vmem:[#allocation49] sm:$0xff] %vm845, %v1534
    %1540 = vst.msk [vmem:[#allocation49 + $0x8] sm:$0xff] %vm845, %v1536
    %v1541 = vld [vmem:[#allocation9] sm:$0xff]
    %1542 = vset.pattern.permute.xlu0 0
    %1543 = vperm.xlu0 %1542, %v1541
    %v1544 = vpop.permute.xlu0 %1543
    %vm1545 = vcmp.eq.s32.totalorder %v607, %v1544
    %1546 = vset.pattern.permute.xlu0 1
    %1547 = vperm.xlu0 %1546, %v1541
    %v1548 = vpop.permute.xlu0 %1547
    %vm1549 = vcmp.eq.s32.totalorder %v607, %v1548
    %v1550 = vsel %vm1545, 1, 0
    %v1551 = vsel %vm1549, 1, 0
    %v1552 = vcvt.s32.f32 %v1550
    %v1553 = vcvt.s32.f32 %v1551
    %v1554 = vpack.c.bf16 %v1553, %v1552
    %v1556 = vsel %vm642, %v1554, 0
    %1558 = vmatprep.subr.bf16.mxu0 0
    %1559 = vmatpush1.bf16.msra.mxu0 %v1363
    %1560 = vmatprep.subr.bf16.mxu0 0
    %1561 = vmatpush1.bf16.msra.mxu0 0
    %1562 = vmatprep.subr.bf16.mxu0 0
    %1563 = vmatpush1.bf16.msra.mxu0 0
    %1564 = vmatprep.subr.bf16.mxu0 0
    %1565 = vmatpush1.bf16.msra.mxu0 0
    %1566 = vmatprep.subr.bf16.mxu0 0
    %1567 = vmatpush1.bf16.msra.mxu0 0
    %1568 = vmatprep.subr.bf16.mxu0 0
    %1569 = vmatpush1.bf16.msra.mxu0 0
    %1570 = vmatprep.subr.bf16.mxu0 0
    %1571 = vmatpush1.bf16.msra.mxu0 0
    %1572 = vmatprep.subr.bf16.mxu0 0
    %1573 = vmatpush1.bf16.msra.mxu0 0
    %1574 = vmatprep.subr.bf16.mxu0 0
    %1575 = vmatpush1.bf16.msra.mxu0 0
    %1576 = vmatprep.subr.bf16.mxu0 0
    %1577 = vmatpush1.bf16.msra.mxu0 0
    %1578 = vmatprep.subr.bf16.mxu0 0
    %1579 = vmatpush1.bf16.msra.mxu0 0
    %1580 = vmatprep.subr.bf16.mxu0 0
    %1581 = vmatpush1.bf16.msra.mxu0 0
    %1582 = vmatprep.subr.bf16.mxu0 0
    %1583 = vmatpush1.bf16.msra.mxu0 0
    %1584 = vmatprep.subr.bf16.mxu0 0
    %1585 = vmatpush1.bf16.msra.mxu0 0
    %1586 = vmatprep.subr.bf16.mxu0 0
    %1587 = vmatpush1.bf16.msra.mxu0 0
    %1588 = vmatprep.subr.bf16.mxu0 0
    %1589 = vmatpush1.bf16.msra.mxu0 0
    %1590 = vmatprep.mubr.bf16.mxu0 0
    %1591 = vmatmul.mubr.bf16.gmra.mrb[0].mxu0 %v1556
    %v1592 = vpop.f32.mrb[0].mxu0
    %v1593 = vadd.f32 0.0, %v1592
    %v1594 = vpop.f32.mrb[0].mxu0
    %v1595 = vpop.f32.mrb[0].mxu0
    %v1596 = vadd.f32 0.0, %v1595
    %v1597 = vpop.f32.mrb[0].mxu0
    %1598 = vdwg.mxu0
    %1600 = vrot.lane.b32.xlu0 %v1596, 32
    %v1601 = vpop.permute.xlu0 %1600
    %v1603 = vsel %vm845, %v1593, %v1601
    %v1604 = vpack.c.bf16 %v1603, %v1603
    %v1605 = vld [vmem:[#allocation32] sm:$0xff]
    %v1606 = vld [vmem:[#allocation32 + $0x8] sm:$0xff]
    %v1607 = vld [vmem:[#allocation32 + $0x10] sm:$0xff]
    %v1608 = vld [vmem:[#allocation32 + $0x18] sm:$0xff]
    %v1609 = vld [vmem:[#allocation32 + $0x20] sm:$0xff]
    %v1610 = vld [vmem:[#allocation32 + $0x28] sm:$0xff]
    %v1611 = vld [vmem:[#allocation32 + $0x30] sm:$0xff]
    %v1612 = vld [vmem:[#allocation32 + $0x38] sm:$0xff]
    %v1613 = vld [vmem:[#allocation32 + $0x40] sm:$0xff]
    %v1614 = vld [vmem:[#allocation32 + $0x48] sm:$0xff]
    %v1615 = vld [vmem:[#allocation32 + $0x50] sm:$0xff]
    %v1616 = vld [vmem:[#allocation32 + $0x58] sm:$0xff]
    %v1617 = vld [vmem:[#allocation32 + $0x60] sm:$0xff]
    %v1618 = vld [vmem:[#allocation32 + $0x68] sm:$0xff]
    %v1619 = vld [vmem:[#allocation32 + $0x70] sm:$0xff]
    %v1620 = vld [vmem:[#allocation32 + $0x78] sm:$0xff]
    %v1621 = vld [vmem:[#allocation32 + $0x80] sm:$0xff]
    %v1622 = vld [vmem:[#allocation32 + $0x88] sm:$0xff]
    %v1623 = vld [vmem:[#allocation32 + $0x90] sm:$0xff]
    %v1624 = vld [vmem:[#allocation32 + $0x98] sm:$0xff]
    %v1625 = vld [vmem:[#allocation32 + $0xa0] sm:$0xff]
    %v1626 = vld [vmem:[#allocation32 + $0xa8] sm:$0xff]
    %v1627 = vld [vmem:[#allocation32 + $0xb0] sm:$0xff]
    %v1628 = vld [vmem:[#allocation32 + $0xb8] sm:$0xff]
    %v1629 = vld [vmem:[#allocation32 + $0xc0] sm:$0xff]
    %v1630 = vld [vmem:[#allocation32 + $0xc8] sm:$0xff]
    %v1631 = vld [vmem:[#allocation32 + $0xd0] sm:$0xff]
    %v1632 = vld [vmem:[#allocation32 + $0xd8] sm:$0xff]
    %v1633 = vld [vmem:[#allocation32 + $0xe0] sm:$0xff]
    %v1634 = vld [vmem:[#allocation32 + $0xe8] sm:$0xff]
    %v1635 = vld [vmem:[#allocation32 + $0xf0] sm:$0xff]
    %v1636 = vld [vmem:[#allocation32 + $0xf8] sm:$0xff]
    %v1637 = vpack.c.bf16 %v1609, %v1605
    %v1638 = vpack.c.bf16 %v1610, %v1606
    %v1639 = vpack.c.bf16 %v1611, %v1607
    %v1640 = vpack.c.bf16 %v1612, %v1608
    %v1641 = vpack.c.bf16 %v1617, %v1613
    %v1642 = vpack.c.bf16 %v1618, %v1614
    %v1643 = vpack.c.bf16 %v1619, %v1615
    %v1644 = vpack.c.bf16 %v1620, %v1616
    %v1645 = vpack.c.bf16 %v1625, %v1621
    %v1646 = vpack.c.bf16 %v1626, %v1622
    %v1647 = vpack.c.bf16 %v1627, %v1623
    %v1648 = vpack.c.bf16 %v1628, %v1624
    %v1649 = vpack.c.bf16 %v1633, %v1629
    %v1650 = vpack.c.bf16 %v1634, %v1630
    %v1651 = vpack.c.bf16 %v1635, %v1631
    %v1652 = vpack.c.bf16 %v1636, %v1632
    %v1653 = vld [vmem:[#allocation33] sm:$0xf]
    %v1655 = vlaneseq
    %v1656 = vshrl.u32 %v1655, 7
    %v1657 = vsub.s32 0, %v1656
    %v1658 = vrot.slane %v1653, %v1657
    %v1659 = vlaneseq
    %v1660 = vshrl.u32 %v1659, 7
    %v1661 = vsub.s32 1, %v1660
    %v1662 = vrot.slane %v1653, %v1661
    %v1663 = vlaneseq
    %v1664 = vshrl.u32 %v1663, 7
    %v1665 = vsub.s32 2, %v1664
    %v1666 = vrot.slane %v1653, %v1665
    %v1667 = vlaneseq
    %v1668 = vshrl.u32 %v1667, 7
    %v1669 = vsub.s32 3, %v1668
    %v1670 = vrot.slane %v1653, %v1669
    %v1676 = vsel %vm496, %v1604, 0
    %1678 = vmatprep.subr.bf16.mxu0 %v1638
    %1679 = vmatpush1.bf16.msra.mxu0 %v1637
    %1680 = vmatprep.subr.bf16.mxu0 %v1642
    %1681 = vmatpush1.bf16.msra.mxu0 %v1641
    %1682 = vmatprep.subr.bf16.mxu0 %v1646
    %1683 = vmatpush1.bf16.msra.mxu0 %v1645
    %1684 = vmatprep.subr.bf16.mxu0 %v1650
    %1685 = vmatpush1.bf16.msra.mxu0 %v1649
    %1686 = vmatprep.subr.bf16.mxu0 0
    %1687 = vmatpush1.bf16.msra.mxu0 0
    %1688 = vmatprep.subr.bf16.mxu0 0
    %1689 = vmatpush1.bf16.msra.mxu0 0
    %1690 = vmatprep.subr.bf16.mxu0 0
    %1691 = vmatpush1.bf16.msra.mxu0 0
    %1692 = vmatprep.subr.bf16.mxu0 0
    %1693 = vmatpush1.bf16.msra.mxu0 0
    %1694 = vmatprep.subr.bf16.mxu0 0
    %1695 = vmatpush1.bf16.msra.mxu0 0
    %1696 = vmatprep.subr.bf16.mxu0 0
    %1697 = vmatpush1.bf16.msra.mxu0 0
    %1698 = vmatprep.subr.bf16.mxu0 0
    %1699 = vmatpush1.bf16.msra.mxu0 0
    %1700 = vmatprep.subr.bf16.mxu0 0
    %1701 = vmatpush1.bf16.msra.mxu0 0
    %1702 = vmatprep.subr.bf16.mxu0 0
    %1703 = vmatpush1.bf16.msra.mxu0 0
    %1704 = vmatprep.subr.bf16.mxu0 0
    %1705 = vmatpush1.bf16.msra.mxu0 0
    %1706 = vmatprep.subr.bf16.mxu0 0
    %1707 = vmatpush1.bf16.msra.mxu0 0
    %1708 = vmatprep.subr.bf16.mxu0 0
    %1709 = vmatpush1.bf16.msra.mxu0 0
    %1710 = vmatprep.mubr.bf16.mxu0 0
    %1711 = vmatmul.mubr.bf16.gmra.mrb[0].mxu0 %v1676
    %v1712 = vpop.f32.mrb[0].mxu0
    %v1713 = vadd.f32 %v1658, %v1712
    %v1714 = vpop.f32.mrb[0].mxu0
    %v1715 = vadd.f32 %v1662, %v1714
    %v1716 = vpop.f32.mrb[0].mxu0
    %v1717 = vpop.f32.mrb[0].mxu0
    %1718 = vdwg.mxu0
    %1719 = vmatprep.subr.bf16.mxu0 %v1640
    %1720 = vmatpush1.bf16.msra.mxu0 %v1639
    %1721 = vmatprep.subr.bf16.mxu0 %v1644
    %1722 = vmatpush1.bf16.msra.mxu0 %v1643
    %1723 = vmatprep.subr.bf16.mxu0 %v1648
    %1724 = vmatpush1.bf16.msra.mxu0 %v1647
    %1725 = vmatprep.subr.bf16.mxu0 %v1652
    %1726 = vmatpush1.bf16.msra.mxu0 %v1651
    %1727 = vmatprep.subr.bf16.mxu0 0
    %1728 = vmatpush1.bf16.msra.mxu0 0
    %1729 = vmatprep.subr.bf16.mxu0 0
    %1730 = vmatpush1.bf16.msra.mxu0 0
    %1731 = vmatprep.subr.bf16.mxu0 0
    %1732 = vmatpush1.bf16.msra.mxu0 0
    %1733 = vmatprep.subr.bf16.mxu0 0
    %1734 = vmatpush1.bf16.msra.mxu0 0
    %1735 = vmatprep.subr.bf16.mxu0 0
    %1736 = vmatpush1.bf16.msra.mxu0 0
    %1737 = vmatprep.subr.bf16.mxu0 0
    %1738 = vmatpush1.bf16.msra.mxu0 0
    %1739 = vmatprep.subr.bf16.mxu0 0
    %1740 = vmatpush1.bf16.msra.mxu0 0
    %1741 = vmatprep.subr.bf16.mxu0 0
    %1742 = vmatpush1.bf16.msra.mxu0 0
    %1743 = vmatprep.subr.bf16.mxu0 0
    %1744 = vmatpush1.bf16.msra.mxu0 0
    %1745 = vmatprep.subr.bf16.mxu0 0
    %1746 = vmatpush1.bf16.msra.mxu0 0
    %1747 = vmatprep.subr.bf16.mxu0 0
    %1748 = vmatpush1.bf16.msra.mxu0 0
    %1749 = vmatprep.subr.bf16.mxu0 0
    %1750 = vmatpush1.bf16.msra.mxu0 0
    %1751 = vmatprep.mubr.bf16.mxu0 0
    %1752 = vmatmul.mubr.bf16.gmra.mrb[0].mxu0 %v1676
    %v1753 = vpop.f32.mrb[0].mxu0
    %v1754 = vadd.f32 %v1666, %v1753
    %v1755 = vpop.f32.mrb[0].mxu0
    %v1756 = vadd.f32 %v1670, %v1755
    %v1757 = vpop.f32.mrb[0].mxu0
    %v1758 = vpop.f32.mrb[0].mxu0
    %1759 = vdwg.mxu0
    %v1760 = vmax.f32 %v1713, 0.0
    %v1761 = vmax.f32 %v1715, 0.0
    %v1762 = vmax.f32 %v1754, 0.0
    %v1763 = vmax.f32 %v1756, 0.0
    %v1764 = vld [vmem:[#allocation35] sm:$0xf]
    %v1766 = vlaneseq
    %v1767 = vshrl.u32 %v1766, 7
    %v1768 = vsub.s32 0, %v1767
    %v1769 = vrot.slane %v1764, %v1768
    %v1770 = vlaneseq
    %v1771 = vshrl.u32 %v1770, 7
    %v1772 = vsub.s32 1, %v1771
    %v1773 = vrot.slane %v1764, %v1772
    %v1774 = vlaneseq
    %v1775 = vshrl.u32 %v1774, 7
    %v1776 = vsub.s32 2, %v1775
    %v1777 = vrot.slane %v1764, %v1776
    %v1778 = vlaneseq
    %v1779 = vshrl.u32 %v1778, 7
    %v1780 = vsub.s32 3, %v1779
    %v1781 = vrot.slane %v1764, %v1780
    %v1786 = vmul.f32 %v1760, %v1769
    %v1787 = vmul.f32 %v1761, %v1773
    %v1788 = vmul.f32 %v1762, %v1777
    %v1789 = vmul.f32 %v1763, %v1781
    %v1790 = vld [vmem:[#allocation36] sm:$0xf]
    %v1792 = vlaneseq
    %v1793 = vshrl.u32 %v1792, 7
    %v1794 = vsub.s32 0, %v1793
    %v1795 = vrot.slane %v1790, %v1794
    %v1796 = vlaneseq
    %v1797 = vshrl.u32 %v1796, 7
    %v1798 = vsub.s32 1, %v1797
    %v1799 = vrot.slane %v1790, %v1798
    %v1800 = vlaneseq
    %v1801 = vshrl.u32 %v1800, 7
    %v1802 = vsub.s32 2, %v1801
    %v1803 = vrot.slane %v1790, %v1802
    %v1804 = vlaneseq
    %v1805 = vshrl.u32 %v1804, 7
    %v1806 = vsub.s32 3, %v1805
    %v1807 = vrot.slane %v1790, %v1806
    %v1812 = vadd.f32 %v1786, %v1795
    %v1813 = vadd.f32 %v1787, %v1799
    %v1814 = vadd.f32 %v1788, %v1803
    %v1815 = vadd.f32 %v1789, %v1807
    %v1816 = vpack.c.bf16 %v1812, %v1812
    %v1817 = vpack.c.bf16 %v1813, %v1813
    %v1818 = vpack.c.bf16 %v1814, %v1814
    %v1819 = vpack.c.bf16 %v1815, %v1815
    %v1820 = vld [vmem:[#allocation38] sm:$0xff]
    %v1821 = vld [vmem:[#allocation38 + $0x8] sm:$0xff]
    %v1822 = vld [vmem:[#allocation38 + $0x10] sm:$0xff]
    %v1823 = vld [vmem:[#allocation38 + $0x18] sm:$0xff]
    %v1824 = vld [vmem:[#allocation38 + $0x20] sm:$0xff]
    %v1825 = vld [vmem:[#allocation38 + $0x28] sm:$0xff]
    %v1826 = vld [vmem:[#allocation38 + $0x30] sm:$0xff]
    %v1827 = vld [vmem:[#allocation38 + $0x38] sm:$0xff]
    %v1828 = vld [vmem:[#allocation38 + $0x40] sm:$0xff]
    %v1829 = vld [vmem:[#allocation38 + $0x48] sm:$0xff]
    %v1830 = vld [vmem:[#allocation38 + $0x50] sm:$0xff]
    %v1831 = vld [vmem:[#allocation38 + $0x58] sm:$0xff]
    %v1832 = vld [vmem:[#allocation38 + $0x60] sm:$0xff]
    %v1833 = vld [vmem:[#allocation38 + $0x68] sm:$0xff]
    %v1834 = vld [vmem:[#allocation38 + $0x70] sm:$0xff]
    %v1835 = vld [vmem:[#allocation38 + $0x78] sm:$0xff]
    %v1836 = vld [vmem:[#allocation38 + $0x80] sm:$0xff]
    %v1837 = vld [vmem:[#allocation38 + $0x88] sm:$0xff]
    %v1838 = vld [vmem:[#allocation38 + $0x90] sm:$0xff]
    %v1839 = vld [vmem:[#allocation38 + $0x98] sm:$0xff]
    %v1840 = vld [vmem:[#allocation38 + $0xa0] sm:$0xff]
    %v1841 = vld [vmem:[#allocation38 + $0xa8] sm:$0xff]
    %v1842 = vld [vmem:[#allocation38 + $0xb0] sm:$0xff]
    %v1843 = vld [vmem:[#allocation38 + $0xb8] sm:$0xff]
    %v1844 = vld [vmem:[#allocation38 + $0xc0] sm:$0xff]
    %v1845 = vld [vmem:[#allocation38 + $0xc8] sm:$0xff]
    %v1846 = vld [vmem:[#allocation38 + $0xd0] sm:$0xff]
    %v1847 = vld [vmem:[#allocation38 + $0xd8] sm:$0xff]
    %v1848 = vld [vmem:[#allocation38 + $0xe0] sm:$0xff]
    %v1849 = vld [vmem:[#allocation38 + $0xe8] sm:$0xff]
    %v1850 = vld [vmem:[#allocation38 + $0xf0] sm:$0xff]
    %v1851 = vld [vmem:[#allocation38 + $0xf8] sm:$0xff]
    %v1852 = vld [vmem:[#allocation38 + $0x100] sm:$0xff]
    %v1853 = vld [vmem:[#allocation38 + $0x108] sm:$0xff]
    %v1854 = vld [vmem:[#allocation38 + $0x110] sm:$0xff]
    %v1855 = vld [vmem:[#allocation38 + $0x118] sm:$0xff]
    %v1856 = vld [vmem:[#allocation38 + $0x120] sm:$0xff]
    %v1857 = vld [vmem:[#allocation38 + $0x128] sm:$0xff]
    %v1858 = vld [vmem:[#allocation38 + $0x130] sm:$0xff]
    %v1859 = vld [vmem:[#allocation38 + $0x138] sm:$0xff]
    %v1860 = vld [vmem:[#allocation38 + $0x140] sm:$0xff]
    %v1861 = vld [vmem:[#allocation38 + $0x148] sm:$0xff]
    %v1862 = vld [vmem:[#allocation38 + $0x150] sm:$0xff]
    %v1863 = vld [vmem:[#allocation38 + $0x158] sm:$0xff]
    %v1864 = vld [vmem:[#allocation38 + $0x160] sm:$0xff]
    %v1865 = vld [vmem:[#allocation38 + $0x168] sm:$0xff]
    %v1866 = vld [vmem:[#allocation38 + $0x170] sm:$0xff]
    %v1867 = vld [vmem:[#allocation38 + $0x178] sm:$0xff]
    %v1868 = vld [vmem:[#allocation38 + $0x180] sm:$0xff]
    %v1869 = vld [vmem:[#allocation38 + $0x188] sm:$0xff]
    %v1870 = vld [vmem:[#allocation38 + $0x190] sm:$0xff]
    %v1871 = vld [vmem:[#allocation38 + $0x198] sm:$0xff]
    %v1872 = vld [vmem:[#allocation38 + $0x1a0] sm:$0xff]
    %v1873 = vld [vmem:[#allocation38 + $0x1a8] sm:$0xff]
    %v1874 = vld [vmem:[#allocation38 + $0x1b0] sm:$0xff]
    %v1875 = vld [vmem:[#allocation38 + $0x1b8] sm:$0xff]
    %v1876 = vld [vmem:[#allocation38 + $0x1c0] sm:$0xff]
    %v1877 = vld [vmem:[#allocation38 + $0x1c8] sm:$0xff]
    %v1878 = vld [vmem:[#allocation38 + $0x1d0] sm:$0xff]
    %v1879 = vld [vmem:[#allocation38 + $0x1d8] sm:$0xff]
    %v1880 = vld [vmem:[#allocation38 + $0x1e0] sm:$0xff]
    %v1881 = vld [vmem:[#allocation38 + $0x1e8] sm:$0xff]
    %v1882 = vld [vmem:[#allocation38 + $0x1f0] sm:$0xff]
    %v1883 = vld [vmem:[#allocation38 + $0x1f8] sm:$0xff]
    %v1884 = vld [vmem:[#allocation38 + $0x200] sm:$0xff]
    %v1885 = vld [vmem:[#allocation38 + $0x208] sm:$0xff]
    %v1886 = vld [vmem:[#allocation38 + $0x210] sm:$0xff]
    %v1887 = vld [vmem:[#allocation38 + $0x218] sm:$0xff]
    %v1888 = vld [vmem:[#allocation38 + $0x220] sm:$0xff]
    %v1889 = vld [vmem:[#allocation38 + $0x228] sm:$0xff]
    %v1890 = vld [vmem:[#allocation38 + $0x230] sm:$0xff]
    %v1891 = vld [vmem:[#allocation38 + $0x238] sm:$0xff]
    %v1892 = vld [vmem:[#allocation38 + $0x240] sm:$0xff]
    %v1893 = vld [vmem:[#allocation38 + $0x248] sm:$0xff]
    %v1894 = vld [vmem:[#allocation38 + $0x250] sm:$0xff]
    %v1895 = vld [vmem:[#allocation38 + $0x258] sm:$0xff]
    %v1896 = vld [vmem:[#allocation38 + $0x260] sm:$0xff]
    %v1897 = vld [vmem:[#allocation38 + $0x268] sm:$0xff]
    %v1898 = vld [vmem:[#allocation38 + $0x270] sm:$0xff]
    %v1899 = vld [vmem:[#allocation38 + $0x278] sm:$0xff]
    %v1900 = vld [vmem:[#allocation38 + $0x280] sm:$0xff]
    %v1901 = vld [vmem:[#allocation38 + $0x288] sm:$0xff]
    %v1902 = vld [vmem:[#allocation38 + $0x290] sm:$0xff]
    %v1903 = vld [vmem:[#allocation38 + $0x298] sm:$0xff]
    %v1904 = vld [vmem:[#allocation38 + $0x2a0] sm:$0xff]
    %v1905 = vld [vmem:[#allocation38 + $0x2a8] sm:$0xff]
    %v1906 = vld [vmem:[#allocation38 + $0x2b0] sm:$0xff]
    %v1907 = vld [vmem:[#allocation38 + $0x2b8] sm:$0xff]
    %v1908 = vld [vmem:[#allocation38 + $0x2c0] sm:$0xff]
    %v1909 = vld [vmem:[#allocation38 + $0x2c8] sm:$0xff]
    %v1910 = vld [vmem:[#allocation38 + $0x2d0] sm:$0xff]
    %v1911 = vld [vmem:[#allocation38 + $0x2d8] sm:$0xff]
    %v1912 = vld [vmem:[#allocation38 + $0x2e0] sm:$0xff]
    %v1913 = vld [vmem:[#allocation38 + $0x2e8] sm:$0xff]
    %v1914 = vld [vmem:[#allocation38 + $0x2f0] sm:$0xff]
    %v1915 = vld [vmem:[#allocation38 + $0x2f8] sm:$0xff]
    %v1916 = vld [vmem:[#allocation38 + $0x300] sm:$0xff]
    %v1917 = vld [vmem:[#allocation38 + $0x308] sm:$0xff]
    %v1918 = vld [vmem:[#allocation38 + $0x310] sm:$0xff]
    %v1919 = vld [vmem:[#allocation38 + $0x318] sm:$0xff]
    %v1920 = vld [vmem:[#allocation38 + $0x320] sm:$0xff]
    %v1921 = vld [vmem:[#allocation38 + $0x328] sm:$0xff]
    %v1922 = vld [vmem:[#allocation38 + $0x330] sm:$0xff]
    %v1923 = vld [vmem:[#allocation38 + $0x338] sm:$0xff]
    %v1924 = vld [vmem:[#allocation38 + $0x340] sm:$0xff]
    %v1925 = vld [vmem:[#allocation38 + $0x348] sm:$0xff]
    %v1926 = vld [vmem:[#allocation38 + $0x350] sm:$0xff]
    %v1927 = vld [vmem:[#allocation38 + $0x358] sm:$0xff]
    %v1928 = vld [vmem:[#allocation38 + $0x360] sm:$0xff]
    %v1929 = vld [vmem:[#allocation38 + $0x368] sm:$0xff]
    %v1930 = vld [vmem:[#allocation38 + $0x370] sm:$0xff]
    %v1931 = vld [vmem:[#allocation38 + $0x378] sm:$0xff]
    %v1932 = vld [vmem:[#allocation38 + $0x380] sm:$0xff]
    %v1933 = vld [vmem:[#allocation38 + $0x388] sm:$0xff]
    %v1934 = vld [vmem:[#allocation38 + $0x390] sm:$0xff]
    %v1935 = vld [vmem:[#allocation38 + $0x398] sm:$0xff]
    %v1936 = vld [vmem:[#allocation38 + $0x3a0] sm:$0xff]
    %v1937 = vld [vmem:[#allocation38 + $0x3a8] sm:$0xff]
    %v1938 = vld [vmem:[#allocation38 + $0x3b0] sm:$0xff]
    %v1939 = vld [vmem:[#allocation38 + $0x3b8] sm:$0xff]
    %v1940 = vld [vmem:[#allocation38 + $0x3c0] sm:$0xff]
    %v1941 = vld [vmem:[#allocation38 + $0x3c8] sm:$0xff]
    %v1942 = vld [vmem:[#allocation38 + $0x3d0] sm:$0xff]
    %v1943 = vld [vmem:[#allocation38 + $0x3d8] sm:$0xff]
    %v1944 = vld [vmem:[#allocation38 + $0x3e0] sm:$0xff]
    %v1945 = vld [vmem:[#allocation38 + $0x3e8] sm:$0xff]
    %v1946 = vld [vmem:[#allocation38 + $0x3f0] sm:$0xff]
    %v1947 = vld [vmem:[#allocation38 + $0x3f8] sm:$0xff]
    %v1948 = vpack.c.bf16 %v1822, %v1820
    %v1949 = vpack.c.bf16 %v1823, %v1821
    %v1950 = vpack.c.bf16 %v1826, %v1824
    %v1951 = vpack.c.bf16 %v1827, %v1825
    %v1952 = vpack.c.bf16 %v1830, %v1828
    %v1953 = vpack.c.bf16 %v1831, %v1829
    %v1954 = vpack.c.bf16 %v1834, %v1832
    %v1955 = vpack.c.bf16 %v1835, %v1833
    %v1956 = vpack.c.bf16 %v1838, %v1836
    %v1957 = vpack.c.bf16 %v1839, %v1837
    %v1958 = vpack.c.bf16 %v1842, %v1840
    %v1959 = vpack.c.bf16 %v1843, %v1841
    %v1960 = vpack.c.bf16 %v1846, %v1844
    %v1961 = vpack.c.bf16 %v1847, %v1845
    %v1962 = vpack.c.bf16 %v1850, %v1848
    %v1963 = vpack.c.bf16 %v1851, %v1849
    %v1964 = vpack.c.bf16 %v1854, %v1852
    %v1965 = vpack.c.bf16 %v1855, %v1853
    %v1966 = vpack.c.bf16 %v1858, %v1856
    %v1967 = vpack.c.bf16 %v1859, %v1857
    %v1968 = vpack.c.bf16 %v1862, %v1860
    %v1969 = vpack.c.bf16 %v1863, %v1861
    %v1970 = vpack.c.bf16 %v1866, %v1864
    %v1971 = vpack.c.bf16 %v1867, %v1865
    %v1972 = vpack.c.bf16 %v1870, %v1868
    %v1973 = vpack.c.bf16 %v1871, %v1869
    %v1974 = vpack.c.bf16 %v1874, %v1872
    %v1975 = vpack.c.bf16 %v1875, %v1873
    %v1976 = vpack.c.bf16 %v1878, %v1876
    %v1977 = vpack.c.bf16 %v1879, %v1877
    %v1978 = vpack.c.bf16 %v1882, %v1880
    %v1979 = vpack.c.bf16 %v1883, %v1881
    %v1980 = vpack.c.bf16 %v1886, %v1884
    %v1981 = vpack.c.bf16 %v1887, %v1885
    %v1982 = vpack.c.bf16 %v1890, %v1888
    %v1983 = vpack.c.bf16 %v1891, %v1889
    %v1984 = vpack.c.bf16 %v1894, %v1892
    %v1985 = vpack.c.bf16 %v1895, %v1893
    %v1986 = vpack.c.bf16 %v1898, %v1896
    %v1987 = vpack.c.bf16 %v1899, %v1897
    %v1988 = vpack.c.bf16 %v1902, %v1900
    %v1989 = vpack.c.bf16 %v1903, %v1901
    %v1990 = vpack.c.bf16 %v1906, %v1904
    %v1991 = vpack.c.bf16 %v1907, %v1905
    %v1992 = vpack.c.bf16 %v1910, %v1908
    %v1993 = vpack.c.bf16 %v1911, %v1909
    %v1994 = vpack.c.bf16 %v1914, %v1912
    %v1995 = vpack.c.bf16 %v1915, %v1913
    %v1996 = vpack.c.bf16 %v1918, %v1916
    %v1997 = vpack.c.bf16 %v1919, %v1917
    %v1998 = vpack.c.bf16 %v1922, %v1920
    %v1999 = vpack.c.bf16 %v1923, %v1921
    %v2000 = vpack.c.bf16 %v1926, %v1924
    %v2001 = vpack.c.bf16 %v1927, %v1925
    %v2002 = vpack.c.bf16 %v1930, %v1928
    %v2003 = vpack.c.bf16 %v1931, %v1929
    %v2004 = vpack.c.bf16 %v1934, %v1932
    %v2005 = vpack.c.bf16 %v1935, %v1933
    %v2006 = vpack.c.bf16 %v1938, %v1936
    %v2007 = vpack.c.bf16 %v1939, %v1937
    %v2008 = vpack.c.bf16 %v1942, %v1940
    %v2009 = vpack.c.bf16 %v1943, %v1941
    %v2010 = vpack.c.bf16 %v1946, %v1944
    %v2011 = vpack.c.bf16 %v1947, %v1945
    %v2012 = vld [vmem:[#allocation39] sm:$0x3]
    %v2014 = vlaneseq
    %v2015 = vshrl.u32 %v2014, 7
    %v2016 = vsub.s32 0, %v2015
    %v2017 = vrot.slane %v2012, %v2016
    %v2018 = vlaneseq
    %v2019 = vshrl.u32 %v2018, 7
    %v2020 = vsub.s32 1, %v2019
    %v2021 = vrot.slane %v2012, %v2020
    %2024 = vmatprep.subr.bf16.mxu0 %v1949
    %2025 = vmatpush1.bf16.msra.mxu0 %v1948
    %2026 = vmatprep.subr.bf16.mxu0 %v1951
    %2027 = vmatpush1.bf16.msra.mxu0 %v1950
    %2028 = vmatprep.subr.bf16.mxu0 %v1953
    %2029 = vmatpush1.bf16.msra.mxu0 %v1952
    %2030 = vmatprep.subr.bf16.mxu0 %v1955
    %2031 = vmatpush1.bf16.msra.mxu0 %v1954
    %2032 = vmatprep.subr.bf16.mxu0 %v1957
    %2033 = vmatpush1.bf16.msra.mxu0 %v1956
    %2034 = vmatprep.subr.bf16.mxu0 %v1959
    %2035 = vmatpush1.bf16.msra.mxu0 %v1958
    %2036 = vmatprep.subr.bf16.mxu0 %v1961
    %2037 = vmatpush1.bf16.msra.mxu0 %v1960
    %2038 = vmatprep.subr.bf16.mxu0 %v1963
    %2039 = vmatpush1.bf16.msra.mxu0 %v1962
    %2040 = vmatprep.subr.bf16.mxu0 %v1965
    %2041 = vmatpush1.bf16.msra.mxu0 %v1964
    %2042 = vmatprep.subr.bf16.mxu0 %v1967
    %2043 = vmatpush1.bf16.msra.mxu0 %v1966
    %2044 = vmatprep.subr.bf16.mxu0 %v1969
    %2045 = vmatpush1.bf16.msra.mxu0 %v1968
    %2046 = vmatprep.subr.bf16.mxu0 %v1971
    %2047 = vmatpush1.bf16.msra.mxu0 %v1970
    %2048 = vmatprep.subr.bf16.mxu0 %v1973
    %2049 = vmatpush1.bf16.msra.mxu0 %v1972
    %2050 = vmatprep.subr.bf16.mxu0 %v1975
    %2051 = vmatpush1.bf16.msra.mxu0 %v1974
    %2052 = vmatprep.subr.bf16.mxu0 %v1977
    %2053 = vmatpush1.bf16.msra.mxu0 %v1976
    %2054 = vmatprep.subr.bf16.mxu0 %v1979
    %2055 = vmatpush1.bf16.msra.mxu0 %v1978
    %2056 = vmatprep.mubr.bf16.mxu0 %v1817
    %2057 = vmatmul.mubr.bf16.gmra.mrb[0].mxu0 %v1816
    %v2058 = vpop.f32.mrb[0].mxu0
    %v2059 = vadd.f32 %v2017, %v2058
    %v2060 = vpop.f32.mrb[0].mxu0
    %v2061 = vadd.f32 %v2021, %v2060
    %v2062 = vpop.f32.mrb[0].mxu0
    %v2063 = vpop.f32.mrb[0].mxu0
    %2064 = vdwg.mxu0
    %2065 = vmatprep.subr.bf16.mxu0 %v1981
    %2066 = vmatpush1.bf16.msra.mxu0 %v1980
    %2067 = vmatprep.subr.bf16.mxu0 %v1983
    %2068 = vmatpush1.bf16.msra.mxu0 %v1982
    %2069 = vmatprep.subr.bf16.mxu0 %v1985
    %2070 = vmatpush1.bf16.msra.mxu0 %v1984
    %2071 = vmatprep.subr.bf16.mxu0 %v1987
    %2072 = vmatpush1.bf16.msra.mxu0 %v1986
    %2073 = vmatprep.subr.bf16.mxu0 %v1989
    %2074 = vmatpush1.bf16.msra.mxu0 %v1988
    %2075 = vmatprep.subr.bf16.mxu0 %v1991
    %2076 = vmatpush1.bf16.msra.mxu0 %v1990
    %2077 = vmatprep.subr.bf16.mxu0 %v1993
    %2078 = vmatpush1.bf16.msra.mxu0 %v1992
    %2079 = vmatprep.subr.bf16.mxu0 %v1995
    %2080 = vmatpush1.bf16.msra.mxu0 %v1994
    %2081 = vmatprep.subr.bf16.mxu0 %v1997
    %2082 = vmatpush1.bf16.msra.mxu0 %v1996
    %2083 = vmatprep.subr.bf16.mxu0 %v1999
    %2084 = vmatpush1.bf16.msra.mxu0 %v1998
    %2085 = vmatprep.subr.bf16.mxu0 %v2001
    %2086 = vmatpush1.bf16.msra.mxu0 %v2000
    %2087 = vmatprep.subr.bf16.mxu0 %v2003
    %2088 = vmatpush1.bf16.msra.mxu0 %v2002
    %2089 = vmatprep.subr.bf16.mxu0 %v2005
    %2090 = vmatpush1.bf16.msra.mxu0 %v2004
    %2091 = vmatprep.subr.bf16.mxu0 %v2007
    %2092 = vmatpush1.bf16.msra.mxu0 %v2006
    %2093 = vmatprep.subr.bf16.mxu0 %v2009
    %2094 = vmatpush1.bf16.msra.mxu0 %v2008
    %2095 = vmatprep.subr.bf16.mxu0 %v2011
    %2096 = vmatpush1.bf16.msra.mxu0 %v2010
    %2097 = vmatprep.mubr.bf16.mxu0 %v1819
    %2098 = vmatmul.mubr.bf16.gmra.mrb[0].mxu0 %v1818
    %v2099 = vpop.f32.mrb[0].mxu0
    %v2100 = vadd.f32 %v2059, %v2099
    %v2101 = vpop.f32.mrb[0].mxu0
    %v2102 = vadd.f32 %v2061, %v2101
    %v2103 = vpop.f32.mrb[0].mxu0
    %v2104 = vpop.f32.mrb[0].mxu0
    %2105 = vdwg.mxu0
    %v2106 = vmax.f32 %v2100, 0.0
    %v2107 = vmax.f32 %v2102, 0.0
    %v2108 = vld [vmem:[#allocation41] sm:$0x3]
    %v2110 = vlaneseq
    %v2111 = vshrl.u32 %v2110, 7
    %v2112 = vsub.s32 0, %v2111
    %v2113 = vrot.slane %v2108, %v2112
    %v2114 = vlaneseq
    %v2115 = vshrl.u32 %v2114, 7
    %v2116 = vsub.s32 1, %v2115
    %v2117 = vrot.slane %v2108, %v2116
    %v2120 = vmul.f32 %v2106, %v2113
    %v2121 = vmul.f32 %v2107, %v2117
    %v2122 = vld [vmem:[#allocation42] sm:$0x3]
    %v2124 = vlaneseq
    %v2125 = vshrl.u32 %v2124, 7
    %v2126 = vsub.s32 0, %v2125
    %v2127 = vrot.slane %v2122, %v2126
    %v2128 = vlaneseq
    %v2129 = vshrl.u32 %v2128, 7
    %v2130 = vsub.s32 1, %v2129
    %v2131 = vrot.slane %v2122, %v2130
    %v2134 = vadd.f32 %v2120, %v2127
    %v2135 = vadd.f32 %v2121, %v2131
    %v2136 = vpack.c.bf16 %v2134, %v2134
    %v2137 = vpack.c.bf16 %v2135, %v2135
    %v2138 = vld [vmem:[#allocation44] sm:$0xff]
    %v2139 = vld [vmem:[#allocation44 + $0x8] sm:$0xff]
    %v2140 = vld [vmem:[#allocation44 + $0x10] sm:$0xff]
    %v2141 = vld [vmem:[#allocation44 + $0x18] sm:$0xff]
    %v2142 = vld [vmem:[#allocation44 + $0x20] sm:$0xff]
    %v2143 = vld [vmem:[#allocation44 + $0x28] sm:$0xff]
    %v2144 = vld [vmem:[#allocation44 + $0x30] sm:$0xff]
    %v2145 = vld [vmem:[#allocation44 + $0x38] sm:$0xff]
    %v2146 = vld [vmem:[#allocation44 + $0x40] sm:$0xff]
    %v2147 = vld [vmem:[#allocation44 + $0x48] sm:$0xff]
    %v2148 = vld [vmem:[#allocation44 + $0x50] sm:$0xff]
    %v2149 = vld [vmem:[#allocation44 + $0x58] sm:$0xff]
    %v2150 = vld [vmem:[#allocation44 + $0x60] sm:$0xff]
    %v2151 = vld [vmem:[#allocation44 + $0x68] sm:$0xff]
    %v2152 = vld [vmem:[#allocation44 + $0x70] sm:$0xff]
    %v2153 = vld [vmem:[#allocation44 + $0x78] sm:$0xff]
    %v2154 = vld [vmem:[#allocation44 + $0x80] sm:$0xff]
    %v2155 = vld [vmem:[#allocation44 + $0x88] sm:$0xff]
    %v2156 = vld [vmem:[#allocation44 + $0x90] sm:$0xff]
    %v2157 = vld [vmem:[#allocation44 + $0x98] sm:$0xff]
    %v2158 = vld [vmem:[#allocation44 + $0xa0] sm:$0xff]
    %v2159 = vld [vmem:[#allocation44 + $0xa8] sm:$0xff]
    %v2160 = vld [vmem:[#allocation44 + $0xb0] sm:$0xff]
    %v2161 = vld [vmem:[#allocation44 + $0xb8] sm:$0xff]
    %v2162 = vld [vmem:[#allocation44 + $0xc0] sm:$0xff]
    %v2163 = vld [vmem:[#allocation44 + $0xc8] sm:$0xff]
    %v2164 = vld [vmem:[#allocation44 + $0xd0] sm:$0xff]
    %v2165 = vld [vmem:[#allocation44 + $0xd8] sm:$0xff]
    %v2166 = vld [vmem:[#allocation44 + $0xe0] sm:$0xff]
    %v2167 = vld [vmem:[#allocation44 + $0xe8] sm:$0xff]
    %v2168 = vld [vmem:[#allocation44 + $0xf0] sm:$0xff]
    %v2169 = vld [vmem:[#allocation44 + $0xf8] sm:$0xff]
    %v2170 = vpack.c.bf16 %v2139, %v2138
    %v2171 = vpack.c.bf16 %v2141, %v2140
    %v2172 = vpack.c.bf16 %v2143, %v2142
    %v2173 = vpack.c.bf16 %v2145, %v2144
    %v2174 = vpack.c.bf16 %v2147, %v2146
    %v2175 = vpack.c.bf16 %v2149, %v2148
    %v2176 = vpack.c.bf16 %v2151, %v2150
    %v2177 = vpack.c.bf16 %v2153, %v2152
    %v2178 = vpack.c.bf16 %v2155, %v2154
    %v2179 = vpack.c.bf16 %v2157, %v2156
    %v2180 = vpack.c.bf16 %v2159, %v2158
    %v2181 = vpack.c.bf16 %v2161, %v2160
    %v2182 = vpack.c.bf16 %v2163, %v2162
    %v2183 = vpack.c.bf16 %v2165, %v2164
    %v2184 = vpack.c.bf16 %v2167, %v2166
    %v2185 = vpack.c.bf16 %v2169, %v2168
    %v2186 = vld [vmem:[#allocation2] sm:$0x1]
    %v2188 = vlaneseq
    %v2189 = vshrl.u32 %v2188, 7
    %v2190 = vsub.s32 0, %v2189
    %v2191 = vrot.slane %v2186, %v2190
    %2193 = vmatprep.subr.bf16.mxu0 0
    %2194 = vmatpush1.bf16.msra.mxu0 %v2170
    %2195 = vmatprep.subr.bf16.mxu0 0
    %2196 = vmatpush1.bf16.msra.mxu0 %v2171
    %2197 = vmatprep.subr.bf16.mxu0 0
    %2198 = vmatpush1.bf16.msra.mxu0 %v2172
    %2199 = vmatprep.subr.bf16.mxu0 0
    %2200 = vmatpush1.bf16.msra.mxu0 %v2173
    %2201 = vmatprep.subr.bf16.mxu0 0
    %2202 = vmatpush1.bf16.msra.mxu0 %v2174
    %2203 = vmatprep.subr.bf16.mxu0 0
    %2204 = vmatpush1.bf16.msra.mxu0 %v2175
    %2205 = vmatprep.subr.bf16.mxu0 0
    %2206 = vmatpush1.bf16.msra.mxu0 %v2176
    %2207 = vmatprep.subr.bf16.mxu0 0
    %2208 = vmatpush1.bf16.msra.mxu0 %v2177
    %2209 = vmatprep.subr.bf16.mxu0 0
    %2210 = vmatpush1.bf16.msra.mxu0 %v2178
    %2211 = vmatprep.subr.bf16.mxu0 0
    %2212 = vmatpush1.bf16.msra.mxu0 %v2179
    %2213 = vmatprep.subr.bf16.mxu0 0
    %2214 = vmatpush1.bf16.msra.mxu0 %v2180
    %2215 = vmatprep.subr.bf16.mxu0 0
    %2216 = vmatpush1.bf16.msra.mxu0 %v2181
    %2217 = vmatprep.subr.bf16.mxu0 0
    %2218 = vmatpush1.bf16.msra.mxu0 %v2182
    %2219 = vmatprep.subr.bf16.mxu0 0
    %2220 = vmatpush1.bf16.msra.mxu0 %v2183
    %2221 = vmatprep.subr.bf16.mxu0 0
    %2222 = vmatpush1.bf16.msra.mxu0 %v2184
    %2223 = vmatprep.subr.bf16.mxu0 0
    %2224 = vmatpush1.bf16.msra.mxu0 %v2185
    %2225 = vmatprep.mubr.bf16.mxu0 %v2137
    %2226 = vmatmul.mubr.bf16.gmra.mrb[0].mxu0 %v2136
    %v2227 = vpop.f32.mrb[0].mxu0
    %v2228 = vadd.f32 %v2191, %v2227
    %v2229 = vpop.f32.mrb[0].mxu0
    %v2230 = vpop.f32.mrb[0].mxu0
    %v2231 = vpop.f32.mrb[0].mxu0
    %2232 = vdwg.mxu0
    %v2233 = vsub.f32 0.0, %v2228
    %v2234 = vmul.f32 %v2233, 1.442695
    %v2235 = vpow.pop %v2234
    %v2236 = vadd.f32 %v2235, 1.0
    %v2237 = vrcp.pop %v2236
    %v2238 = vmul.f32 1.0, %v2237
    %vm2239 = vcmask 7168
    %2240 = vst.msk [vmem:[#allocation45] sm:$0xff] %vm2239, %v2238
    // Predicated region
    $region222: #{model_forward.1} parent=1 // pred_check
      _
    $region223: #{model_forward.1} parent=1 // pred_check_branch
      %2242 = sbr.rel (0) target = $region225
    $region224: #{model_forward.1} parent=1 // pred_region
      %s2244 = ssub.s32 128, 128
      %2245 = vsyncadd [#allocation5], %s2244
      %s2247 = sshll.u32 [#allocation45], 4
      %s2248 = int_to_ptr.vmem [resolvable:$true] %s2247
      %2250 = dma.vmem_to_hbm [thread:$0]  %s2248, 128, %s57, [#allocation5]
    $region225: #{model_forward.1} parent=1 // pred_fallthru
      _
    // Predicated region
    $region226: #{model_forward.1} parent=1 // pred_check
      _
    $region227: #{model_forward.1} parent=1 // pred_check_branch
      %2252 = sbr.rel (0) target = $region229
    $region228: #{model_forward.1} parent=1 // pred_region
      %s2254 = ssub.s32 256, 256
      %2255 = vsyncadd [#allocation47], %s2254
      %s2256 = sshll.u32 [#allocation46], 4
      %s2257 = int_to_ptr.vmem [resolvable:$true] %s2256
      %2262 = dma.vmem_to_hbm [thread:$0]  %s2257, 256, %s59, [#allocation47], 128, 128, 8
    $region229: #{model_forward.1} parent=1 // pred_fallthru
      _
    // Predicated region
    $region230: #{model_forward.1} parent=1 // pred_check
      _
    $region231: #{model_forward.1} parent=1 // pred_check_branch
      %2264 = sbr.rel (0) target = $region233
    $region232: #{model_forward.1} parent=1 // pred_region
      %s2266 = ssub.s32 256, 256
      %2267 = vsyncadd [#allocation47], %s2266
      %s2268 = sshll.u32 [#allocation48], 4
      %s2269 = int_to_ptr.vmem [resolvable:$true] %s2268
      %2274 = dma.vmem_to_hbm [thread:$0]  %s2269, 256, %s61, [#allocation47], 128, 128, 8
    $region233: #{model_forward.1} parent=1 // pred_fallthru
      _
    // Predicated region
    $region234: #{model_forward.1} parent=1 // pred_check
      _
    $region235: #{model_forward.1} parent=1 // pred_check_branch
      %2276 = sbr.rel (0) target = $region237
    $region236: #{model_forward.1} parent=1 // pred_region
      %s2278 = ssub.s32 256, 256
      %2279 = vsyncadd [#allocation50], %s2278
      %s2280 = sshll.u32 [#allocation49], 4
      %s2281 = int_to_ptr.vmem [resolvable:$true] %s2280
      %2286 = dma.vmem_to_hbm [thread:$0]  %s2281, 256, %s63, [#allocation50], 128, 128, 8
    $region237: #{model_forward.1} parent=1 // pred_fallthru
      _
    // Predicated region
    $region238: #{model_forward.1} parent=1 // pred_check
      _
    $region239: #{model_forward.1} parent=1 // pred_check_branch
      %2288 = sbr.rel (0) target = $region241
    $region240: #{model_forward.1} parent=1 // pred_region
      %2289 = dma.done [#allocation5], 128
    $region241: #{model_forward.1} parent=1 // pred_fallthru
      _
    // Predicated region
    $region242: #{model_forward.1} parent=1 // pred_check
      _
    $region243: #{model_forward.1} parent=1 // pred_check_branch
      %2291 = sbr.rel (0) target = $region245
    $region244: #{model_forward.1} parent=1 // pred_region
      %2292 = dma.done [#allocation47], 256
    $region245: #{model_forward.1} parent=1 // pred_fallthru
      _
    // Predicated region
    $region246: #{model_forward.1} parent=1 // pred_check
      _
    $region247: #{model_forward.1} parent=1 // pred_check_branch
      %2294 = sbr.rel (0) target = $region249
    $region248: #{model_forward.1} parent=1 // pred_region
      %2295 = dma.done [#allocation47], 256
    $region249: #{model_forward.1} parent=1 // pred_fallthru
      _
    // Predicated region
    $region250: #{model_forward.1} parent=1 // pred_check
      _
    $region251: #{model_forward.1} parent=1 // pred_check_branch
      %2297 = sbr.rel (0) target = $region253
    $region252: #{model_forward.1} parent=1 // pred_region
      %2298 = dma.done [#allocation50], 256
    $region253: #{model_forward.1} parent=1 // pred_fallthru
      _
    %2299 = vsyncpa [#allocation4], 1
    %2300 = vsyncpa [#allocation7], 1
    %2301 = vsyncpa [#allocation10], 1
    %2302 = vsyncpa [#allocation13], 1
    %2303 = vsyncpa [#allocation16], 1
    %2304 = vsyncpa [#allocation19], 1
    %2305 = vsyncpa [#allocation22], 1
    %2306 = vsyncpa [#allocation25], 1
    %2307 = vsyncpa [#allocation28], 1
    %2308 = vsyncpa [#allocation31], 1
    %2309 = vsyncpa [#allocation34], 1
    %2310 = vsyncpa [#allocation37], 1
    %2311 = vsyncpa [#allocation40], 1
    %2312 = vsyncpa [#allocation43], 1
    %2313 = vsyncpa [#allocation5], 1
    %2314 = vsyncpa [#allocation47], 1
    %2315 = vsyncpa [#allocation50], 1

</llo_original>
